<compile_context>
chip_gen: v6e
topology: v6e:2x2x1
jax: 0.10.0
libtpu: 0.0.40
codegen_flags: <defaults>
</compile_context>

<pallas_src>
import math
import functools

import jax
import jax.numpy as jnp
from jax import lax
from jax.experimental import pallas as pl
from jax.experimental.pallas import tpu as pltpu

# ----------------------------- model config ---------------------------------
VOCAB_SIZE = 16
PAD_IDX = 0
EMBED_SIZE = 32
NUM_HEADS = 4
HEAD_DIM = EMBED_SIZE // NUM_HEADS
HIDDEN_DIM = 64
NUM_LAYERS = 2
MAX_LENGTH = 16

BATCH = 2
SEQ = 8

LN_EPS = 1e-5
NEG_INF = -1e9  # large negative instead of -inf to avoid NaN on padded rows


# ----------------------------- Pallas kernel ---------------------------------
def _layernorm(x, w, b):
    mu = jnp.mean(x, axis=-1, keepdims=True)
    xc = x - mu
    var = jnp.mean(xc * xc, axis=-1, keepdims=True)
    return xc * lax.rsqrt(var + LN_EPS) * w + b


def fused_forward_kernel(x_ref, bias_ref,
                         wqkv_ref, bqkv_ref, wo_ref, bo_ref,
                         ln1w_ref, ln1b_ref,
                         w1_ref, b1_ref, w2_ref, b2_ref,
                         ln2w_ref, ln2b_ref,
                         fcw_ref, fcb_ref,
                         out_ref, *, num_layers, num_heads, embed):
    # x:    (N, E) with N = B*S  -- whole activation slab, resident in VMEM
    # bias: (N, N) additive attention bias (causal + key-pad + cross-batch)
    x = x_ref[...]
    bias = bias_ref[...]
    dh = embed // num_heads
    scale = 1.0 / math.sqrt(dh)

    for li in range(num_layers):           # static unroll, weights stay in VMEM
        # --- multi-head self attention (post-norm TransformerEncoderLayer) ---
        qkv = jnp.dot(x, wqkv_ref[li],
                      preferred_element_type=jnp.float32) + bqkv_ref[li]   # (N, 3E)

        attn = jnp.zeros_like(x)            # (N, E) accumulated head projections
        for h in range(num_heads):          # static unroll (4)
            qh = qkv[:, h * dh:(h + 1) * dh]
            kh = qkv[:, embed + h * dh: embed + (h + 1) * dh]
            vh = qkv[:, 2 * embed + h * dh: 2 * embed + (h + 1) * dh]

            # q @ k^T expressed as a dot_general (no explicit transpose)
            s = lax.dot_general(qh, kh, (((1,), (1,)), ((), ())),
                                preferred_element_type=jnp.float32) * scale
            s = s + bias
            s = s - jnp.max(s, axis=-1, keepdims=True)
            p = jnp.exp(s)
            p = p * pl.reciprocal(jnp.sum(p, axis=-1, keepdims=True), approx=True)

            o = jnp.dot(p, vh, preferred_element_type=jnp.float32)        # (N, Dh)
            # per-head slice of the (pre-transposed) output projection
            attn = attn + jnp.dot(o, wo_ref[li, h],
                                  preferred_element_type=jnp.float32)     # (N, E)

        attn = attn + bo_ref[li]
        x = _layernorm(x + attn, ln1w_ref[li], ln1b_ref[li])

        # --- feed forward (relu) ---
        ff = jnp.dot(x, w1_ref[li], preferred_element_type=jnp.float32) + b1_ref[li]
        ff = jnp.maximum(ff, 0.0)
        ff = jnp.dot(ff, w2_ref[li], preferred_element_type=jnp.float32) + b2_ref[li]
        x = _layernorm(x + ff, ln2w_ref[li], ln2b_ref[li])

    # --- final projection to vocab ---
    out_ref[...] = jnp.dot(x, fcw_ref[...],
                           preferred_element_type=jnp.float32) + fcb_ref[...]


# ----------------------------- parameter init --------------------------------
def build_params(key):
    def normal(k, shape, scale=0.02):
        return (scale * jax.random.normal(k, shape)).astype(jnp.float32)

    keys = jax.random.split(key, 2 + NUM_LAYERS)

    # embedding table; padding_idx row is zero (nn.Embedding(padding_idx=...))
    emb = normal(keys[0], (VOCAB_SIZE, EMBED_SIZE))
    emb = emb.at[PAD_IDX].set(0.0)

    # positional encoding buffer (same formula as the PyTorch module)
    position = jnp.arange(MAX_LENGTH, dtype=jnp.float32)[:, None]
    div_term = jnp.exp(jnp.arange(0, EMBED_SIZE, 2, dtype=jnp.float32)
                       * (-math.log(10000.0) / EMBED_SIZE))
    pe = jnp.zeros((MAX_LENGTH, EMBED_SIZE), jnp.float32)
    pe = pe.at[:, 0::2].set(jnp.sin(position * div_term))
    pe = pe.at[:, 1::2].set(jnp.cos(position * div_term))

    wqkv_t, bqkv, wo_h, bo = [], [], [], []
    ln1w, ln1b, w1_t, b1 = [], [], [], []
    w2_t, b2, ln2w, ln2b = [], [], [], []
    for li in range(NUM_LAYERS):
        lk = jax.random.split(keys[2 + li], 4)
        wqkv = normal(lk[0], (3 * EMBED_SIZE, EMBED_SIZE))   # PyTorch (out, in)
        wo = normal(lk[1], (EMBED_SIZE, EMBED_SIZE))
        w1 = normal(lk[2], (HIDDEN_DIM, EMBED_SIZE))
        w2 = normal(lk[3], (EMBED_SIZE, HIDDEN_DIM))

        wqkv_t.append(wqkv.T)                                        # (E, 3E)
        bqkv.append(jnp.zeros((1, 3 * EMBED_SIZE), jnp.float32))
        # out projection pre-transposed AND pre-split per head: (H, Dh, E)
        wo_h.append(wo.T.reshape(NUM_HEADS, HEAD_DIM, EMBED_SIZE))
        bo.append(jnp.zeros((1, EMBED_SIZE), jnp.float32))
        ln1w.append(jnp.ones((1, EMBED_SIZE), jnp.float32))
        ln1b.append(jnp.zeros((1, EMBED_SIZE), jnp.float32))
        w1_t.append(w1.T)                                            # (E, HID)
        b1.append(jnp.zeros((1, HIDDEN_DIM), jnp.float32))
        w2_t.append(w2.T)                                            # (HID, E)
        b2.append(jnp.zeros((1, EMBED_SIZE), jnp.float32))
        ln2w.append(jnp.ones((1, EMBED_SIZE), jnp.float32))
        ln2b.append(jnp.zeros((1, EMBED_SIZE), jnp.float32))

    return {
        "embedding": emb,
        "pe": pe,
        "wqkv_t": jnp.stack(wqkv_t), "bqkv": jnp.stack(bqkv),
        "wo_h": jnp.stack(wo_h), "bo": jnp.stack(bo),
        "ln1w": jnp.stack(ln1w), "ln1b": jnp.stack(ln1b),
        "w1_t": jnp.stack(w1_t), "b1": jnp.stack(b1),
        "w2_t": jnp.stack(w2_t), "b2": jnp.stack(b2),
        "ln2w": jnp.stack(ln2w), "ln2b": jnp.stack(ln2b),
        "fc_w_t": normal(keys[1], (VOCAB_SIZE, EMBED_SIZE)).T,       # (E, V)
        "fc_b": jnp.zeros((1, VOCAB_SIZE), jnp.float32),
    }


# ----------------------------- full forward ----------------------------------
def _build_attention_bias(tokens):
    """(B*S, B*S) additive bias: 0 where query i may attend key j
    (same batch element, j <= i, key not PAD), NEG_INF otherwise."""
    B, S = tokens.shape
    pad = tokens == PAD_IDX                                           # (B, S)
    b_idx = jnp.arange(B)
    same_batch = b_idx[:, None, None, None] == b_idx[None, None, :, None]  # (B,1,B,1)
    i_idx = jnp.arange(S)[None, :, None, None]
    j_idx = jnp.arange(S)[None, None, None, :]
    causal_ok = j_idx <= i_idx                                        # (1,S,1,S)
    not_pad = ~pad[None, None, :, :]                                  # (1,1,B,S)
    allowed = same_batch & causal_ok & not_pad                        # (B,S,B,S)
    return jnp.where(allowed, 0.0, NEG_INF).astype(jnp.float32).reshape(B * S, B * S)


@jax.jit
def forward(params, tokens):
    # tokens: (B, S) int32 token ids
    B, S = tokens.shape

    # embedding lookup + sqrt(E) scale + positional encoding (plain-JAX glue)
    x = jnp.take(params["embedding"], tokens, axis=0) * math.sqrt(EMBED_SIZE)
    x = x + params["pe"][None, :S, :]
    x2d = x.reshape(B * S, EMBED_SIZE).astype(jnp.float32)            # (N, E)

    bias = _build_attention_bias(tokens)                              # (N, N)

    kernel = functools.partial(fused_forward_kernel,
                               num_layers=NUM_LAYERS,
                               num_heads=NUM_HEADS,
                               embed=EMBED_SIZE)
    args = (x2d, bias,
            params["wqkv_t"], params["bqkv"], params["wo_h"], params["bo"],
            params["ln1w"], params["ln1b"],
            params["w1_t"], params["b1"], params["w2_t"], params["b2"],
            params["ln2w"], params["ln2b"],
            params["fc_w_t"], params["fc_b"])

    logits2d = pl.pallas_call(
        kernel,
        out_shape=jax.ShapeDtypeStruct((B * S, VOCAB_SIZE), jnp.float32),
        in_specs=[pl.BlockSpec(memory_space=pltpu.MemorySpace.VMEM) for _ in args],
        out_specs=pl.BlockSpec(memory_space=pltpu.MemorySpace.VMEM),
    )(*args)

    return logits2d.reshape(B, S, VOCAB_SIZE)


# ----------------------------- main -------------------------------------------
if __name__ == "__main__":
    key = jax.random.PRNGKey(0)
    pkey, dkey = jax.random.split(key)
    params = build_params(pkey)

    # token ids; last two positions are PAD (pad_idx=0), rest are non-pad tokens
    tokens = jax.random.randint(dkey, (BATCH, SEQ), 1, VOCAB_SIZE, dtype=jnp.int32)
    tokens = tokens.at[:, -2:].set(PAD_IDX)

    logits = forward(params, tokens)
    jax.block_until_ready(logits)

    assert logits.shape == (BATCH, SEQ, VOCAB_SIZE)
    assert bool(jnp.all(jnp.isfinite(logits)))
    print("KERNEL_OK")
</pallas_src>

<mosaic_0001>
module attributes {stable_mosaic.version = 11 : i64} {
  func.func @fused_forward_kernel(%arg0: memref<16x32xf32, #tpu.memory_space<vmem>>, %arg1: memref<16x16xf32, #tpu.memory_space<vmem>>, %arg2: memref<2x32x96xf32, #tpu.memory_space<vmem>>, %arg3: memref<2x1x96xf32, #tpu.memory_space<vmem>>, %arg4: memref<2x4x8x32xf32, #tpu.memory_space<vmem>>, %arg5: memref<2x1x32xf32, #tpu.memory_space<vmem>>, %arg6: memref<2x1x32xf32, #tpu.memory_space<vmem>>, %arg7: memref<2x1x32xf32, #tpu.memory_space<vmem>>, %arg8: memref<2x32x64xf32, #tpu.memory_space<vmem>>, %arg9: memref<2x1x64xf32, #tpu.memory_space<vmem>>, %arg10: memref<2x64x32xf32, #tpu.memory_space<vmem>>, %arg11: memref<2x1x32xf32, #tpu.memory_space<vmem>>, %arg12: memref<2x1x32xf32, #tpu.memory_space<vmem>>, %arg13: memref<2x1x32xf32, #tpu.memory_space<vmem>>, %arg14: memref<32x16xf32, #tpu.memory_space<vmem>>, %arg15: memref<1x16xf32, #tpu.memory_space<vmem>>, %arg16: memref<16x16xf32, #tpu.memory_space<vmem>>) attributes {dimension_semantics = [], scalar_prefetch = 0 : i64, scratch_operands = 0 : i64, tpu.core_type = #tpu.core_type<tc>} {
    %c0 = arith.constant 0 : index
    %c0_0 = arith.constant 0 : index
    %0 = vector.load %arg0[%c0, %c0_0] : memref<16x32xf32, #tpu.memory_space<vmem>>, vector<16x32xf32>
    %c0_1 = arith.constant 0 : index
    %c0_2 = arith.constant 0 : index
    %1 = vector.load %arg1[%c0_1, %c0_2] : memref<16x16xf32, #tpu.memory_space<vmem>>, vector<16x16xf32>
    %c0_3 = arith.constant 0 : index
    %c0_4 = arith.constant 0 : index
    %c0_5 = arith.constant 0 : index
    %2 = vector.load %arg2[%c0_3, %c0_4, %c0_5] : memref<2x32x96xf32, #tpu.memory_space<vmem>>, vector<1x32x96xf32>
    %3 = vector.shape_cast %2 : vector<1x32x96xf32> to vector<32x96xf32>
    %cst = arith.constant dense<0.000000e+00> : vector<16x96xf32>
    %4 = tpu.matmul %0, %3, %cst {dimension_numbers = #tpu.dot_dimension_numbers<[1], [0], [0], [1], [0, 0, 1, 1], [], []>} : vector<16x32xf32>, vector<32x96xf32>, vector<16x96xf32> -> vector<16x96xf32>
    %c0_6 = arith.constant 0 : index
    %c0_7 = arith.constant 0 : index
    %c0_8 = arith.constant 0 : index
    %5 = vector.load %arg3[%c0_6, %c0_7, %c0_8] : memref<2x1x96xf32, #tpu.memory_space<vmem>>, vector<1x1x96xf32>
    %6 = vector.shape_cast %5 : vector<1x1x96xf32> to vector<1x96xf32>
    %7 = vector.broadcast %6 : vector<1x96xf32> to vector<16x96xf32>
    %8 = arith.addf %4, %7 : vector<16x96xf32>
    %cst_9 = arith.constant 0.000000e+00 : f32
    %9 = vector.broadcast %cst_9 : f32 to vector<16x32xf32>
    %10 = vector.extract_strided_slice %8 {offsets = [0, 0], sizes = [16, 8], strides = [1, 1]} : vector<16x96xf32> to vector<16x8xf32>
    %11 = vector.extract_strided_slice %8 {offsets = [0, 32], sizes = [16, 8], strides = [1, 1]} : vector<16x96xf32> to vector<16x8xf32>
    %12 = vector.extract_strided_slice %8 {offsets = [0, 64], sizes = [16, 8], strides = [1, 1]} : vector<16x96xf32> to vector<16x8xf32>
    %cst_10 = arith.constant dense<0.000000e+00> : vector<16x16xf32>
    %13 = tpu.matmul %10, %11, %cst_10 {dimension_numbers = #tpu.dot_dimension_numbers<[1], [1], [0], [0], [0, 0, 1, 0], [], []>} : vector<16x8xf32>, vector<16x8xf32>, vector<16x16xf32> -> vector<16x16xf32>
    %cst_11 = arith.constant 0.353553385 : f32
    %14 = vector.broadcast %cst_11 : f32 to vector<16x16xf32>
    %15 = arith.mulf %13, %14 : vector<16x16xf32>
    %16 = arith.addf %15, %1 : vector<16x16xf32>
    %cst_12 = arith.constant dense<0xFF800000> : vector<16xf32>
    %17 = vector.multi_reduction <maximumf>, %16, %cst_12 [1] : vector<16x16xf32> to vector<16xf32>
    %18 = vector.shape_cast %17 : vector<16xf32> to vector<16x1xf32>
    %19 = vector.broadcast %18 : vector<16x1xf32> to vector<16x16xf32>
    %20 = arith.subf %16, %19 : vector<16x16xf32>
    %21 = math.exp %20 : vector<16x16xf32>
    %cst_13 = arith.constant dense<0.000000e+00> : vector<16xf32>
    %22 = vector.multi_reduction <add>, %21, %cst_13 [1] : vector<16x16xf32> to vector<16xf32>
    %23 = vector.shape_cast %22 : vector<16xf32> to vector<16x1xf32>
    %24 = tpu.reciprocal %23 {approx = true} : vector<16x1xf32> -> vector<16x1xf32>
    %25 = vector.broadcast %24 : vector<16x1xf32> to vector<16x16xf32>
    %26 = arith.mulf %21, %25 : vector<16x16xf32>
    %cst_14 = arith.constant dense<0.000000e+00> : vector<16x8xf32>
    %27 = tpu.matmul %26, %12, %cst_14 {dimension_numbers = #tpu.dot_dimension_numbers<[1], [0], [0], [1], [0, 0, 1, 1], [], []>} : vector<16x16xf32>, vector<16x8xf32>, vector<16x8xf32> -> vector<16x8xf32>
    %c0_15 = arith.constant 0 : index
    %c0_16 = arith.constant 0 : index
    %c0_17 = arith.constant 0 : index
    %c0_18 = arith.constant 0 : index
    %28 = vector.load %arg4[%c0_15, %c0_16, %c0_17, %c0_18] : memref<2x4x8x32xf32, #tpu.memory_space<vmem>>, vector<1x1x8x32xf32>
    %29 = vector.shape_cast %28 : vector<1x1x8x32xf32> to vector<8x32xf32>
    %cst_19 = arith.constant dense<0.000000e+00> : vector<16x32xf32>
    %30 = tpu.matmul %27, %29, %cst_19 {dimension_numbers = #tpu.dot_dimension_numbers<[1], [0], [0], [1], [0, 0, 1, 1], [], []>} : vector<16x8xf32>, vector<8x32xf32>, vector<16x32xf32> -> vector<16x32xf32>
    %31 = arith.addf %9, %30 : vector<16x32xf32>
    %32 = vector.extract_strided_slice %8 {offsets = [0, 8], sizes = [16, 8], strides = [1, 1]} : vector<16x96xf32> to vector<16x8xf32>
    %33 = vector.extract_strided_slice %8 {offsets = [0, 40], sizes = [16, 8], strides = [1, 1]} : vector<16x96xf32> to vector<16x8xf32>
    %34 = vector.extract_strided_slice %8 {offsets = [0, 72], sizes = [16, 8], strides = [1, 1]} : vector<16x96xf32> to vector<16x8xf32>
    %cst_20 = arith.constant dense<0.000000e+00> : vector<16x16xf32>
    %35 = tpu.matmul %32, %33, %cst_20 {dimension_numbers = #tpu.dot_dimension_numbers<[1], [1], [0], [0], [0, 0, 1, 0], [], []>} : vector<16x8xf32>, vector<16x8xf32>, vector<16x16xf32> -> vector<16x16xf32>
    %cst_21 = arith.constant 0.353553385 : f32
    %36 = vector.broadcast %cst_21 : f32 to vector<16x16xf32>
    %37 = arith.mulf %35, %36 : vector<16x16xf32>
    %38 = arith.addf %37, %1 : vector<16x16xf32>
    %cst_22 = arith.constant dense<0xFF800000> : vector<16xf32>
    %39 = vector.multi_reduction <maximumf>, %38, %cst_22 [1] : vector<16x16xf32> to vector<16xf32>
    %40 = vector.shape_cast %39 : vector<16xf32> to vector<16x1xf32>
    %41 = vector.broadcast %40 : vector<16x1xf32> to vector<16x16xf32>
    %42 = arith.subf %38, %41 : vector<16x16xf32>
    %43 = math.exp %42 : vector<16x16xf32>
    %cst_23 = arith.constant dense<0.000000e+00> : vector<16xf32>
    %44 = vector.multi_reduction <add>, %43, %cst_23 [1] : vector<16x16xf32> to vector<16xf32>
    %45 = vector.shape_cast %44 : vector<16xf32> to vector<16x1xf32>
    %46 = tpu.reciprocal %45 {approx = true} : vector<16x1xf32> -> vector<16x1xf32>
    %47 = vector.broadcast %46 : vector<16x1xf32> to vector<16x16xf32>
    %48 = arith.mulf %43, %47 : vector<16x16xf32>
    %cst_24 = arith.constant dense<0.000000e+00> : vector<16x8xf32>
    %49 = tpu.matmul %48, %34, %cst_24 {dimension_numbers = #tpu.dot_dimension_numbers<[1], [0], [0], [1], [0, 0, 1, 1], [], []>} : vector<16x16xf32>, vector<16x8xf32>, vector<16x8xf32> -> vector<16x8xf32>
    %c0_25 = arith.constant 0 : index
    %c1 = arith.constant 1 : index
    %c0_26 = arith.constant 0 : index
    %c0_27 = arith.constant 0 : index
    %50 = vector.load %arg4[%c0_25, %c1, %c0_26, %c0_27] : memref<2x4x8x32xf32, #tpu.memory_space<vmem>>, vector<1x1x8x32xf32>
    %51 = vector.shape_cast %50 : vector<1x1x8x32xf32> to vector<8x32xf32>
    %cst_28 = arith.constant dense<0.000000e+00> : vector<16x32xf32>
    %52 = tpu.matmul %49, %51, %cst_28 {dimension_numbers = #tpu.dot_dimension_numbers<[1], [0], [0], [1], [0, 0, 1, 1], [], []>} : vector<16x8xf32>, vector<8x32xf32>, vector<16x32xf32> -> vector<16x32xf32>
    %53 = arith.addf %31, %52 : vector<16x32xf32>
    %54 = vector.extract_strided_slice %8 {offsets = [0, 16], sizes = [16, 8], strides = [1, 1]} : vector<16x96xf32> to vector<16x8xf32>
    %55 = vector.extract_strided_slice %8 {offsets = [0, 48], sizes = [16, 8], strides = [1, 1]} : vector<16x96xf32> to vector<16x8xf32>
    %56 = vector.extract_strided_slice %8 {offsets = [0, 80], sizes = [16, 8], strides = [1, 1]} : vector<16x96xf32> to vector<16x8xf32>
    %cst_29 = arith.constant dense<0.000000e+00> : vector<16x16xf32>
    %57 = tpu.matmul %54, %55, %cst_29 {dimension_numbers = #tpu.dot_dimension_numbers<[1], [1], [0], [0], [0, 0, 1, 0], [], []>} : vector<16x8xf32>, vector<16x8xf32>, vector<16x16xf32> -> vector<16x16xf32>
    %cst_30 = arith.constant 0.353553385 : f32
    %58 = vector.broadcast %cst_30 : f32 to vector<16x16xf32>
    %59 = arith.mulf %57, %58 : vector<16x16xf32>
    %60 = arith.addf %59, %1 : vector<16x16xf32>
    %cst_31 = arith.constant dense<0xFF800000> : vector<16xf32>
    %61 = vector.multi_reduction <maximumf>, %60, %cst_31 [1] : vector<16x16xf32> to vector<16xf32>
    %62 = vector.shape_cast %61 : vector<16xf32> to vector<16x1xf32>
    %63 = vector.broadcast %62 : vector<16x1xf32> to vector<16x16xf32>
    %64 = arith.subf %60, %63 : vector<16x16xf32>
    %65 = math.exp %64 : vector<16x16xf32>
    %cst_32 = arith.constant dense<0.000000e+00> : vector<16xf32>
    %66 = vector.multi_reduction <add>, %65, %cst_32 [1] : vector<16x16xf32> to vector<16xf32>
    %67 = vector.shape_cast %66 : vector<16xf32> to vector<16x1xf32>
    %68 = tpu.reciprocal %67 {approx = true} : vector<16x1xf32> -> vector<16x1xf32>
    %69 = vector.broadcast %68 : vector<16x1xf32> to vector<16x16xf32>
    %70 = arith.mulf %65, %69 : vector<16x16xf32>
    %cst_33 = arith.constant dense<0.000000e+00> : vector<16x8xf32>
    %71 = tpu.matmul %70, %56, %cst_33 {dimension_numbers = #tpu.dot_dimension_numbers<[1], [0], [0], [1], [0, 0, 1, 1], [], []>} : vector<16x16xf32>, vector<16x8xf32>, vector<16x8xf32> -> vector<16x8xf32>
    %c0_34 = arith.constant 0 : index
    %c2 = arith.constant 2 : index
    %c0_35 = arith.constant 0 : index
    %c0_36 = arith.constant 0 : index
    %72 = vector.load %arg4[%c0_34, %c2, %c0_35, %c0_36] : memref<2x4x8x32xf32, #tpu.memory_space<vmem>>, vector<1x1x8x32xf32>
    %73 = vector.shape_cast %72 : vector<1x1x8x32xf32> to vector<8x32xf32>
    %cst_37 = arith.constant dense<0.000000e+00> : vector<16x32xf32>
    %74 = tpu.matmul %71, %73, %cst_37 {dimension_numbers = #tpu.dot_dimension_numbers<[1], [0], [0], [1], [0, 0, 1, 1], [], []>} : vector<16x8xf32>, vector<8x32xf32>, vector<16x32xf32> -> vector<16x32xf32>
    %75 = arith.addf %53, %74 : vector<16x32xf32>
    %76 = vector.extract_strided_slice %8 {offsets = [0, 24], sizes = [16, 8], strides = [1, 1]} : vector<16x96xf32> to vector<16x8xf32>
    %77 = vector.extract_strided_slice %8 {offsets = [0, 56], sizes = [16, 8], strides = [1, 1]} : vector<16x96xf32> to vector<16x8xf32>
    %78 = vector.extract_strided_slice %8 {offsets = [0, 88], sizes = [16, 8], strides = [1, 1]} : vector<16x96xf32> to vector<16x8xf32>
    %cst_38 = arith.constant dense<0.000000e+00> : vector<16x16xf32>
    %79 = tpu.matmul %76, %77, %cst_38 {dimension_numbers = #tpu.dot_dimension_numbers<[1], [1], [0], [0], [0, 0, 1, 0], [], []>} : vector<16x8xf32>, vector<16x8xf32>, vector<16x16xf32> -> vector<16x16xf32>
    %cst_39 = arith.constant 0.353553385 : f32
    %80 = vector.broadcast %cst_39 : f32 to vector<16x16xf32>
    %81 = arith.mulf %79, %80 : vector<16x16xf32>
    %82 = arith.addf %81, %1 : vector<16x16xf32>
    %cst_40 = arith.constant dense<0xFF800000> : vector<16xf32>
    %83 = vector.multi_reduction <maximumf>, %82, %cst_40 [1] : vector<16x16xf32> to vector<16xf32>
    %84 = vector.shape_cast %83 : vector<16xf32> to vector<16x1xf32>
    %85 = vector.broadcast %84 : vector<16x1xf32> to vector<16x16xf32>
    %86 = arith.subf %82, %85 : vector<16x16xf32>
    %87 = math.exp %86 : vector<16x16xf32>
    %cst_41 = arith.constant dense<0.000000e+00> : vector<16xf32>
    %88 = vector.multi_reduction <add>, %87, %cst_41 [1] : vector<16x16xf32> to vector<16xf32>
    %89 = vector.shape_cast %88 : vector<16xf32> to vector<16x1xf32>
    %90 = tpu.reciprocal %89 {approx = true} : vector<16x1xf32> -> vector<16x1xf32>
    %91 = vector.broadcast %90 : vector<16x1xf32> to vector<16x16xf32>
    %92 = arith.mulf %87, %91 : vector<16x16xf32>
    %cst_42 = arith.constant dense<0.000000e+00> : vector<16x8xf32>
    %93 = tpu.matmul %92, %78, %cst_42 {dimension_numbers = #tpu.dot_dimension_numbers<[1], [0], [0], [1], [0, 0, 1, 1], [], []>} : vector<16x16xf32>, vector<16x8xf32>, vector<16x8xf32> -> vector<16x8xf32>
    %c0_43 = arith.constant 0 : index
    %c3 = arith.constant 3 : index
    %c0_44 = arith.constant 0 : index
    %c0_45 = arith.constant 0 : index
    %94 = vector.load %arg4[%c0_43, %c3, %c0_44, %c0_45] : memref<2x4x8x32xf32, #tpu.memory_space<vmem>>, vector<1x1x8x32xf32>
    %95 = vector.shape_cast %94 : vector<1x1x8x32xf32> to vector<8x32xf32>
    %cst_46 = arith.constant dense<0.000000e+00> : vector<16x32xf32>
    %96 = tpu.matmul %93, %95, %cst_46 {dimension_numbers = #tpu.dot_dimension_numbers<[1], [0], [0], [1], [0, 0, 1, 1], [], []>} : vector<16x8xf32>, vector<8x32xf32>, vector<16x32xf32> -> vector<16x32xf32>
    %97 = arith.addf %75, %96 : vector<16x32xf32>
    %c0_47 = arith.constant 0 : index
    %c0_48 = arith.constant 0 : index
    %c0_49 = arith.constant 0 : index
    %98 = vector.load %arg5[%c0_47, %c0_48, %c0_49] : memref<2x1x32xf32, #tpu.memory_space<vmem>>, vector<1x1x32xf32>
    %99 = vector.shape_cast %98 : vector<1x1x32xf32> to vector<1x32xf32>
    %100 = vector.broadcast %99 : vector<1x32xf32> to vector<16x32xf32>
    %101 = arith.addf %97, %100 : vector<16x32xf32>
    %102 = arith.addf %0, %101 : vector<16x32xf32>
    %c0_50 = arith.constant 0 : index
    %c0_51 = arith.constant 0 : index
    %c0_52 = arith.constant 0 : index
    %103 = vector.load %arg6[%c0_50, %c0_51, %c0_52] : memref<2x1x32xf32, #tpu.memory_space<vmem>>, vector<1x1x32xf32>
    %104 = vector.shape_cast %103 : vector<1x1x32xf32> to vector<1x32xf32>
    %c0_53 = arith.constant 0 : index
    %c0_54 = arith.constant 0 : index
    %c0_55 = arith.constant 0 : index
    %105 = vector.load %arg7[%c0_53, %c0_54, %c0_55] : memref<2x1x32xf32, #tpu.memory_space<vmem>>, vector<1x1x32xf32>
    %106 = vector.shape_cast %105 : vector<1x1x32xf32> to vector<1x32xf32>
    %cst_56 = arith.constant dense<0.000000e+00> : vector<16xf32>
    %107 = vector.multi_reduction <add>, %102, %cst_56 [1] : vector<16x32xf32> to vector<16xf32>
    %108 = vector.shape_cast %107 : vector<16xf32> to vector<16x1xf32>
    %cst_57 = arith.constant 3.200000e+01 : f32
    %109 = vector.broadcast %cst_57 : f32 to vector<16x1xf32>
    %110 = arith.divf %108, %109 : vector<16x1xf32>
    %111 = vector.broadcast %110 : vector<16x1xf32> to vector<16x32xf32>
    %112 = arith.subf %102, %111 : vector<16x32xf32>
    %113 = arith.mulf %112, %112 : vector<16x32xf32>
    %cst_58 = arith.constant dense<0.000000e+00> : vector<16xf32>
    %114 = vector.multi_reduction <add>, %113, %cst_58 [1] : vector<16x32xf32> to vector<16xf32>
    %115 = vector.shape_cast %114 : vector<16xf32> to vector<16x1xf32>
    %cst_59 = arith.constant 3.200000e+01 : f32
    %116 = vector.broadcast %cst_59 : f32 to vector<16x1xf32>
    %117 = arith.divf %115, %116 : vector<16x1xf32>
    %cst_60 = arith.constant 9.99999974E-6 : f32
    %118 = vector.broadcast %cst_60 : f32 to vector<16x1xf32>
    %119 = arith.addf %117, %118 : vector<16x1xf32>
    %120 = math.rsqrt %119 : vector<16x1xf32>
    %121 = vector.broadcast %120 : vector<16x1xf32> to vector<16x32xf32>
    %122 = arith.mulf %112, %121 : vector<16x32xf32>
    %123 = vector.broadcast %104 : vector<1x32xf32> to vector<16x32xf32>
    %124 = arith.mulf %122, %123 : vector<16x32xf32>
    %125 = vector.broadcast %106 : vector<1x32xf32> to vector<16x32xf32>
    %126 = arith.addf %124, %125 : vector<16x32xf32>
    %c0_61 = arith.constant 0 : index
    %c0_62 = arith.constant 0 : index
    %c0_63 = arith.constant 0 : index
    %127 = vector.load %arg8[%c0_61, %c0_62, %c0_63] : memref<2x32x64xf32, #tpu.memory_space<vmem>>, vector<1x32x64xf32>
    %128 = vector.shape_cast %127 : vector<1x32x64xf32> to vector<32x64xf32>
    %cst_64 = arith.constant dense<0.000000e+00> : vector<16x64xf32>
    %129 = tpu.matmul %126, %128, %cst_64 {dimension_numbers = #tpu.dot_dimension_numbers<[1], [0], [0], [1], [0, 0, 1, 1], [], []>} : vector<16x32xf32>, vector<32x64xf32>, vector<16x64xf32> -> vector<16x64xf32>
    %c0_65 = arith.constant 0 : index
    %c0_66 = arith.constant 0 : index
    %c0_67 = arith.constant 0 : index
    %130 = vector.load %arg9[%c0_65, %c0_66, %c0_67] : memref<2x1x64xf32, #tpu.memory_space<vmem>>, vector<1x1x64xf32>
    %131 = vector.shape_cast %130 : vector<1x1x64xf32> to vector<1x64xf32>
    %132 = vector.broadcast %131 : vector<1x64xf32> to vector<16x64xf32>
    %133 = arith.addf %129, %132 : vector<16x64xf32>
    %cst_68 = arith.constant 0.000000e+00 : f32
    %134 = vector.broadcast %cst_68 : f32 to vector<16x64xf32>
    %135 = arith.maximumf %133, %134 : vector<16x64xf32>
    %c0_69 = arith.constant 0 : index
    %c0_70 = arith.constant 0 : index
    %c0_71 = arith.constant 0 : index
    %136 = vector.load %arg10[%c0_69, %c0_70, %c0_71] : memref<2x64x32xf32, #tpu.memory_space<vmem>>, vector<1x64x32xf32>
    %137 = vector.shape_cast %136 : vector<1x64x32xf32> to vector<64x32xf32>
    %cst_72 = arith.constant dense<0.000000e+00> : vector<16x32xf32>
    %138 = tpu.matmul %135, %137, %cst_72 {dimension_numbers = #tpu.dot_dimension_numbers<[1], [0], [0], [1], [0, 0, 1, 1], [], []>} : vector<16x64xf32>, vector<64x32xf32>, vector<16x32xf32> -> vector<16x32xf32>
    %c0_73 = arith.constant 0 : index
    %c0_74 = arith.constant 0 : index
    %c0_75 = arith.constant 0 : index
    %139 = vector.load %arg11[%c0_73, %c0_74, %c0_75] : memref<2x1x32xf32, #tpu.memory_space<vmem>>, vector<1x1x32xf32>
    %140 = vector.shape_cast %139 : vector<1x1x32xf32> to vector<1x32xf32>
    %141 = vector.broadcast %140 : vector<1x32xf32> to vector<16x32xf32>
    %142 = arith.addf %138, %141 : vector<16x32xf32>
    %143 = arith.addf %126, %142 : vector<16x32xf32>
    %c0_76 = arith.constant 0 : index
    %c0_77 = arith.constant 0 : index
    %c0_78 = arith.constant 0 : index
    %144 = vector.load %arg12[%c0_76, %c0_77, %c0_78] : memref<2x1x32xf32, #tpu.memory_space<vmem>>, vector<1x1x32xf32>
    %145 = vector.shape_cast %144 : vector<1x1x32xf32> to vector<1x32xf32>
    %c0_79 = arith.constant 0 : index
    %c0_80 = arith.constant 0 : index
    %c0_81 = arith.constant 0 : index
    %146 = vector.load %arg13[%c0_79, %c0_80, %c0_81] : memref<2x1x32xf32, #tpu.memory_space<vmem>>, vector<1x1x32xf32>
    %147 = vector.shape_cast %146 : vector<1x1x32xf32> to vector<1x32xf32>
    %cst_82 = arith.constant dense<0.000000e+00> : vector<16xf32>
    %148 = vector.multi_reduction <add>, %143, %cst_82 [1] : vector<16x32xf32> to vector<16xf32>
    %149 = vector.shape_cast %148 : vector<16xf32> to vector<16x1xf32>
    %cst_83 = arith.constant 3.200000e+01 : f32
    %150 = vector.broadcast %cst_83 : f32 to vector<16x1xf32>
    %151 = arith.divf %149, %150 : vector<16x1xf32>
    %152 = vector.broadcast %151 : vector<16x1xf32> to vector<16x32xf32>
    %153 = arith.subf %143, %152 : vector<16x32xf32>
    %154 = arith.mulf %153, %153 : vector<16x32xf32>
    %cst_84 = arith.constant dense<0.000000e+00> : vector<16xf32>
    %155 = vector.multi_reduction <add>, %154, %cst_84 [1] : vector<16x32xf32> to vector<16xf32>
    %156 = vector.shape_cast %155 : vector<16xf32> to vector<16x1xf32>
    %cst_85 = arith.constant 3.200000e+01 : f32
    %157 = vector.broadcast %cst_85 : f32 to vector<16x1xf32>
    %158 = arith.divf %156, %157 : vector<16x1xf32>
    %cst_86 = arith.constant 9.99999974E-6 : f32
    %159 = vector.broadcast %cst_86 : f32 to vector<16x1xf32>
    %160 = arith.addf %158, %159 : vector<16x1xf32>
    %161 = math.rsqrt %160 : vector<16x1xf32>
    %162 = vector.broadcast %161 : vector<16x1xf32> to vector<16x32xf32>
    %163 = arith.mulf %153, %162 : vector<16x32xf32>
    %164 = vector.broadcast %145 : vector<1x32xf32> to vector<16x32xf32>
    %165 = arith.mulf %163, %164 : vector<16x32xf32>
    %166 = vector.broadcast %147 : vector<1x32xf32> to vector<16x32xf32>
    %167 = arith.addf %165, %166 : vector<16x32xf32>
    %c1_87 = arith.constant 1 : index
    %c0_88 = arith.constant 0 : index
    %c0_89 = arith.constant 0 : index
    %168 = vector.load %arg2[%c1_87, %c0_88, %c0_89] : memref<2x32x96xf32, #tpu.memory_space<vmem>>, vector<1x32x96xf32>
    %169 = vector.shape_cast %168 : vector<1x32x96xf32> to vector<32x96xf32>
    %cst_90 = arith.constant dense<0.000000e+00> : vector<16x96xf32>
    %170 = tpu.matmul %167, %169, %cst_90 {dimension_numbers = #tpu.dot_dimension_numbers<[1], [0], [0], [1], [0, 0, 1, 1], [], []>} : vector<16x32xf32>, vector<32x96xf32>, vector<16x96xf32> -> vector<16x96xf32>
    %c1_91 = arith.constant 1 : index
    %c0_92 = arith.constant 0 : index
    %c0_93 = arith.constant 0 : index
    %171 = vector.load %arg3[%c1_91, %c0_92, %c0_93] : memref<2x1x96xf32, #tpu.memory_space<vmem>>, vector<1x1x96xf32>
    %172 = vector.shape_cast %171 : vector<1x1x96xf32> to vector<1x96xf32>
    %173 = vector.broadcast %172 : vector<1x96xf32> to vector<16x96xf32>
    %174 = arith.addf %170, %173 : vector<16x96xf32>
    %cst_94 = arith.constant 0.000000e+00 : f32
    %175 = vector.broadcast %cst_94 : f32 to vector<16x32xf32>
    %176 = vector.extract_strided_slice %174 {offsets = [0, 0], sizes = [16, 8], strides = [1, 1]} : vector<16x96xf32> to vector<16x8xf32>
    %177 = vector.extract_strided_slice %174 {offsets = [0, 32], sizes = [16, 8], strides = [1, 1]} : vector<16x96xf32> to vector<16x8xf32>
    %178 = vector.extract_strided_slice %174 {offsets = [0, 64], sizes = [16, 8], strides = [1, 1]} : vector<16x96xf32> to vector<16x8xf32>
    %cst_95 = arith.constant dense<0.000000e+00> : vector<16x16xf32>
    %179 = tpu.matmul %176, %177, %cst_95 {dimension_numbers = #tpu.dot_dimension_numbers<[1], [1], [0], [0], [0, 0, 1, 0], [], []>} : vector<16x8xf32>, vector<16x8xf32>, vector<16x16xf32> -> vector<16x16xf32>
    %cst_96 = arith.constant 0.353553385 : f32
    %180 = vector.broadcast %cst_96 : f32 to vector<16x16xf32>
    %181 = arith.mulf %179, %180 : vector<16x16xf32>
    %182 = arith.addf %181, %1 : vector<16x16xf32>
    %cst_97 = arith.constant dense<0xFF800000> : vector<16xf32>
    %183 = vector.multi_reduction <maximumf>, %182, %cst_97 [1] : vector<16x16xf32> to vector<16xf32>
    %184 = vector.shape_cast %183 : vector<16xf32> to vector<16x1xf32>
    %185 = vector.broadcast %184 : vector<16x1xf32> to vector<16x16xf32>
    %186 = arith.subf %182, %185 : vector<16x16xf32>
    %187 = math.exp %186 : vector<16x16xf32>
    %cst_98 = arith.constant dense<0.000000e+00> : vector<16xf32>
    %188 = vector.multi_reduction <add>, %187, %cst_98 [1] : vector<16x16xf32> to vector<16xf32>
    %189 = vector.shape_cast %188 : vector<16xf32> to vector<16x1xf32>
    %190 = tpu.reciprocal %189 {approx = true} : vector<16x1xf32> -> vector<16x1xf32>
    %191 = vector.broadcast %190 : vector<16x1xf32> to vector<16x16xf32>
    %192 = arith.mulf %187, %191 : vector<16x16xf32>
    %cst_99 = arith.constant dense<0.000000e+00> : vector<16x8xf32>
    %193 = tpu.matmul %192, %178, %cst_99 {dimension_numbers = #tpu.dot_dimension_numbers<[1], [0], [0], [1], [0, 0, 1, 1], [], []>} : vector<16x16xf32>, vector<16x8xf32>, vector<16x8xf32> -> vector<16x8xf32>
    %c1_100 = arith.constant 1 : index
    %c0_101 = arith.constant 0 : index
    %c0_102 = arith.constant 0 : index
    %c0_103 = arith.constant 0 : index
    %194 = vector.load %arg4[%c1_100, %c0_101, %c0_102, %c0_103] : memref<2x4x8x32xf32, #tpu.memory_space<vmem>>, vector<1x1x8x32xf32>
    %195 = vector.shape_cast %194 : vector<1x1x8x32xf32> to vector<8x32xf32>
    %cst_104 = arith.constant dense<0.000000e+00> : vector<16x32xf32>
    %196 = tpu.matmul %193, %195, %cst_104 {dimension_numbers = #tpu.dot_dimension_numbers<[1], [0], [0], [1], [0, 0, 1, 1], [], []>} : vector<16x8xf32>, vector<8x32xf32>, vector<16x32xf32> -> vector<16x32xf32>
    %197 = arith.addf %175, %196 : vector<16x32xf32>
    %198 = vector.extract_strided_slice %174 {offsets = [0, 8], sizes = [16, 8], strides = [1, 1]} : vector<16x96xf32> to vector<16x8xf32>
    %199 = vector.extract_strided_slice %174 {offsets = [0, 40], sizes = [16, 8], strides = [1, 1]} : vector<16x96xf32> to vector<16x8xf32>
    %200 = vector.extract_strided_slice %174 {offsets = [0, 72], sizes = [16, 8], strides = [1, 1]} : vector<16x96xf32> to vector<16x8xf32>
    %cst_105 = arith.constant dense<0.000000e+00> : vector<16x16xf32>
    %201 = tpu.matmul %198, %199, %cst_105 {dimension_numbers = #tpu.dot_dimension_numbers<[1], [1], [0], [0], [0, 0, 1, 0], [], []>} : vector<16x8xf32>, vector<16x8xf32>, vector<16x16xf32> -> vector<16x16xf32>
    %cst_106 = arith.constant 0.353553385 : f32
    %202 = vector.broadcast %cst_106 : f32 to vector<16x16xf32>
    %203 = arith.mulf %201, %202 : vector<16x16xf32>
    %204 = arith.addf %203, %1 : vector<16x16xf32>
    %cst_107 = arith.constant dense<0xFF800000> : vector<16xf32>
    %205 = vector.multi_reduction <maximumf>, %204, %cst_107 [1] : vector<16x16xf32> to vector<16xf32>
    %206 = vector.shape_cast %205 : vector<16xf32> to vector<16x1xf32>
    %207 = vector.broadcast %206 : vector<16x1xf32> to vector<16x16xf32>
    %208 = arith.subf %204, %207 : vector<16x16xf32>
    %209 = math.exp %208 : vector<16x16xf32>
    %cst_108 = arith.constant dense<0.000000e+00> : vector<16xf32>
    %210 = vector.multi_reduction <add>, %209, %cst_108 [1] : vector<16x16xf32> to vector<16xf32>
    %211 = vector.shape_cast %210 : vector<16xf32> to vector<16x1xf32>
    %212 = tpu.reciprocal %211 {approx = true} : vector<16x1xf32> -> vector<16x1xf32>
    %213 = vector.broadcast %212 : vector<16x1xf32> to vector<16x16xf32>
    %214 = arith.mulf %209, %213 : vector<16x16xf32>
    %cst_109 = arith.constant dense<0.000000e+00> : vector<16x8xf32>
    %215 = tpu.matmul %214, %200, %cst_109 {dimension_numbers = #tpu.dot_dimension_numbers<[1], [0], [0], [1], [0, 0, 1, 1], [], []>} : vector<16x16xf32>, vector<16x8xf32>, vector<16x8xf32> -> vector<16x8xf32>
    %c1_110 = arith.constant 1 : index
    %c1_111 = arith.constant 1 : index
    %c0_112 = arith.constant 0 : index
    %c0_113 = arith.constant 0 : index
    %216 = vector.load %arg4[%c1_110, %c1_111, %c0_112, %c0_113] : memref<2x4x8x32xf32, #tpu.memory_space<vmem>>, vector<1x1x8x32xf32>
    %217 = vector.shape_cast %216 : vector<1x1x8x32xf32> to vector<8x32xf32>
    %cst_114 = arith.constant dense<0.000000e+00> : vector<16x32xf32>
    %218 = tpu.matmul %215, %217, %cst_114 {dimension_numbers = #tpu.dot_dimension_numbers<[1], [0], [0], [1], [0, 0, 1, 1], [], []>} : vector<16x8xf32>, vector<8x32xf32>, vector<16x32xf32> -> vector<16x32xf32>
    %219 = arith.addf %197, %218 : vector<16x32xf32>
    %220 = vector.extract_strided_slice %174 {offsets = [0, 16], sizes = [16, 8], strides = [1, 1]} : vector<16x96xf32> to vector<16x8xf32>
    %221 = vector.extract_strided_slice %174 {offsets = [0, 48], sizes = [16, 8], strides = [1, 1]} : vector<16x96xf32> to vector<16x8xf32>
    %222 = vector.extract_strided_slice %174 {offsets = [0, 80], sizes = [16, 8], strides = [1, 1]} : vector<16x96xf32> to vector<16x8xf32>
    %cst_115 = arith.constant dense<0.000000e+00> : vector<16x16xf32>
    %223 = tpu.matmul %220, %221, %cst_115 {dimension_numbers = #tpu.dot_dimension_numbers<[1], [1], [0], [0], [0, 0, 1, 0], [], []>} : vector<16x8xf32>, vector<16x8xf32>, vector<16x16xf32> -> vector<16x16xf32>
    %cst_116 = arith.constant 0.353553385 : f32
    %224 = vector.broadcast %cst_116 : f32 to vector<16x16xf32>
    %225 = arith.mulf %223, %224 : vector<16x16xf32>
    %226 = arith.addf %225, %1 : vector<16x16xf32>
    %cst_117 = arith.constant dense<0xFF800000> : vector<16xf32>
    %227 = vector.multi_reduction <maximumf>, %226, %cst_117 [1] : vector<16x16xf32> to vector<16xf32>
    %228 = vector.shape_cast %227 : vector<16xf32> to vector<16x1xf32>
    %229 = vector.broadcast %228 : vector<16x1xf32> to vector<16x16xf32>
    %230 = arith.subf %226, %229 : vector<16x16xf32>
    %231 = math.exp %230 : vector<16x16xf32>
    %cst_118 = arith.constant dense<0.000000e+00> : vector<16xf32>
    %232 = vector.multi_reduction <add>, %231, %cst_118 [1] : vector<16x16xf32> to vector<16xf32>
    %233 = vector.shape_cast %232 : vector<16xf32> to vector<16x1xf32>
    %234 = tpu.reciprocal %233 {approx = true} : vector<16x1xf32> -> vector<16x1xf32>
    %235 = vector.broadcast %234 : vector<16x1xf32> to vector<16x16xf32>
    %236 = arith.mulf %231, %235 : vector<16x16xf32>
    %cst_119 = arith.constant dense<0.000000e+00> : vector<16x8xf32>
    %237 = tpu.matmul %236, %222, %cst_119 {dimension_numbers = #tpu.dot_dimension_numbers<[1], [0], [0], [1], [0, 0, 1, 1], [], []>} : vector<16x16xf32>, vector<16x8xf32>, vector<16x8xf32> -> vector<16x8xf32>
    %c1_120 = arith.constant 1 : index
    %c2_121 = arith.constant 2 : index
    %c0_122 = arith.constant 0 : index
    %c0_123 = arith.constant 0 : index
    %238 = vector.load %arg4[%c1_120, %c2_121, %c0_122, %c0_123] : memref<2x4x8x32xf32, #tpu.memory_space<vmem>>, vector<1x1x8x32xf32>
    %239 = vector.shape_cast %238 : vector<1x1x8x32xf32> to vector<8x32xf32>
    %cst_124 = arith.constant dense<0.000000e+00> : vector<16x32xf32>
    %240 = tpu.matmul %237, %239, %cst_124 {dimension_numbers = #tpu.dot_dimension_numbers<[1], [0], [0], [1], [0, 0, 1, 1], [], []>} : vector<16x8xf32>, vector<8x32xf32>, vector<16x32xf32> -> vector<16x32xf32>
    %241 = arith.addf %219, %240 : vector<16x32xf32>
    %242 = vector.extract_strided_slice %174 {offsets = [0, 24], sizes = [16, 8], strides = [1, 1]} : vector<16x96xf32> to vector<16x8xf32>
    %243 = vector.extract_strided_slice %174 {offsets = [0, 56], sizes = [16, 8], strides = [1, 1]} : vector<16x96xf32> to vector<16x8xf32>
    %244 = vector.extract_strided_slice %174 {offsets = [0, 88], sizes = [16, 8], strides = [1, 1]} : vector<16x96xf32> to vector<16x8xf32>
    %cst_125 = arith.constant dense<0.000000e+00> : vector<16x16xf32>
    %245 = tpu.matmul %242, %243, %cst_125 {dimension_numbers = #tpu.dot_dimension_numbers<[1], [1], [0], [0], [0, 0, 1, 0], [], []>} : vector<16x8xf32>, vector<16x8xf32>, vector<16x16xf32> -> vector<16x16xf32>
    %cst_126 = arith.constant 0.353553385 : f32
    %246 = vector.broadcast %cst_126 : f32 to vector<16x16xf32>
    %247 = arith.mulf %245, %246 : vector<16x16xf32>
    %248 = arith.addf %247, %1 : vector<16x16xf32>
    %cst_127 = arith.constant dense<0xFF800000> : vector<16xf32>
    %249 = vector.multi_reduction <maximumf>, %248, %cst_127 [1] : vector<16x16xf32> to vector<16xf32>
    %250 = vector.shape_cast %249 : vector<16xf32> to vector<16x1xf32>
    %251 = vector.broadcast %250 : vector<16x1xf32> to vector<16x16xf32>
    %252 = arith.subf %248, %251 : vector<16x16xf32>
    %253 = math.exp %252 : vector<16x16xf32>
    %cst_128 = arith.constant dense<0.000000e+00> : vector<16xf32>
    %254 = vector.multi_reduction <add>, %253, %cst_128 [1] : vector<16x16xf32> to vector<16xf32>
    %255 = vector.shape_cast %254 : vector<16xf32> to vector<16x1xf32>
    %256 = tpu.reciprocal %255 {approx = true} : vector<16x1xf32> -> vector<16x1xf32>
    %257 = vector.broadcast %256 : vector<16x1xf32> to vector<16x16xf32>
    %258 = arith.mulf %253, %257 : vector<16x16xf32>
    %cst_129 = arith.constant dense<0.000000e+00> : vector<16x8xf32>
    %259 = tpu.matmul %258, %244, %cst_129 {dimension_numbers = #tpu.dot_dimension_numbers<[1], [0], [0], [1], [0, 0, 1, 1], [], []>} : vector<16x16xf32>, vector<16x8xf32>, vector<16x8xf32> -> vector<16x8xf32>
    %c1_130 = arith.constant 1 : index
    %c3_131 = arith.constant 3 : index
    %c0_132 = arith.constant 0 : index
    %c0_133 = arith.constant 0 : index
    %260 = vector.load %arg4[%c1_130, %c3_131, %c0_132, %c0_133] : memref<2x4x8x32xf32, #tpu.memory_space<vmem>>, vector<1x1x8x32xf32>
    %261 = vector.shape_cast %260 : vector<1x1x8x32xf32> to vector<8x32xf32>
    %cst_134 = arith.constant dense<0.000000e+00> : vector<16x32xf32>
    %262 = tpu.matmul %259, %261, %cst_134 {dimension_numbers = #tpu.dot_dimension_numbers<[1], [0], [0], [1], [0, 0, 1, 1], [], []>} : vector<16x8xf32>, vector<8x32xf32>, vector<16x32xf32> -> vector<16x32xf32>
    %263 = arith.addf %241, %262 : vector<16x32xf32>
    %c1_135 = arith.constant 1 : index
    %c0_136 = arith.constant 0 : index
    %c0_137 = arith.constant 0 : index
    %264 = vector.load %arg5[%c1_135, %c0_136, %c0_137] : memref<2x1x32xf32, #tpu.memory_space<vmem>>, vector<1x1x32xf32>
    %265 = vector.shape_cast %264 : vector<1x1x32xf32> to vector<1x32xf32>
    %266 = vector.broadcast %265 : vector<1x32xf32> to vector<16x32xf32>
    %267 = arith.addf %263, %266 : vector<16x32xf32>
    %268 = arith.addf %167, %267 : vector<16x32xf32>
    %c1_138 = arith.constant 1 : index
    %c0_139 = arith.constant 0 : index
    %c0_140 = arith.constant 0 : index
    %269 = vector.load %arg6[%c1_138, %c0_139, %c0_140] : memref<2x1x32xf32, #tpu.memory_space<vmem>>, vector<1x1x32xf32>
    %270 = vector.shape_cast %269 : vector<1x1x32xf32> to vector<1x32xf32>
    %c1_141 = arith.constant 1 : index
    %c0_142 = arith.constant 0 : index
    %c0_143 = arith.constant 0 : index
    %271 = vector.load %arg7[%c1_141, %c0_142, %c0_143] : memref<2x1x32xf32, #tpu.memory_space<vmem>>, vector<1x1x32xf32>
    %272 = vector.shape_cast %271 : vector<1x1x32xf32> to vector<1x32xf32>
    %cst_144 = arith.constant dense<0.000000e+00> : vector<16xf32>
    %273 = vector.multi_reduction <add>, %268, %cst_144 [1] : vector<16x32xf32> to vector<16xf32>
    %274 = vector.shape_cast %273 : vector<16xf32> to vector<16x1xf32>
    %cst_145 = arith.constant 3.200000e+01 : f32
    %275 = vector.broadcast %cst_145 : f32 to vector<16x1xf32>
    %276 = arith.divf %274, %275 : vector<16x1xf32>
    %277 = vector.broadcast %276 : vector<16x1xf32> to vector<16x32xf32>
    %278 = arith.subf %268, %277 : vector<16x32xf32>
    %279 = arith.mulf %278, %278 : vector<16x32xf32>
    %cst_146 = arith.constant dense<0.000000e+00> : vector<16xf32>
    %280 = vector.multi_reduction <add>, %279, %cst_146 [1] : vector<16x32xf32> to vector<16xf32>
    %281 = vector.shape_cast %280 : vector<16xf32> to vector<16x1xf32>
    %cst_147 = arith.constant 3.200000e+01 : f32
    %282 = vector.broadcast %cst_147 : f32 to vector<16x1xf32>
    %283 = arith.divf %281, %282 : vector<16x1xf32>
    %cst_148 = arith.constant 9.99999974E-6 : f32
    %284 = vector.broadcast %cst_148 : f32 to vector<16x1xf32>
    %285 = arith.addf %283, %284 : vector<16x1xf32>
    %286 = math.rsqrt %285 : vector<16x1xf32>
    %287 = vector.broadcast %286 : vector<16x1xf32> to vector<16x32xf32>
    %288 = arith.mulf %278, %287 : vector<16x32xf32>
    %289 = vector.broadcast %270 : vector<1x32xf32> to vector<16x32xf32>
    %290 = arith.mulf %288, %289 : vector<16x32xf32>
    %291 = vector.broadcast %272 : vector<1x32xf32> to vector<16x32xf32>
    %292 = arith.addf %290, %291 : vector<16x32xf32>
    %c1_149 = arith.constant 1 : index
    %c0_150 = arith.constant 0 : index
    %c0_151 = arith.constant 0 : index
    %293 = vector.load %arg8[%c1_149, %c0_150, %c0_151] : memref<2x32x64xf32, #tpu.memory_space<vmem>>, vector<1x32x64xf32>
    %294 = vector.shape_cast %293 : vector<1x32x64xf32> to vector<32x64xf32>
    %cst_152 = arith.constant dense<0.000000e+00> : vector<16x64xf32>
    %295 = tpu.matmul %292, %294, %cst_152 {dimension_numbers = #tpu.dot_dimension_numbers<[1], [0], [0], [1], [0, 0, 1, 1], [], []>} : vector<16x32xf32>, vector<32x64xf32>, vector<16x64xf32> -> vector<16x64xf32>
    %c1_153 = arith.constant 1 : index
    %c0_154 = arith.constant 0 : index
    %c0_155 = arith.constant 0 : index
    %296 = vector.load %arg9[%c1_153, %c0_154, %c0_155] : memref<2x1x64xf32, #tpu.memory_space<vmem>>, vector<1x1x64xf32>
    %297 = vector.shape_cast %296 : vector<1x1x64xf32> to vector<1x64xf32>
    %298 = vector.broadcast %297 : vector<1x64xf32> to vector<16x64xf32>
    %299 = arith.addf %295, %298 : vector<16x64xf32>
    %cst_156 = arith.constant 0.000000e+00 : f32
    %300 = vector.broadcast %cst_156 : f32 to vector<16x64xf32>
    %301 = arith.maximumf %299, %300 : vector<16x64xf32>
    %c1_157 = arith.constant 1 : index
    %c0_158 = arith.constant 0 : index
    %c0_159 = arith.constant 0 : index
    %302 = vector.load %arg10[%c1_157, %c0_158, %c0_159] : memref<2x64x32xf32, #tpu.memory_space<vmem>>, vector<1x64x32xf32>
    %303 = vector.shape_cast %302 : vector<1x64x32xf32> to vector<64x32xf32>
    %cst_160 = arith.constant dense<0.000000e+00> : vector<16x32xf32>
    %304 = tpu.matmul %301, %303, %cst_160 {dimension_numbers = #tpu.dot_dimension_numbers<[1], [0], [0], [1], [0, 0, 1, 1], [], []>} : vector<16x64xf32>, vector<64x32xf32>, vector<16x32xf32> -> vector<16x32xf32>
    %c1_161 = arith.constant 1 : index
    %c0_162 = arith.constant 0 : index
    %c0_163 = arith.constant 0 : index
    %305 = vector.load %arg11[%c1_161, %c0_162, %c0_163] : memref<2x1x32xf32, #tpu.memory_space<vmem>>, vector<1x1x32xf32>
    %306 = vector.shape_cast %305 : vector<1x1x32xf32> to vector<1x32xf32>
    %307 = vector.broadcast %306 : vector<1x32xf32> to vector<16x32xf32>
    %308 = arith.addf %304, %307 : vector<16x32xf32>
    %309 = arith.addf %292, %308 : vector<16x32xf32>
    %c1_164 = arith.constant 1 : index
    %c0_165 = arith.constant 0 : index
    %c0_166 = arith.constant 0 : index
    %310 = vector.load %arg12[%c1_164, %c0_165, %c0_166] : memref<2x1x32xf32, #tpu.memory_space<vmem>>, vector<1x1x32xf32>
    %311 = vector.shape_cast %310 : vector<1x1x32xf32> to vector<1x32xf32>
    %c1_167 = arith.constant 1 : index
    %c0_168 = arith.constant 0 : index
    %c0_169 = arith.constant 0 : index
    %312 = vector.load %arg13[%c1_167, %c0_168, %c0_169] : memref<2x1x32xf32, #tpu.memory_space<vmem>>, vector<1x1x32xf32>
    %313 = vector.shape_cast %312 : vector<1x1x32xf32> to vector<1x32xf32>
    %cst_170 = arith.constant dense<0.000000e+00> : vector<16xf32>
    %314 = vector.multi_reduction <add>, %309, %cst_170 [1] : vector<16x32xf32> to vector<16xf32>
    %315 = vector.shape_cast %314 : vector<16xf32> to vector<16x1xf32>
    %cst_171 = arith.constant 3.200000e+01 : f32
    %316 = vector.broadcast %cst_171 : f32 to vector<16x1xf32>
    %317 = arith.divf %315, %316 : vector<16x1xf32>
    %318 = vector.broadcast %317 : vector<16x1xf32> to vector<16x32xf32>
    %319 = arith.subf %309, %318 : vector<16x32xf32>
    %320 = arith.mulf %319, %319 : vector<16x32xf32>
    %cst_172 = arith.constant dense<0.000000e+00> : vector<16xf32>
    %321 = vector.multi_reduction <add>, %320, %cst_172 [1] : vector<16x32xf32> to vector<16xf32>
    %322 = vector.shape_cast %321 : vector<16xf32> to vector<16x1xf32>
    %cst_173 = arith.constant 3.200000e+01 : f32
    %323 = vector.broadcast %cst_173 : f32 to vector<16x1xf32>
    %324 = arith.divf %322, %323 : vector<16x1xf32>
    %cst_174 = arith.constant 9.99999974E-6 : f32
    %325 = vector.broadcast %cst_174 : f32 to vector<16x1xf32>
    %326 = arith.addf %324, %325 : vector<16x1xf32>
    %327 = math.rsqrt %326 : vector<16x1xf32>
    %328 = vector.broadcast %327 : vector<16x1xf32> to vector<16x32xf32>
    %329 = arith.mulf %319, %328 : vector<16x32xf32>
    %330 = vector.broadcast %311 : vector<1x32xf32> to vector<16x32xf32>
    %331 = arith.mulf %329, %330 : vector<16x32xf32>
    %332 = vector.broadcast %313 : vector<1x32xf32> to vector<16x32xf32>
    %333 = arith.addf %331, %332 : vector<16x32xf32>
    %c0_175 = arith.constant 0 : index
    %c0_176 = arith.constant 0 : index
    %334 = vector.load %arg14[%c0_175, %c0_176] : memref<32x16xf32, #tpu.memory_space<vmem>>, vector<32x16xf32>
    %cst_177 = arith.constant dense<0.000000e+00> : vector<16x16xf32>
    %335 = tpu.matmul %333, %334, %cst_177 {dimension_numbers = #tpu.dot_dimension_numbers<[1], [0], [0], [1], [0, 0, 1, 1], [], []>} : vector<16x32xf32>, vector<32x16xf32>, vector<16x16xf32> -> vector<16x16xf32>
    %c0_178 = arith.constant 0 : index
    %c0_179 = arith.constant 0 : index
    %336 = vector.load %arg15[%c0_178, %c0_179] : memref<1x16xf32, #tpu.memory_space<vmem>>, vector<1x16xf32>
    %337 = vector.broadcast %336 : vector<1x16xf32> to vector<16x16xf32>
    %338 = arith.addf %335, %337 : vector<16x16xf32>
    %c0_180 = arith.constant 0 : index
    %c0_181 = arith.constant 0 : index
    %339 = vector.load %arg16[%c0_180, %c0_181] : memref<16x16xf32, #tpu.memory_space<vmem>>, vector<16x16xf32>
    tpu.vector_store %arg16[%c0_180, %c0_181], %338 {strides = array<i32>} : memref<16x16xf32, #tpu.memory_space<vmem>>, vector<16x16xf32>,
    return
  }
}

</mosaic_0001>

<llo_original>
// kernel: forward.1
$region0: #{forward.1}
  #allocation0 [shape = 'u32[]', space=smem, size = 0x4, offset = 0x4, fixed_abs, tag = 'smem constant byte address 0x4 - core index']
  #allocation1 [shape = 'u32[144,128]{1,0:T(1,128)}', space=vmem, size = 0x12000, scoped, tag = 'internal scratch']
  %s0 = inlined_call_operand.vmem [shape: f32[16,32], index: 0, kind: input, shape index: {}]
  %s1 = inlined_call_operand.vmem [shape: f32[16,16], index: 1, kind: input, shape index: {}]
  %s2 = inlined_call_operand.vmem [shape: f32[2,32,96], index: 2, kind: input, shape index: {}]
  %s3 = inlined_call_operand.vmem [shape: f32[2,1,96], index: 3, kind: input, shape index: {}]
  %s4 = inlined_call_operand.vmem [shape: f32[2,4,8,32], index: 4, kind: input, shape index: {}]
  %s5 = inlined_call_operand.vmem [shape: f32[2,1,32], index: 5, kind: input, shape index: {}]
  %s6 = inlined_call_operand.vmem [shape: f32[2,1,32], index: 6, kind: input, shape index: {}]
  %s7 = inlined_call_operand.vmem [shape: f32[2,1,32], index: 7, kind: input, shape index: {}]
  %s8 = inlined_call_operand.vmem [shape: f32[2,32,64], index: 8, kind: input, shape index: {}]
  %s9 = inlined_call_operand.vmem [shape: f32[2,1,64], index: 9, kind: input, shape index: {}]
  %s10 = inlined_call_operand.vmem [shape: f32[2,64,32], index: 10, kind: input, shape index: {}]
  %s11 = inlined_call_operand.vmem [shape: f32[2,1,32], index: 11, kind: input, shape index: {}]
  %s12 = inlined_call_operand.vmem [shape: f32[2,1,32], index: 12, kind: input, shape index: {}]
  %s13 = inlined_call_operand.vmem [shape: f32[2,1,32], index: 13, kind: input, shape index: {}]
  %s14 = inlined_call_operand.vmem [shape: f32[32,16], index: 14, kind: input, shape index: {}]
  %s15 = inlined_call_operand.vmem [shape: f32[1,16], index: 15, kind: input, shape index: {}]
  %s16 = inlined_call_operand.hbm [shape: f32[16,16], index: 16, kind: output, shape index: {}]
  %s17 = sld [smem:[#allocation0]]
  $region74: #{forward.1} parent=0
    _
  %s19 = ssub.s32 1, %s17
  %s20 = scalar_select 0, %s19, %s17
  $region1: #{forward.1} parent=0
    #allocation2 [shape = 'u8[8192]{0}', space=vmem, size = 0x2000, scoped, tag = 'output window, operand 0, single buffered']
    #allocation3 [shape = 's32[1]{0}', space=sflag, size = 0x4, scoped, tag = 'scoped memory for forward.1']
    %21 = vsyncpa [#allocation3], 0
    // Predicated region
    $region2: #{forward.1} parent=1 // pred_check
      _
    $region3: #{forward.1} parent=1 // pred_check_branch
      %23 = sbr.rel (0) target = $region5
    $region4: #{forward.1} parent=1 // pred_region
      _
    $region5: #{forward.1} parent=1 // pred_fallthru
      _
    // Predicated region
    $region6: #{forward.1} parent=1 // pred_check
      _
    $region7: #{forward.1} parent=1 // pred_check_branch
      %25 = sbr.rel (0) target = $region9
    $region8: #{forward.1} parent=1 // pred_region
      _
    $region9: #{forward.1} parent=1 // pred_fallthru
      _
    // Predicated region
    $region10: #{forward.1} parent=1 // pred_check
      _
    $region11: #{forward.1} parent=1 // pred_check_branch
      %27 = sbr.rel (0) target = $region13
    $region12: #{forward.1} parent=1 // pred_region
      _
    $region13: #{forward.1} parent=1 // pred_fallthru
      _
    // Predicated region
    $region14: #{forward.1} parent=1 // pred_check
      _
    $region15: #{forward.1} parent=1 // pred_check_branch
      %29 = sbr.rel (0) target = $region17
    $region16: #{forward.1} parent=1 // pred_region
      _
    $region17: #{forward.1} parent=1 // pred_fallthru
      _
    // Predicated region
    $region18: #{forward.1} parent=1 // pred_check
      _
    $region19: #{forward.1} parent=1 // pred_check_branch
      %31 = sbr.rel (0) target = $region21
    $region20: #{forward.1} parent=1 // pred_region
      _
    $region21: #{forward.1} parent=1 // pred_fallthru
      _
    // Predicated region
    $region22: #{forward.1} parent=1 // pred_check
      _
    $region23: #{forward.1} parent=1 // pred_check_branch
      %33 = sbr.rel (0) target = $region25
    $region24: #{forward.1} parent=1 // pred_region
      _
    $region25: #{forward.1} parent=1 // pred_fallthru
      _
    // Predicated region
    $region26: #{forward.1} parent=1 // pred_check
      _
    $region27: #{forward.1} parent=1 // pred_check_branch
      %35 = sbr.rel (0) target = $region29
    $region28: #{forward.1} parent=1 // pred_region
      _
    $region29: #{forward.1} parent=1 // pred_fallthru
      _
    // Predicated region
    $region30: #{forward.1} parent=1 // pred_check
      _
    $region31: #{forward.1} parent=1 // pred_check_branch
      %37 = sbr.rel (0) target = $region33
    $region32: #{forward.1} parent=1 // pred_region
      _
    $region33: #{forward.1} parent=1 // pred_fallthru
      _
    // Predicated region
    $region34: #{forward.1} parent=1 // pred_check
      _
    $region35: #{forward.1} parent=1 // pred_check_branch
      %39 = sbr.rel (0) target = $region37
    $region36: #{forward.1} parent=1 // pred_region
      _
    $region37: #{forward.1} parent=1 // pred_fallthru
      _
    // Predicated region
    $region38: #{forward.1} parent=1 // pred_check
      _
    $region39: #{forward.1} parent=1 // pred_check_branch
      %41 = sbr.rel (0) target = $region41
    $region40: #{forward.1} parent=1 // pred_region
      _
    $region41: #{forward.1} parent=1 // pred_fallthru
      _
    // Predicated region
    $region42: #{forward.1} parent=1 // pred_check
      _
    $region43: #{forward.1} parent=1 // pred_check_branch
      %43 = sbr.rel (0) target = $region45
    $region44: #{forward.1} parent=1 // pred_region
      _
    $region45: #{forward.1} parent=1 // pred_fallthru
      _
    // Predicated region
    $region46: #{forward.1} parent=1 // pred_check
      _
    $region47: #{forward.1} parent=1 // pred_check_branch
      %45 = sbr.rel (0) target = $region49
    $region48: #{forward.1} parent=1 // pred_region
      _
    $region49: #{forward.1} parent=1 // pred_fallthru
      _
    // Predicated region
    $region50: #{forward.1} parent=1 // pred_check
      _
    $region51: #{forward.1} parent=1 // pred_check_branch
      %47 = sbr.rel (0) target = $region53
    $region52: #{forward.1} parent=1 // pred_region
      _
    $region53: #{forward.1} parent=1 // pred_fallthru
      _
    // Predicated region
    $region54: #{forward.1} parent=1 // pred_check
      _
    $region55: #{forward.1} parent=1 // pred_check_branch
      %49 = sbr.rel (0) target = $region57
    $region56: #{forward.1} parent=1 // pred_region
      _
    $region57: #{forward.1} parent=1 // pred_fallthru
      _
    // Predicated region
    $region58: #{forward.1} parent=1 // pred_check
      _
    $region59: #{forward.1} parent=1 // pred_check_branch
      %51 = sbr.rel (0) target = $region61
    $region60: #{forward.1} parent=1 // pred_region
      _
    $region61: #{forward.1} parent=1 // pred_fallthru
      _
    // Predicated region
    $region62: #{forward.1} parent=1 // pred_check
      _
    $region63: #{forward.1} parent=1 // pred_check_branch
      %53 = sbr.rel (0) target = $region65
    $region64: #{forward.1} parent=1 // pred_region
      _
    $region65: #{forward.1} parent=1 // pred_fallthru
      _
    %v54 = vld [vmem:[%s0] sm:$0xff]
    %v55 = vld [vmem:[%s0 + $0x8] sm:$0xff]
    %v56 = vld [vmem:[%s1] sm:$0xff]
    %v57 = vld [vmem:[%s1 + $0x8] sm:$0xff]
    %v58 = vld [vmem:[%s2] sm:$0xff]
    %v59 = vld [vmem:[%s2 + $0x8] sm:$0xff]
    %v60 = vld [vmem:[%s2 + $0x10] sm:$0xff]
    %v61 = vld [vmem:[%s2 + $0x18] sm:$0xff]
    %v62 = vld [vmem:[%s3] sm:$0x1]
    %v64 = vlaneseq
    %v65 = vshrl.u32 %v64, 7
    %v66 = vsub.s32 0, %v65
    %v67 = vrot.slane %v62, %v66
    %vm69 = vcmask 261120
    %v71 = vsel %vm69, %v54, 0
    %v74 = vsel %vm69, %v55, 0
    %76 = vmatprep.subr.mxu0 0.0
    %77 = vmatpush1.msra.mxu0 0.0
    %78 = vmatprep.subr.mxu0 0.0
    %79 = vmatpush1.msra.mxu0 0.0
    %80 = vmatprep.subr.mxu0 0.0
    %81 = vmatpush1.msra.mxu0 0.0
    %82 = vmatprep.subr.mxu0 0.0
    %83 = vmatpush1.msra.mxu0 0.0
    %84 = vmatprep.subr.mxu0 0.0
    %85 = vmatpush1.msra.mxu0 0.0
    %86 = vmatprep.subr.mxu0 0.0
    %87 = vmatpush1.msra.mxu0 0.0
    %88 = vmatprep.subr.mxu0 0.0
    %89 = vmatpush1.msra.mxu0 0.0
    %90 = vmatprep.subr.mxu0 0.0
    %91 = vmatpush1.msra.mxu0 0.0
    %92 = vmatprep.subr.mxu0 0.0
    %93 = vmatpush1.msra.mxu0 0.0
    %94 = vmatprep.subr.mxu0 0.0
    %95 = vmatpush1.msra.mxu0 0.0
    %96 = vmatprep.subr.mxu0 0.0
    %97 = vmatpush1.msra.mxu0 0.0
    %98 = vmatprep.subr.mxu0 0.0
    %99 = vmatpush1.msra.mxu0 0.0
    %100 = vmatprep.subr.mxu0 0.0
    %101 = vmatpush1.msra.mxu0 %v61
    %102 = vmatprep.subr.mxu0 0.0
    %103 = vmatpush1.msra.mxu0 %v60
    %104 = vmatprep.subr.mxu0 0.0
    %105 = vmatpush1.msra.mxu0 %v59
    %106 = vmatprep.subr.mxu0 0.0
    %107 = vmatpush1.msra.mxu0 %v58
    %108 = vmatprep.subr.mxu0 0.0
    %109 = vmatpush2.msra.mxu0 0.0
    %110 = vmatprep.subr.mxu0 0.0
    %111 = vmatpush2.msra.mxu0 0.0
    %112 = vmatprep.subr.mxu0 0.0
    %113 = vmatpush2.msra.mxu0 0.0
    %114 = vmatprep.subr.mxu0 0.0
    %115 = vmatpush2.msra.mxu0 0.0
    %116 = vmatprep.subr.mxu0 0.0
    %117 = vmatpush2.msra.mxu0 0.0
    %118 = vmatprep.subr.mxu0 0.0
    %119 = vmatpush2.msra.mxu0 0.0
    %120 = vmatprep.subr.mxu0 0.0
    %121 = vmatpush2.msra.mxu0 0.0
    %122 = vmatprep.subr.mxu0 0.0
    %123 = vmatpush2.msra.mxu0 0.0
    %124 = vmatprep.subr.mxu0 0.0
    %125 = vmatpush2.msra.mxu0 0.0
    %126 = vmatprep.subr.mxu0 0.0
    %127 = vmatpush2.msra.mxu0 0.0
    %128 = vmatprep.subr.mxu0 0.0
    %129 = vmatpush2.msra.mxu0 0.0
    %130 = vmatprep.subr.mxu0 0.0
    %131 = vmatpush2.msra.mxu0 0.0
    %132 = vmatprep.subr.mxu0 0.0
    %133 = vmatpush2.msra.mxu0 0.0
    %134 = vmatprep.subr.mxu0 0.0
    %135 = vmatpush2.msra.mxu0 0.0
    %136 = vmatprep.subr.mxu0 0.0
    %137 = vmatpush2.msra.mxu0 0.0
    %138 = vmatprep.subr.mxu0 0.0
    %139 = vmatpush2.msra.mxu0 0.0
    %140 = vmatprep.mubr.f32.mxu0 0.0
    %141 = vmatmul.mubr.f32.gmra.mxu0 %v71
    %v142 = vpop.f32.mrf.mxu0
    %v143 = vadd.f32 %v67, %v142
    %v144 = vpop.f32.mrf.mxu0
    %145 = vmatprep.mubr.f32.mxu0 0.0
    %146 = vmatmul.mubr.f32.gmra.mxu0 %v74
    %v147 = vpop.f32.mrf.mxu0
    %v148 = vadd.f32 %v67, %v147
    %v149 = vpop.f32.mrf.mxu0
    %150 = vdwg.mxu0
    %153 = vrot.lane.b32.xlu0 %v143, 96
    %v154 = vpop.permute.xlu0 %153
    %155 = vrot.lane.b32.xlu0 %v148, 96
    %v156 = vpop.permute.xlu0 %155
    %vm157 = vcmask 64512
    %v158 = vsel %vm157, %v143, 0
    %v160 = vsel %vm157, %v148, 0
    %v162 = vsel %vm157, %v154, 0
    %v164 = vsel %vm157, %v156, 0
    %166 = vmatprep.subr.mxu0 0.0
    %167 = vmatpush1.xpose.msra.mxu0 0.0
    %168 = vmatprep.subr.mxu0 0.0
    %169 = vmatpush1.xpose.msra.mxu0 0.0
    %170 = vmatprep.subr.mxu0 0.0
    %171 = vmatpush1.xpose.msra.mxu0 0.0
    %172 = vmatprep.subr.mxu0 0.0
    %173 = vmatpush1.xpose.msra.mxu0 0.0
    %174 = vmatprep.subr.mxu0 0.0
    %175 = vmatpush1.xpose.msra.mxu0 0.0
    %176 = vmatprep.subr.mxu0 0.0
    %177 = vmatpush1.xpose.msra.mxu0 0.0
    %178 = vmatprep.subr.mxu0 0.0
    %179 = vmatpush1.xpose.msra.mxu0 0.0
    %180 = vmatprep.subr.mxu0 0.0
    %181 = vmatpush1.xpose.msra.mxu0 0.0
    %182 = vmatprep.subr.mxu0 0.0
    %183 = vmatpush1.xpose.msra.mxu0 0.0
    %184 = vmatprep.subr.mxu0 0.0
    %185 = vmatpush1.xpose.msra.mxu0 0.0
    %186 = vmatprep.subr.mxu0 0.0
    %187 = vmatpush1.xpose.msra.mxu0 0.0
    %188 = vmatprep.subr.mxu0 0.0
    %189 = vmatpush1.xpose.msra.mxu0 0.0
    %190 = vmatprep.subr.mxu0 0.0
    %191 = vmatpush1.xpose.msra.mxu0 0.0
    %192 = vmatprep.subr.mxu0 0.0
    %193 = vmatpush1.xpose.msra.mxu0 0.0
    %194 = vmatprep.subr.mxu0 0.0
    %195 = vmatpush1.xpose.msra.mxu0 %v164
    %196 = vmatprep.subr.mxu0 0.0
    %197 = vmatpush1.xpose.msra.mxu0 %v162
    %198 = vmatprep.subr.mxu0 0.0
    %199 = vmatpush2.xpose.msra.mxu0 0.0
    %200 = vmatprep.subr.mxu0 0.0
    %201 = vmatpush2.xpose.msra.mxu0 0.0
    %202 = vmatprep.subr.mxu0 0.0
    %203 = vmatpush2.xpose.msra.mxu0 0.0
    %204 = vmatprep.subr.mxu0 0.0
    %205 = vmatpush2.xpose.msra.mxu0 0.0
    %206 = vmatprep.subr.mxu0 0.0
    %207 = vmatpush2.xpose.msra.mxu0 0.0
    %208 = vmatprep.subr.mxu0 0.0
    %209 = vmatpush2.xpose.msra.mxu0 0.0
    %210 = vmatprep.subr.mxu0 0.0
    %211 = vmatpush2.xpose.msra.mxu0 0.0
    %212 = vmatprep.subr.mxu0 0.0
    %213 = vmatpush2.xpose.msra.mxu0 0.0
    %214 = vmatprep.subr.mxu0 0.0
    %215 = vmatpush2.xpose.msra.mxu0 0.0
    %216 = vmatprep.subr.mxu0 0.0
    %217 = vmatpush2.xpose.msra.mxu0 0.0
    %218 = vmatprep.subr.mxu0 0.0
    %219 = vmatpush2.xpose.msra.mxu0 0.0
    %220 = vmatprep.subr.mxu0 0.0
    %221 = vmatpush2.xpose.msra.mxu0 0.0
    %222 = vmatprep.subr.mxu0 0.0
    %223 = vmatpush2.xpose.msra.mxu0 0.0
    %224 = vmatprep.subr.mxu0 0.0
    %225 = vmatpush2.xpose.msra.mxu0 0.0
    %226 = vmatprep.subr.mxu0 0.0
    %227 = vmatpush2.xpose.msra.mxu0 0.0
    %228 = vmatprep.subr.mxu0 0.0
    %229 = vmatpush2.xpose.msra.mxu0 0.0
    %230 = vmatprep.mubr.f32.mxu0 0.0
    %231 = vmatmul.mubr.f32.gmra.mxu0 %v158
    %v232 = vpop.f32.mrf.mxu0
    %v233 = vadd.f32 0.0, %v232
    %v234 = vpop.f32.mrf.mxu0
    %235 = vmatprep.mubr.f32.mxu0 0.0
    %236 = vmatmul.mubr.f32.gmra.mxu0 %v160
    %v237 = vpop.f32.mrf.mxu0
    %v238 = vadd.f32 0.0, %v237
    %v239 = vpop.f32.mrf.mxu0
    %240 = vdwg.mxu0
    %v241 = vmul.f32 %v233, 0.35355338
    %v242 = vmul.f32 %v238, 0.35355338
    %v243 = vadd.f32 %v241, %v56
    %v244 = vadd.f32 %v242, %v57
    %vm245 = vcmask 130048
    %v246 = vsel %vm245, %v243, -inf
    %247 = vmax.xlane.f32.xlu0 %v246
    %v248 = vpop.xlane.xlu0 %247
    %v249 = vsel %vm245, %v244, -inf
    %250 = vmax.xlane.f32.xlu0 %v249
    %v251 = vpop.xlane.xlu0 %250
    %v252 = vsub.f32 %v243, %v248
    %v253 = vsub.f32 %v244, %v251
    %v254 = vmul.f32 %v252, 1.442695
    %v255 = vpow.pop %v254
    %v256 = vmul.f32 %v253, 1.442695
    %v257 = vpow.pop %v256
    %v258 = vsel %vm245, %v255, 0.0
    %259 = vadd.xlane.f32.xlu0 %v258
    %v260 = vpop.xlane.xlu0 %259
    %v261 = vsel %vm245, %v257, 0.0
    %262 = vadd.xlane.f32.xlu0 %v261
    %v263 = vpop.xlane.xlu0 %262
    %v264 = vrcp.pop %v260
    %v265 = vrcp.pop %v263
    %v266 = vmul.f32 %v255, %v264
    %v267 = vmul.f32 %v257, %v265
    %268 = vrot.lane.b32.xlu0 %v143, 64
    %v269 = vpop.permute.xlu0 %268
    %270 = vrot.lane.b32.xlu0 %v148, 64
    %v271 = vpop.permute.xlu0 %270
    %v275 = vsel %vm245, %v266, 0
    %v278 = vsel %vm245, %v267, 0
    %280 = vmatprep.subr.mxu0 0.0
    %281 = vmatpush1.msra.mxu0 0.0
    %282 = vmatprep.subr.mxu0 0.0
    %283 = vmatpush1.msra.mxu0 0.0
    %284 = vmatprep.subr.mxu0 0.0
    %285 = vmatpush1.msra.mxu0 0.0
    %286 = vmatprep.subr.mxu0 0.0
    %287 = vmatpush1.msra.mxu0 0.0
    %288 = vmatprep.subr.mxu0 0.0
    %289 = vmatpush1.msra.mxu0 0.0
    %290 = vmatprep.subr.mxu0 0.0
    %291 = vmatpush1.msra.mxu0 0.0
    %292 = vmatprep.subr.mxu0 0.0
    %293 = vmatpush1.msra.mxu0 0.0
    %294 = vmatprep.subr.mxu0 0.0
    %295 = vmatpush1.msra.mxu0 0.0
    %296 = vmatprep.subr.mxu0 0.0
    %297 = vmatpush1.msra.mxu0 0.0
    %298 = vmatprep.subr.mxu0 0.0
    %299 = vmatpush1.msra.mxu0 0.0
    %300 = vmatprep.subr.mxu0 0.0
    %301 = vmatpush1.msra.mxu0 0.0
    %302 = vmatprep.subr.mxu0 0.0
    %303 = vmatpush1.msra.mxu0 0.0
    %304 = vmatprep.subr.mxu0 0.0
    %305 = vmatpush1.msra.mxu0 0.0
    %306 = vmatprep.subr.mxu0 0.0
    %307 = vmatpush1.msra.mxu0 0.0
    %308 = vmatprep.subr.mxu0 0.0
    %309 = vmatpush1.msra.mxu0 %v271
    %310 = vmatprep.subr.mxu0 0.0
    %311 = vmatpush1.msra.mxu0 %v269
    %312 = vmatprep.subr.mxu0 0.0
    %313 = vmatpush2.msra.mxu0 0.0
    %314 = vmatprep.subr.mxu0 0.0
    %315 = vmatpush2.msra.mxu0 0.0
    %316 = vmatprep.subr.mxu0 0.0
    %317 = vmatpush2.msra.mxu0 0.0
    %318 = vmatprep.subr.mxu0 0.0
    %319 = vmatpush2.msra.mxu0 0.0
    %320 = vmatprep.subr.mxu0 0.0
    %321 = vmatpush2.msra.mxu0 0.0
    %322 = vmatprep.subr.mxu0 0.0
    %323 = vmatpush2.msra.mxu0 0.0
    %324 = vmatprep.subr.mxu0 0.0
    %325 = vmatpush2.msra.mxu0 0.0
    %326 = vmatprep.subr.mxu0 0.0
    %327 = vmatpush2.msra.mxu0 0.0
    %328 = vmatprep.subr.mxu0 0.0
    %329 = vmatpush2.msra.mxu0 0.0
    %330 = vmatprep.subr.mxu0 0.0
    %331 = vmatpush2.msra.mxu0 0.0
    %332 = vmatprep.subr.mxu0 0.0
    %333 = vmatpush2.msra.mxu0 0.0
    %334 = vmatprep.subr.mxu0 0.0
    %335 = vmatpush2.msra.mxu0 0.0
    %336 = vmatprep.subr.mxu0 0.0
    %337 = vmatpush2.msra.mxu0 0.0
    %338 = vmatprep.subr.mxu0 0.0
    %339 = vmatpush2.msra.mxu0 0.0
    %340 = vmatprep.subr.mxu0 0.0
    %341 = vmatpush2.msra.mxu0 0.0
    %342 = vmatprep.subr.mxu0 0.0
    %343 = vmatpush2.msra.mxu0 0.0
    %344 = vmatprep.mubr.f32.mxu0 0.0
    %345 = vmatmul.mubr.f32.gmra.mxu0 %v275
    %v346 = vpop.f32.mrf.mxu0
    %v347 = vadd.f32 0.0, %v346
    %v348 = vpop.f32.mrf.mxu0
    %349 = vmatprep.mubr.f32.mxu0 0.0
    %350 = vmatmul.mubr.f32.gmra.mxu0 %v278
    %v351 = vpop.f32.mrf.mxu0
    %v352 = vadd.f32 0.0, %v351
    %v353 = vpop.f32.mrf.mxu0
    %354 = vdwg.mxu0
    %v355 = vld [vmem:[%s4] sm:$0xff]
    %356 = vrot.lane.b32.xlu0 %v143, 120
    %v357 = vpop.permute.xlu0 %356
    %358 = vrot.lane.b32.xlu0 %v148, 120
    %v359 = vpop.permute.xlu0 %358
    %360 = vrot.lane.b32.xlu0 %v143, 88
    %v361 = vpop.permute.xlu0 %360
    %362 = vrot.lane.b32.xlu0 %v148, 88
    %v363 = vpop.permute.xlu0 %362
    %v364 = vsel %vm157, %v357, 0
    %v366 = vsel %vm157, %v359, 0
    %v368 = vsel %vm157, %v361, 0
    %v370 = vsel %vm157, %v363, 0
    %372 = vmatprep.subr.mxu0 0.0
    %373 = vmatpush1.xpose.msra.mxu0 0.0
    %374 = vmatprep.subr.mxu0 0.0
    %375 = vmatpush1.xpose.msra.mxu0 0.0
    %376 = vmatprep.subr.mxu0 0.0
    %377 = vmatpush1.xpose.msra.mxu0 0.0
    %378 = vmatprep.subr.mxu0 0.0
    %379 = vmatpush1.xpose.msra.mxu0 0.0
    %380 = vmatprep.subr.mxu0 0.0
    %381 = vmatpush1.xpose.msra.mxu0 0.0
    %382 = vmatprep.subr.mxu0 0.0
    %383 = vmatpush1.xpose.msra.mxu0 0.0
    %384 = vmatprep.subr.mxu0 0.0
    %385 = vmatpush1.xpose.msra.mxu0 0.0
    %386 = vmatprep.subr.mxu0 0.0
    %387 = vmatpush1.xpose.msra.mxu0 0.0
    %388 = vmatprep.subr.mxu0 0.0
    %389 = vmatpush1.xpose.msra.mxu0 0.0
    %390 = vmatprep.subr.mxu0 0.0
    %391 = vmatpush1.xpose.msra.mxu0 0.0
    %392 = vmatprep.subr.mxu0 0.0
    %393 = vmatpush1.xpose.msra.mxu0 0.0
    %394 = vmatprep.subr.mxu0 0.0
    %395 = vmatpush1.xpose.msra.mxu0 0.0
    %396 = vmatprep.subr.mxu0 0.0
    %397 = vmatpush1.xpose.msra.mxu0 0.0
    %398 = vmatprep.subr.mxu0 0.0
    %399 = vmatpush1.xpose.msra.mxu0 0.0
    %400 = vmatprep.subr.mxu0 0.0
    %401 = vmatpush1.xpose.msra.mxu0 %v370
    %402 = vmatprep.subr.mxu0 0.0
    %403 = vmatpush1.xpose.msra.mxu0 %v368
    %404 = vmatprep.subr.mxu0 0.0
    %405 = vmatpush2.xpose.msra.mxu0 0.0
    %406 = vmatprep.subr.mxu0 0.0
    %407 = vmatpush2.xpose.msra.mxu0 0.0
    %408 = vmatprep.subr.mxu0 0.0
    %409 = vmatpush2.xpose.msra.mxu0 0.0
    %410 = vmatprep.subr.mxu0 0.0
    %411 = vmatpush2.xpose.msra.mxu0 0.0
    %412 = vmatprep.subr.mxu0 0.0
    %413 = vmatpush2.xpose.msra.mxu0 0.0
    %414 = vmatprep.subr.mxu0 0.0
    %415 = vmatpush2.xpose.msra.mxu0 0.0
    %416 = vmatprep.subr.mxu0 0.0
    %417 = vmatpush2.xpose.msra.mxu0 0.0
    %418 = vmatprep.subr.mxu0 0.0
    %419 = vmatpush2.xpose.msra.mxu0 0.0
    %420 = vmatprep.subr.mxu0 0.0
    %421 = vmatpush2.xpose.msra.mxu0 0.0
    %422 = vmatprep.subr.mxu0 0.0
    %423 = vmatpush2.xpose.msra.mxu0 0.0
    %424 = vmatprep.subr.mxu0 0.0
    %425 = vmatpush2.xpose.msra.mxu0 0.0
    %426 = vmatprep.subr.mxu0 0.0
    %427 = vmatpush2.xpose.msra.mxu0 0.0
    %428 = vmatprep.subr.mxu0 0.0
    %429 = vmatpush2.xpose.msra.mxu0 0.0
    %430 = vmatprep.subr.mxu0 0.0
    %431 = vmatpush2.xpose.msra.mxu0 0.0
    %432 = vmatprep.subr.mxu0 0.0
    %433 = vmatpush2.xpose.msra.mxu0 0.0
    %434 = vmatprep.subr.mxu0 0.0
    %435 = vmatpush2.xpose.msra.mxu0 0.0
    %436 = vmatprep.mubr.f32.mxu0 0.0
    %437 = vmatmul.mubr.f32.gmra.mxu0 %v364
    %v438 = vpop.f32.mrf.mxu0
    %v439 = vadd.f32 0.0, %v438
    %v440 = vpop.f32.mrf.mxu0
    %441 = vmatprep.mubr.f32.mxu0 0.0
    %442 = vmatmul.mubr.f32.gmra.mxu0 %v366
    %v443 = vpop.f32.mrf.mxu0
    %v444 = vadd.f32 0.0, %v443
    %v445 = vpop.f32.mrf.mxu0
    %446 = vdwg.mxu0
    %v447 = vmul.f32 %v439, 0.35355338
    %v448 = vmul.f32 %v444, 0.35355338
    %v449 = vadd.f32 %v447, %v56
    %v450 = vadd.f32 %v448, %v57
    %v451 = vsel %vm245, %v449, -inf
    %452 = vmax.xlane.f32.xlu0 %v451
    %v453 = vpop.xlane.xlu0 %452
    %v454 = vsel %vm245, %v450, -inf
    %455 = vmax.xlane.f32.xlu0 %v454
    %v456 = vpop.xlane.xlu0 %455
    %v457 = vsub.f32 %v449, %v453
    %v458 = vsub.f32 %v450, %v456
    %v459 = vmul.f32 %v457, 1.442695
    %v460 = vpow.pop %v459
    %v461 = vmul.f32 %v458, 1.442695
    %v462 = vpow.pop %v461
    %v463 = vsel %vm245, %v460, 0.0
    %464 = vadd.xlane.f32.xlu0 %v463
    %v465 = vpop.xlane.xlu0 %464
    %v466 = vsel %vm245, %v462, 0.0
    %467 = vadd.xlane.f32.xlu0 %v466
    %v468 = vpop.xlane.xlu0 %467
    %v469 = vrcp.pop %v465
    %v470 = vrcp.pop %v468
    %v471 = vmul.f32 %v460, %v469
    %v472 = vmul.f32 %v462, %v470
    %473 = vrot.lane.b32.xlu0 %v143, 56
    %v474 = vpop.permute.xlu0 %473
    %475 = vrot.lane.b32.xlu0 %v148, 56
    %v476 = vpop.permute.xlu0 %475
    %v480 = vsel %vm245, %v471, 0
    %v483 = vsel %vm245, %v472, 0
    %485 = vmatprep.subr.mxu0 0.0
    %486 = vmatpush1.msra.mxu0 0.0
    %487 = vmatprep.subr.mxu0 0.0
    %488 = vmatpush1.msra.mxu0 0.0
    %489 = vmatprep.subr.mxu0 0.0
    %490 = vmatpush1.msra.mxu0 0.0
    %491 = vmatprep.subr.mxu0 0.0
    %492 = vmatpush1.msra.mxu0 0.0
    %493 = vmatprep.subr.mxu0 0.0
    %494 = vmatpush1.msra.mxu0 0.0
    %495 = vmatprep.subr.mxu0 0.0
    %496 = vmatpush1.msra.mxu0 0.0
    %497 = vmatprep.subr.mxu0 0.0
    %498 = vmatpush1.msra.mxu0 0.0
    %499 = vmatprep.subr.mxu0 0.0
    %500 = vmatpush1.msra.mxu0 0.0
    %501 = vmatprep.subr.mxu0 0.0
    %502 = vmatpush1.msra.mxu0 0.0
    %503 = vmatprep.subr.mxu0 0.0
    %504 = vmatpush1.msra.mxu0 0.0
    %505 = vmatprep.subr.mxu0 0.0
    %506 = vmatpush1.msra.mxu0 0.0
    %507 = vmatprep.subr.mxu0 0.0
    %508 = vmatpush1.msra.mxu0 0.0
    %509 = vmatprep.subr.mxu0 0.0
    %510 = vmatpush1.msra.mxu0 0.0
    %511 = vmatprep.subr.mxu0 0.0
    %512 = vmatpush1.msra.mxu0 0.0
    %513 = vmatprep.subr.mxu0 0.0
    %514 = vmatpush1.msra.mxu0 %v476
    %515 = vmatprep.subr.mxu0 0.0
    %516 = vmatpush1.msra.mxu0 %v474
    %517 = vmatprep.subr.mxu0 0.0
    %518 = vmatpush2.msra.mxu0 0.0
    %519 = vmatprep.subr.mxu0 0.0
    %520 = vmatpush2.msra.mxu0 0.0
    %521 = vmatprep.subr.mxu0 0.0
    %522 = vmatpush2.msra.mxu0 0.0
    %523 = vmatprep.subr.mxu0 0.0
    %524 = vmatpush2.msra.mxu0 0.0
    %525 = vmatprep.subr.mxu0 0.0
    %526 = vmatpush2.msra.mxu0 0.0
    %527 = vmatprep.subr.mxu0 0.0
    %528 = vmatpush2.msra.mxu0 0.0
    %529 = vmatprep.subr.mxu0 0.0
    %530 = vmatpush2.msra.mxu0 0.0
    %531 = vmatprep.subr.mxu0 0.0
    %532 = vmatpush2.msra.mxu0 0.0
    %533 = vmatprep.subr.mxu0 0.0
    %534 = vmatpush2.msra.mxu0 0.0
    %535 = vmatprep.subr.mxu0 0.0
    %536 = vmatpush2.msra.mxu0 0.0
    %537 = vmatprep.subr.mxu0 0.0
    %538 = vmatpush2.msra.mxu0 0.0
    %539 = vmatprep.subr.mxu0 0.0
    %540 = vmatpush2.msra.mxu0 0.0
    %541 = vmatprep.subr.mxu0 0.0
    %542 = vmatpush2.msra.mxu0 0.0
    %543 = vmatprep.subr.mxu0 0.0
    %544 = vmatpush2.msra.mxu0 0.0
    %545 = vmatprep.subr.mxu0 0.0
    %546 = vmatpush2.msra.mxu0 0.0
    %547 = vmatprep.subr.mxu0 0.0
    %548 = vmatpush2.msra.mxu0 0.0
    %549 = vmatprep.mubr.f32.mxu0 0.0
    %550 = vmatmul.mubr.f32.gmra.mxu0 %v480
    %v551 = vpop.f32.mrf.mxu0
    %v552 = vadd.f32 0.0, %v551
    %v553 = vpop.f32.mrf.mxu0
    %554 = vmatprep.mubr.f32.mxu0 0.0
    %555 = vmatmul.mubr.f32.gmra.mxu0 %v483
    %v556 = vpop.f32.mrf.mxu0
    %v557 = vadd.f32 0.0, %v556
    %v558 = vpop.f32.mrf.mxu0
    %559 = vdwg.mxu0
    %s560 = scalar_lea.vmem %s4, 8
    %v561 = vld [vmem:[%s560] sm:$0xff]
    %v563 = vsel %vm157, %v552, 0
    %v566 = vsel %vm157, %v557, 0
    %568 = vmatprep.subr.mxu0 0.0
    %569 = vmatpush1.msra.mxu0 0.0
    %570 = vmatprep.subr.mxu0 0.0
    %571 = vmatpush1.msra.mxu0 0.0
    %572 = vmatprep.subr.mxu0 0.0
    %573 = vmatpush1.msra.mxu0 0.0
    %574 = vmatprep.subr.mxu0 0.0
    %575 = vmatpush1.msra.mxu0 0.0
    %576 = vmatprep.subr.mxu0 0.0
    %577 = vmatpush1.msra.mxu0 0.0
    %578 = vmatprep.subr.mxu0 0.0
    %579 = vmatpush1.msra.mxu0 0.0
    %580 = vmatprep.subr.mxu0 0.0
    %581 = vmatpush1.msra.mxu0 0.0
    %582 = vmatprep.subr.mxu0 0.0
    %583 = vmatpush1.msra.mxu0 0.0
    %584 = vmatprep.subr.mxu0 0.0
    %585 = vmatpush1.msra.mxu0 0.0
    %586 = vmatprep.subr.mxu0 0.0
    %587 = vmatpush1.msra.mxu0 0.0
    %588 = vmatprep.subr.mxu0 0.0
    %589 = vmatpush1.msra.mxu0 0.0
    %590 = vmatprep.subr.mxu0 0.0
    %591 = vmatpush1.msra.mxu0 0.0
    %592 = vmatprep.subr.mxu0 0.0
    %593 = vmatpush1.msra.mxu0 0.0
    %594 = vmatprep.subr.mxu0 0.0
    %595 = vmatpush1.msra.mxu0 0.0
    %596 = vmatprep.subr.mxu0 0.0
    %597 = vmatpush1.msra.mxu0 0.0
    %598 = vmatprep.subr.mxu0 0.0
    %599 = vmatpush1.msra.mxu0 %v561
    %600 = vmatprep.subr.mxu0 0.0
    %601 = vmatpush2.msra.mxu0 0.0
    %602 = vmatprep.subr.mxu0 0.0
    %603 = vmatpush2.msra.mxu0 0.0
    %604 = vmatprep.subr.mxu0 0.0
    %605 = vmatpush2.msra.mxu0 0.0
    %606 = vmatprep.subr.mxu0 0.0
    %607 = vmatpush2.msra.mxu0 0.0
    %608 = vmatprep.subr.mxu0 0.0
    %609 = vmatpush2.msra.mxu0 0.0
    %610 = vmatprep.subr.mxu0 0.0
    %611 = vmatpush2.msra.mxu0 0.0
    %612 = vmatprep.subr.mxu0 0.0
    %613 = vmatpush2.msra.mxu0 0.0
    %614 = vmatprep.subr.mxu0 0.0
    %615 = vmatpush2.msra.mxu0 0.0
    %616 = vmatprep.subr.mxu0 0.0
    %617 = vmatpush2.msra.mxu0 0.0
    %618 = vmatprep.subr.mxu0 0.0
    %619 = vmatpush2.msra.mxu0 0.0
    %620 = vmatprep.subr.mxu0 0.0
    %621 = vmatpush2.msra.mxu0 0.0
    %622 = vmatprep.subr.mxu0 0.0
    %623 = vmatpush2.msra.mxu0 0.0
    %624 = vmatprep.subr.mxu0 0.0
    %625 = vmatpush2.msra.mxu0 0.0
    %626 = vmatprep.subr.mxu0 0.0
    %627 = vmatpush2.msra.mxu0 0.0
    %628 = vmatprep.subr.mxu0 0.0
    %629 = vmatpush2.msra.mxu0 0.0
    %630 = vmatprep.subr.mxu0 0.0
    %631 = vmatpush2.msra.mxu0 0.0
    %632 = vmatprep.mubr.f32.mxu0 0.0
    %633 = vmatmul.mubr.f32.gmra.mxu0 %v563
    %v634 = vpop.f32.mrf.mxu0
    %v635 = vadd.f32 0.0, %v634
    %v636 = vpop.f32.mrf.mxu0
    %637 = vmatprep.mubr.f32.mxu0 0.0
    %638 = vmatmul.mubr.f32.gmra.mxu0 %v566
    %v639 = vpop.f32.mrf.mxu0
    %v640 = vadd.f32 0.0, %v639
    %v641 = vpop.f32.mrf.mxu0
    %642 = vdwg.mxu0
    %v644 = vsel %vm157, %v347, 0
    %v647 = vsel %vm157, %v352, 0
    %649 = vmatprep.subr.mxu0 0.0
    %650 = vmatpush1.msra.mxu0 0.0
    %651 = vmatprep.subr.mxu0 0.0
    %652 = vmatpush1.msra.mxu0 0.0
    %653 = vmatprep.subr.mxu0 0.0
    %654 = vmatpush1.msra.mxu0 0.0
    %655 = vmatprep.subr.mxu0 0.0
    %656 = vmatpush1.msra.mxu0 0.0
    %657 = vmatprep.subr.mxu0 0.0
    %658 = vmatpush1.msra.mxu0 0.0
    %659 = vmatprep.subr.mxu0 0.0
    %660 = vmatpush1.msra.mxu0 0.0
    %661 = vmatprep.subr.mxu0 0.0
    %662 = vmatpush1.msra.mxu0 0.0
    %663 = vmatprep.subr.mxu0 0.0
    %664 = vmatpush1.msra.mxu0 0.0
    %665 = vmatprep.subr.mxu0 0.0
    %666 = vmatpush1.msra.mxu0 0.0
    %667 = vmatprep.subr.mxu0 0.0
    %668 = vmatpush1.msra.mxu0 0.0
    %669 = vmatprep.subr.mxu0 0.0
    %670 = vmatpush1.msra.mxu0 0.0
    %671 = vmatprep.subr.mxu0 0.0
    %672 = vmatpush1.msra.mxu0 0.0
    %673 = vmatprep.subr.mxu0 0.0
    %674 = vmatpush1.msra.mxu0 0.0
    %675 = vmatprep.subr.mxu0 0.0
    %676 = vmatpush1.msra.mxu0 0.0
    %677 = vmatprep.subr.mxu0 0.0
    %678 = vmatpush1.msra.mxu0 0.0
    %679 = vmatprep.subr.mxu0 0.0
    %680 = vmatpush1.msra.mxu0 %v355
    %681 = vmatprep.subr.mxu0 0.0
    %682 = vmatpush2.msra.mxu0 0.0
    %683 = vmatprep.subr.mxu0 0.0
    %684 = vmatpush2.msra.mxu0 0.0
    %685 = vmatprep.subr.mxu0 0.0
    %686 = vmatpush2.msra.mxu0 0.0
    %687 = vmatprep.subr.mxu0 0.0
    %688 = vmatpush2.msra.mxu0 0.0
    %689 = vmatprep.subr.mxu0 0.0
    %690 = vmatpush2.msra.mxu0 0.0
    %691 = vmatprep.subr.mxu0 0.0
    %692 = vmatpush2.msra.mxu0 0.0
    %693 = vmatprep.subr.mxu0 0.0
    %694 = vmatpush2.msra.mxu0 0.0
    %695 = vmatprep.subr.mxu0 0.0
    %696 = vmatpush2.msra.mxu0 0.0
    %697 = vmatprep.subr.mxu0 0.0
    %698 = vmatpush2.msra.mxu0 0.0
    %699 = vmatprep.subr.mxu0 0.0
    %700 = vmatpush2.msra.mxu0 0.0
    %701 = vmatprep.subr.mxu0 0.0
    %702 = vmatpush2.msra.mxu0 0.0
    %703 = vmatprep.subr.mxu0 0.0
    %704 = vmatpush2.msra.mxu0 0.0
    %705 = vmatprep.subr.mxu0 0.0
    %706 = vmatpush2.msra.mxu0 0.0
    %707 = vmatprep.subr.mxu0 0.0
    %708 = vmatpush2.msra.mxu0 0.0
    %709 = vmatprep.subr.mxu0 0.0
    %710 = vmatpush2.msra.mxu0 0.0
    %711 = vmatprep.subr.mxu0 0.0
    %712 = vmatpush2.msra.mxu0 0.0
    %713 = vmatprep.mubr.f32.mxu0 0.0
    %714 = vmatmul.mubr.f32.gmra.mxu0 %v644
    %v715 = vpop.f32.mrf.mxu0
    %v716 = vadd.f32 %v635, %v715
    %v717 = vpop.f32.mrf.mxu0
    %718 = vmatprep.mubr.f32.mxu0 0.0
    %719 = vmatmul.mubr.f32.gmra.mxu0 %v647
    %v720 = vpop.f32.mrf.mxu0
    %v721 = vadd.f32 %v640, %v720
    %v722 = vpop.f32.mrf.mxu0
    %723 = vdwg.mxu0
    %724 = vrot.lane.b32.xlu0 %v143, 112
    %v725 = vpop.permute.xlu0 %724
    %726 = vrot.lane.b32.xlu0 %v148, 112
    %v727 = vpop.permute.xlu0 %726
    %728 = vrot.lane.b32.xlu0 %v143, 80
    %v729 = vpop.permute.xlu0 %728
    %730 = vrot.lane.b32.xlu0 %v148, 80
    %v731 = vpop.permute.xlu0 %730
    %v732 = vsel %vm157, %v725, 0
    %v734 = vsel %vm157, %v727, 0
    %v736 = vsel %vm157, %v729, 0
    %v738 = vsel %vm157, %v731, 0
    %740 = vmatprep.subr.mxu0 0.0
    %741 = vmatpush1.xpose.msra.mxu0 0.0
    %742 = vmatprep.subr.mxu0 0.0
    %743 = vmatpush1.xpose.msra.mxu0 0.0
    %744 = vmatprep.subr.mxu0 0.0
    %745 = vmatpush1.xpose.msra.mxu0 0.0
    %746 = vmatprep.subr.mxu0 0.0
    %747 = vmatpush1.xpose.msra.mxu0 0.0
    %748 = vmatprep.subr.mxu0 0.0
    %749 = vmatpush1.xpose.msra.mxu0 0.0
    %750 = vmatprep.subr.mxu0 0.0
    %751 = vmatpush1.xpose.msra.mxu0 0.0
    %752 = vmatprep.subr.mxu0 0.0
    %753 = vmatpush1.xpose.msra.mxu0 0.0
    %754 = vmatprep.subr.mxu0 0.0
    %755 = vmatpush1.xpose.msra.mxu0 0.0
    %756 = vmatprep.subr.mxu0 0.0
    %757 = vmatpush1.xpose.msra.mxu0 0.0
    %758 = vmatprep.subr.mxu0 0.0
    %759 = vmatpush1.xpose.msra.mxu0 0.0
    %760 = vmatprep.subr.mxu0 0.0
    %761 = vmatpush1.xpose.msra.mxu0 0.0
    %762 = vmatprep.subr.mxu0 0.0
    %763 = vmatpush1.xpose.msra.mxu0 0.0
    %764 = vmatprep.subr.mxu0 0.0
    %765 = vmatpush1.xpose.msra.mxu0 0.0
    %766 = vmatprep.subr.mxu0 0.0
    %767 = vmatpush1.xpose.msra.mxu0 0.0
    %768 = vmatprep.subr.mxu0 0.0
    %769 = vmatpush1.xpose.msra.mxu0 %v738
    %770 = vmatprep.subr.mxu0 0.0
    %771 = vmatpush1.xpose.msra.mxu0 %v736
    %772 = vmatprep.subr.mxu0 0.0
    %773 = vmatpush2.xpose.msra.mxu0 0.0
    %774 = vmatprep.subr.mxu0 0.0
    %775 = vmatpush2.xpose.msra.mxu0 0.0
    %776 = vmatprep.subr.mxu0 0.0
    %777 = vmatpush2.xpose.msra.mxu0 0.0
    %778 = vmatprep.subr.mxu0 0.0
    %779 = vmatpush2.xpose.msra.mxu0 0.0
    %780 = vmatprep.subr.mxu0 0.0
    %781 = vmatpush2.xpose.msra.mxu0 0.0
    %782 = vmatprep.subr.mxu0 0.0
    %783 = vmatpush2.xpose.msra.mxu0 0.0
    %784 = vmatprep.subr.mxu0 0.0
    %785 = vmatpush2.xpose.msra.mxu0 0.0
    %786 = vmatprep.subr.mxu0 0.0
    %787 = vmatpush2.xpose.msra.mxu0 0.0
    %788 = vmatprep.subr.mxu0 0.0
    %789 = vmatpush2.xpose.msra.mxu0 0.0
    %790 = vmatprep.subr.mxu0 0.0
    %791 = vmatpush2.xpose.msra.mxu0 0.0
    %792 = vmatprep.subr.mxu0 0.0
    %793 = vmatpush2.xpose.msra.mxu0 0.0
    %794 = vmatprep.subr.mxu0 0.0
    %795 = vmatpush2.xpose.msra.mxu0 0.0
    %796 = vmatprep.subr.mxu0 0.0
    %797 = vmatpush2.xpose.msra.mxu0 0.0
    %798 = vmatprep.subr.mxu0 0.0
    %799 = vmatpush2.xpose.msra.mxu0 0.0
    %800 = vmatprep.subr.mxu0 0.0
    %801 = vmatpush2.xpose.msra.mxu0 0.0
    %802 = vmatprep.subr.mxu0 0.0
    %803 = vmatpush2.xpose.msra.mxu0 0.0
    %804 = vmatprep.mubr.f32.mxu0 0.0
    %805 = vmatmul.mubr.f32.gmra.mxu0 %v732
    %v806 = vpop.f32.mrf.mxu0
    %v807 = vadd.f32 0.0, %v806
    %v808 = vpop.f32.mrf.mxu0
    %809 = vmatprep.mubr.f32.mxu0 0.0
    %810 = vmatmul.mubr.f32.gmra.mxu0 %v734
    %v811 = vpop.f32.mrf.mxu0
    %v812 = vadd.f32 0.0, %v811
    %v813 = vpop.f32.mrf.mxu0
    %814 = vdwg.mxu0
    %v815 = vmul.f32 %v807, 0.35355338
    %v816 = vmul.f32 %v812, 0.35355338
    %v817 = vadd.f32 %v815, %v56
    %v818 = vadd.f32 %v816, %v57
    %v819 = vsel %vm245, %v817, -inf
    %820 = vmax.xlane.f32.xlu0 %v819
    %v821 = vpop.xlane.xlu0 %820
    %v822 = vsel %vm245, %v818, -inf
    %823 = vmax.xlane.f32.xlu0 %v822
    %v824 = vpop.xlane.xlu0 %823
    %v825 = vsub.f32 %v817, %v821
    %v826 = vsub.f32 %v818, %v824
    %v827 = vmul.f32 %v825, 1.442695
    %v828 = vpow.pop %v827
    %v829 = vmul.f32 %v826, 1.442695
    %v830 = vpow.pop %v829
    %v831 = vsel %vm245, %v828, 0.0
    %832 = vadd.xlane.f32.xlu0 %v831
    %v833 = vpop.xlane.xlu0 %832
    %v834 = vsel %vm245, %v830, 0.0
    %835 = vadd.xlane.f32.xlu0 %v834
    %v836 = vpop.xlane.xlu0 %835
    %v837 = vrcp.pop %v833
    %v838 = vrcp.pop %v836
    %v839 = vmul.f32 %v828, %v837
    %v840 = vmul.f32 %v830, %v838
    %841 = vrot.lane.b32.xlu0 %v143, 48
    %v842 = vpop.permute.xlu0 %841
    %843 = vrot.lane.b32.xlu0 %v148, 48
    %v844 = vpop.permute.xlu0 %843
    %v848 = vsel %vm245, %v839, 0
    %v851 = vsel %vm245, %v840, 0
    %853 = vmatprep.subr.mxu0 0.0
    %854 = vmatpush1.msra.mxu0 0.0
    %855 = vmatprep.subr.mxu0 0.0
    %856 = vmatpush1.msra.mxu0 0.0
    %857 = vmatprep.subr.mxu0 0.0
    %858 = vmatpush1.msra.mxu0 0.0
    %859 = vmatprep.subr.mxu0 0.0
    %860 = vmatpush1.msra.mxu0 0.0
    %861 = vmatprep.subr.mxu0 0.0
    %862 = vmatpush1.msra.mxu0 0.0
    %863 = vmatprep.subr.mxu0 0.0
    %864 = vmatpush1.msra.mxu0 0.0
    %865 = vmatprep.subr.mxu0 0.0
    %866 = vmatpush1.msra.mxu0 0.0
    %867 = vmatprep.subr.mxu0 0.0
    %868 = vmatpush1.msra.mxu0 0.0
    %869 = vmatprep.subr.mxu0 0.0
    %870 = vmatpush1.msra.mxu0 0.0
    %871 = vmatprep.subr.mxu0 0.0
    %872 = vmatpush1.msra.mxu0 0.0
    %873 = vmatprep.subr.mxu0 0.0
    %874 = vmatpush1.msra.mxu0 0.0
    %875 = vmatprep.subr.mxu0 0.0
    %876 = vmatpush1.msra.mxu0 0.0
    %877 = vmatprep.subr.mxu0 0.0
    %878 = vmatpush1.msra.mxu0 0.0
    %879 = vmatprep.subr.mxu0 0.0
    %880 = vmatpush1.msra.mxu0 0.0
    %881 = vmatprep.subr.mxu0 0.0
    %882 = vmatpush1.msra.mxu0 %v844
    %883 = vmatprep.subr.mxu0 0.0
    %884 = vmatpush1.msra.mxu0 %v842
    %885 = vmatprep.subr.mxu0 0.0
    %886 = vmatpush2.msra.mxu0 0.0
    %887 = vmatprep.subr.mxu0 0.0
    %888 = vmatpush2.msra.mxu0 0.0
    %889 = vmatprep.subr.mxu0 0.0
    %890 = vmatpush2.msra.mxu0 0.0
    %891 = vmatprep.subr.mxu0 0.0
    %892 = vmatpush2.msra.mxu0 0.0
    %893 = vmatprep.subr.mxu0 0.0
    %894 = vmatpush2.msra.mxu0 0.0
    %895 = vmatprep.subr.mxu0 0.0
    %896 = vmatpush2.msra.mxu0 0.0
    %897 = vmatprep.subr.mxu0 0.0
    %898 = vmatpush2.msra.mxu0 0.0
    %899 = vmatprep.subr.mxu0 0.0
    %900 = vmatpush2.msra.mxu0 0.0
    %901 = vmatprep.subr.mxu0 0.0
    %902 = vmatpush2.msra.mxu0 0.0
    %903 = vmatprep.subr.mxu0 0.0
    %904 = vmatpush2.msra.mxu0 0.0
    %905 = vmatprep.subr.mxu0 0.0
    %906 = vmatpush2.msra.mxu0 0.0
    %907 = vmatprep.subr.mxu0 0.0
    %908 = vmatpush2.msra.mxu0 0.0
    %909 = vmatprep.subr.mxu0 0.0
    %910 = vmatpush2.msra.mxu0 0.0
    %911 = vmatprep.subr.mxu0 0.0
    %912 = vmatpush2.msra.mxu0 0.0
    %913 = vmatprep.subr.mxu0 0.0
    %914 = vmatpush2.msra.mxu0 0.0
    %915 = vmatprep.subr.mxu0 0.0
    %916 = vmatpush2.msra.mxu0 0.0
    %917 = vmatprep.mubr.f32.mxu0 0.0
    %918 = vmatmul.mubr.f32.gmra.mxu0 %v848
    %v919 = vpop.f32.mrf.mxu0
    %v920 = vadd.f32 0.0, %v919
    %v921 = vpop.f32.mrf.mxu0
    %922 = vmatprep.mubr.f32.mxu0 0.0
    %923 = vmatmul.mubr.f32.gmra.mxu0 %v851
    %v924 = vpop.f32.mrf.mxu0
    %v925 = vadd.f32 0.0, %v924
    %v926 = vpop.f32.mrf.mxu0
    %927 = vdwg.mxu0
    %s928 = scalar_lea.vmem %s4, 16
    %v929 = vld [vmem:[%s928] sm:$0xff]
    %v931 = vsel %vm157, %v920, 0
    %v934 = vsel %vm157, %v925, 0
    %936 = vmatprep.subr.mxu0 0.0
    %937 = vmatpush1.msra.mxu0 0.0
    %938 = vmatprep.subr.mxu0 0.0
    %939 = vmatpush1.msra.mxu0 0.0
    %940 = vmatprep.subr.mxu0 0.0
    %941 = vmatpush1.msra.mxu0 0.0
    %942 = vmatprep.subr.mxu0 0.0
    %943 = vmatpush1.msra.mxu0 0.0
    %944 = vmatprep.subr.mxu0 0.0
    %945 = vmatpush1.msra.mxu0 0.0
    %946 = vmatprep.subr.mxu0 0.0
    %947 = vmatpush1.msra.mxu0 0.0
    %948 = vmatprep.subr.mxu0 0.0
    %949 = vmatpush1.msra.mxu0 0.0
    %950 = vmatprep.subr.mxu0 0.0
    %951 = vmatpush1.msra.mxu0 0.0
    %952 = vmatprep.subr.mxu0 0.0
    %953 = vmatpush1.msra.mxu0 0.0
    %954 = vmatprep.subr.mxu0 0.0
    %955 = vmatpush1.msra.mxu0 0.0
    %956 = vmatprep.subr.mxu0 0.0
    %957 = vmatpush1.msra.mxu0 0.0
    %958 = vmatprep.subr.mxu0 0.0
    %959 = vmatpush1.msra.mxu0 0.0
    %960 = vmatprep.subr.mxu0 0.0
    %961 = vmatpush1.msra.mxu0 0.0
    %962 = vmatprep.subr.mxu0 0.0
    %963 = vmatpush1.msra.mxu0 0.0
    %964 = vmatprep.subr.mxu0 0.0
    %965 = vmatpush1.msra.mxu0 0.0
    %966 = vmatprep.subr.mxu0 0.0
    %967 = vmatpush1.msra.mxu0 %v929
    %968 = vmatprep.subr.mxu0 0.0
    %969 = vmatpush2.msra.mxu0 0.0
    %970 = vmatprep.subr.mxu0 0.0
    %971 = vmatpush2.msra.mxu0 0.0
    %972 = vmatprep.subr.mxu0 0.0
    %973 = vmatpush2.msra.mxu0 0.0
    %974 = vmatprep.subr.mxu0 0.0
    %975 = vmatpush2.msra.mxu0 0.0
    %976 = vmatprep.subr.mxu0 0.0
    %977 = vmatpush2.msra.mxu0 0.0
    %978 = vmatprep.subr.mxu0 0.0
    %979 = vmatpush2.msra.mxu0 0.0
    %980 = vmatprep.subr.mxu0 0.0
    %981 = vmatpush2.msra.mxu0 0.0
    %982 = vmatprep.subr.mxu0 0.0
    %983 = vmatpush2.msra.mxu0 0.0
    %984 = vmatprep.subr.mxu0 0.0
    %985 = vmatpush2.msra.mxu0 0.0
    %986 = vmatprep.subr.mxu0 0.0
    %987 = vmatpush2.msra.mxu0 0.0
    %988 = vmatprep.subr.mxu0 0.0
    %989 = vmatpush2.msra.mxu0 0.0
    %990 = vmatprep.subr.mxu0 0.0
    %991 = vmatpush2.msra.mxu0 0.0
    %992 = vmatprep.subr.mxu0 0.0
    %993 = vmatpush2.msra.mxu0 0.0
    %994 = vmatprep.subr.mxu0 0.0
    %995 = vmatpush2.msra.mxu0 0.0
    %996 = vmatprep.subr.mxu0 0.0
    %997 = vmatpush2.msra.mxu0 0.0
    %998 = vmatprep.subr.mxu0 0.0
    %999 = vmatpush2.msra.mxu0 0.0
    %1000 = vmatprep.mubr.f32.mxu0 0.0
    %1001 = vmatmul.mubr.f32.gmra.mxu0 %v931
    %v1002 = vpop.f32.mrf.mxu0
    %v1003 = vadd.f32 0.0, %v1002
    %v1004 = vpop.f32.mrf.mxu0
    %1005 = vmatprep.mubr.f32.mxu0 0.0
    %1006 = vmatmul.mubr.f32.gmra.mxu0 %v934
    %v1007 = vpop.f32.mrf.mxu0
    %v1008 = vadd.f32 0.0, %v1007
    %v1009 = vpop.f32.mrf.mxu0
    %1010 = vdwg.mxu0
    %v1011 = vadd.f32 %v716, %v1003
    %v1012 = vadd.f32 %v721, %v1008
    %1013 = vrot.lane.b32.xlu0 %v143, 104
    %v1014 = vpop.permute.xlu0 %1013
    %1015 = vrot.lane.b32.xlu0 %v148, 104
    %v1016 = vpop.permute.xlu0 %1015
    %1017 = vrot.lane.b32.xlu0 %v143, 72
    %v1018 = vpop.permute.xlu0 %1017
    %1019 = vrot.lane.b32.xlu0 %v148, 72
    %v1020 = vpop.permute.xlu0 %1019
    %v1021 = vsel %vm157, %v1014, 0
    %v1023 = vsel %vm157, %v1016, 0
    %v1025 = vsel %vm157, %v1018, 0
    %v1027 = vsel %vm157, %v1020, 0
    %1029 = vmatprep.subr.mxu0 0.0
    %1030 = vmatpush1.xpose.msra.mxu0 0.0
    %1031 = vmatprep.subr.mxu0 0.0
    %1032 = vmatpush1.xpose.msra.mxu0 0.0
    %1033 = vmatprep.subr.mxu0 0.0
    %1034 = vmatpush1.xpose.msra.mxu0 0.0
    %1035 = vmatprep.subr.mxu0 0.0
    %1036 = vmatpush1.xpose.msra.mxu0 0.0
    %1037 = vmatprep.subr.mxu0 0.0
    %1038 = vmatpush1.xpose.msra.mxu0 0.0
    %1039 = vmatprep.subr.mxu0 0.0
    %1040 = vmatpush1.xpose.msra.mxu0 0.0
    %1041 = vmatprep.subr.mxu0 0.0
    %1042 = vmatpush1.xpose.msra.mxu0 0.0
    %1043 = vmatprep.subr.mxu0 0.0
    %1044 = vmatpush1.xpose.msra.mxu0 0.0
    %1045 = vmatprep.subr.mxu0 0.0
    %1046 = vmatpush1.xpose.msra.mxu0 0.0
    %1047 = vmatprep.subr.mxu0 0.0
    %1048 = vmatpush1.xpose.msra.mxu0 0.0
    %1049 = vmatprep.subr.mxu0 0.0
    %1050 = vmatpush1.xpose.msra.mxu0 0.0
    %1051 = vmatprep.subr.mxu0 0.0
    %1052 = vmatpush1.xpose.msra.mxu0 0.0
    %1053 = vmatprep.subr.mxu0 0.0
    %1054 = vmatpush1.xpose.msra.mxu0 0.0
    %1055 = vmatprep.subr.mxu0 0.0
    %1056 = vmatpush1.xpose.msra.mxu0 0.0
    %1057 = vmatprep.subr.mxu0 0.0
    %1058 = vmatpush1.xpose.msra.mxu0 %v1027
    %1059 = vmatprep.subr.mxu0 0.0
    %1060 = vmatpush1.xpose.msra.mxu0 %v1025
    %1061 = vmatprep.subr.mxu0 0.0
    %1062 = vmatpush2.xpose.msra.mxu0 0.0
    %1063 = vmatprep.subr.mxu0 0.0
    %1064 = vmatpush2.xpose.msra.mxu0 0.0
    %1065 = vmatprep.subr.mxu0 0.0
    %1066 = vmatpush2.xpose.msra.mxu0 0.0
    %1067 = vmatprep.subr.mxu0 0.0
    %1068 = vmatpush2.xpose.msra.mxu0 0.0
    %1069 = vmatprep.subr.mxu0 0.0
    %1070 = vmatpush2.xpose.msra.mxu0 0.0
    %1071 = vmatprep.subr.mxu0 0.0
    %1072 = vmatpush2.xpose.msra.mxu0 0.0
    %1073 = vmatprep.subr.mxu0 0.0
    %1074 = vmatpush2.xpose.msra.mxu0 0.0
    %1075 = vmatprep.subr.mxu0 0.0
    %1076 = vmatpush2.xpose.msra.mxu0 0.0
    %1077 = vmatprep.subr.mxu0 0.0
    %1078 = vmatpush2.xpose.msra.mxu0 0.0
    %1079 = vmatprep.subr.mxu0 0.0
    %1080 = vmatpush2.xpose.msra.mxu0 0.0
    %1081 = vmatprep.subr.mxu0 0.0
    %1082 = vmatpush2.xpose.msra.mxu0 0.0
    %1083 = vmatprep.subr.mxu0 0.0
    %1084 = vmatpush2.xpose.msra.mxu0 0.0
    %1085 = vmatprep.subr.mxu0 0.0
    %1086 = vmatpush2.xpose.msra.mxu0 0.0
    %1087 = vmatprep.subr.mxu0 0.0
    %1088 = vmatpush2.xpose.msra.mxu0 0.0
    %1089 = vmatprep.subr.mxu0 0.0
    %1090 = vmatpush2.xpose.msra.mxu0 0.0
    %1091 = vmatprep.subr.mxu0 0.0
    %1092 = vmatpush2.xpose.msra.mxu0 0.0
    %1093 = vmatprep.mubr.f32.mxu0 0.0
    %1094 = vmatmul.mubr.f32.gmra.mxu0 %v1021
    %v1095 = vpop.f32.mrf.mxu0
    %v1096 = vadd.f32 0.0, %v1095
    %v1097 = vpop.f32.mrf.mxu0
    %1098 = vmatprep.mubr.f32.mxu0 0.0
    %1099 = vmatmul.mubr.f32.gmra.mxu0 %v1023
    %v1100 = vpop.f32.mrf.mxu0
    %v1101 = vadd.f32 0.0, %v1100
    %v1102 = vpop.f32.mrf.mxu0
    %1103 = vdwg.mxu0
    %v1104 = vmul.f32 %v1096, 0.35355338
    %v1105 = vmul.f32 %v1101, 0.35355338
    %v1106 = vadd.f32 %v1104, %v56
    %v1107 = vadd.f32 %v1105, %v57
    %v1108 = vsel %vm245, %v1106, -inf
    %1109 = vmax.xlane.f32.xlu0 %v1108
    %v1110 = vpop.xlane.xlu0 %1109
    %v1111 = vsel %vm245, %v1107, -inf
    %1112 = vmax.xlane.f32.xlu0 %v1111
    %v1113 = vpop.xlane.xlu0 %1112
    %v1114 = vsub.f32 %v1106, %v1110
    %v1115 = vsub.f32 %v1107, %v1113
    %v1116 = vmul.f32 %v1114, 1.442695
    %v1117 = vpow.pop %v1116
    %v1118 = vmul.f32 %v1115, 1.442695
    %v1119 = vpow.pop %v1118
    %v1120 = vsel %vm245, %v1117, 0.0
    %1121 = vadd.xlane.f32.xlu0 %v1120
    %v1122 = vpop.xlane.xlu0 %1121
    %v1123 = vsel %vm245, %v1119, 0.0
    %1124 = vadd.xlane.f32.xlu0 %v1123
    %v1125 = vpop.xlane.xlu0 %1124
    %v1126 = vrcp.pop %v1122
    %v1127 = vrcp.pop %v1125
    %v1128 = vmul.f32 %v1117, %v1126
    %v1129 = vmul.f32 %v1119, %v1127
    %1130 = vrot.lane.b32.xlu0 %v143, 40
    %v1131 = vpop.permute.xlu0 %1130
    %1132 = vrot.lane.b32.xlu0 %v148, 40
    %v1133 = vpop.permute.xlu0 %1132
    %v1137 = vsel %vm245, %v1128, 0
    %v1140 = vsel %vm245, %v1129, 0
    %1142 = vmatprep.subr.mxu0 0.0
    %1143 = vmatpush1.msra.mxu0 0.0
    %1144 = vmatprep.subr.mxu0 0.0
    %1145 = vmatpush1.msra.mxu0 0.0
    %1146 = vmatprep.subr.mxu0 0.0
    %1147 = vmatpush1.msra.mxu0 0.0
    %1148 = vmatprep.subr.mxu0 0.0
    %1149 = vmatpush1.msra.mxu0 0.0
    %1150 = vmatprep.subr.mxu0 0.0
    %1151 = vmatpush1.msra.mxu0 0.0
    %1152 = vmatprep.subr.mxu0 0.0
    %1153 = vmatpush1.msra.mxu0 0.0
    %1154 = vmatprep.subr.mxu0 0.0
    %1155 = vmatpush1.msra.mxu0 0.0
    %1156 = vmatprep.subr.mxu0 0.0
    %1157 = vmatpush1.msra.mxu0 0.0
    %1158 = vmatprep.subr.mxu0 0.0
    %1159 = vmatpush1.msra.mxu0 0.0
    %1160 = vmatprep.subr.mxu0 0.0
    %1161 = vmatpush1.msra.mxu0 0.0
    %1162 = vmatprep.subr.mxu0 0.0
    %1163 = vmatpush1.msra.mxu0 0.0
    %1164 = vmatprep.subr.mxu0 0.0
    %1165 = vmatpush1.msra.mxu0 0.0
    %1166 = vmatprep.subr.mxu0 0.0
    %1167 = vmatpush1.msra.mxu0 0.0
    %1168 = vmatprep.subr.mxu0 0.0
    %1169 = vmatpush1.msra.mxu0 0.0
    %1170 = vmatprep.subr.mxu0 0.0
    %1171 = vmatpush1.msra.mxu0 %v1133
    %1172 = vmatprep.subr.mxu0 0.0
    %1173 = vmatpush1.msra.mxu0 %v1131
    %1174 = vmatprep.subr.mxu0 0.0
    %1175 = vmatpush2.msra.mxu0 0.0
    %1176 = vmatprep.subr.mxu0 0.0
    %1177 = vmatpush2.msra.mxu0 0.0
    %1178 = vmatprep.subr.mxu0 0.0
    %1179 = vmatpush2.msra.mxu0 0.0
    %1180 = vmatprep.subr.mxu0 0.0
    %1181 = vmatpush2.msra.mxu0 0.0
    %1182 = vmatprep.subr.mxu0 0.0
    %1183 = vmatpush2.msra.mxu0 0.0
    %1184 = vmatprep.subr.mxu0 0.0
    %1185 = vmatpush2.msra.mxu0 0.0
    %1186 = vmatprep.subr.mxu0 0.0
    %1187 = vmatpush2.msra.mxu0 0.0
    %1188 = vmatprep.subr.mxu0 0.0
    %1189 = vmatpush2.msra.mxu0 0.0
    %1190 = vmatprep.subr.mxu0 0.0
    %1191 = vmatpush2.msra.mxu0 0.0
    %1192 = vmatprep.subr.mxu0 0.0
    %1193 = vmatpush2.msra.mxu0 0.0
    %1194 = vmatprep.subr.mxu0 0.0
    %1195 = vmatpush2.msra.mxu0 0.0
    %1196 = vmatprep.subr.mxu0 0.0
    %1197 = vmatpush2.msra.mxu0 0.0
    %1198 = vmatprep.subr.mxu0 0.0
    %1199 = vmatpush2.msra.mxu0 0.0
    %1200 = vmatprep.subr.mxu0 0.0
    %1201 = vmatpush2.msra.mxu0 0.0
    %1202 = vmatprep.subr.mxu0 0.0
    %1203 = vmatpush2.msra.mxu0 0.0
    %1204 = vmatprep.subr.mxu0 0.0
    %1205 = vmatpush2.msra.mxu0 0.0
    %1206 = vmatprep.mubr.f32.mxu0 0.0
    %1207 = vmatmul.mubr.f32.gmra.mxu0 %v1137
    %v1208 = vpop.f32.mrf.mxu0
    %v1209 = vadd.f32 0.0, %v1208
    %v1210 = vpop.f32.mrf.mxu0
    %1211 = vmatprep.mubr.f32.mxu0 0.0
    %1212 = vmatmul.mubr.f32.gmra.mxu0 %v1140
    %v1213 = vpop.f32.mrf.mxu0
    %v1214 = vadd.f32 0.0, %v1213
    %v1215 = vpop.f32.mrf.mxu0
    %1216 = vdwg.mxu0
    %s1217 = scalar_lea.vmem %s4, 24
    %v1218 = vld [vmem:[%s1217] sm:$0xff]
    %v1220 = vsel %vm157, %v1209, 0
    %v1223 = vsel %vm157, %v1214, 0
    %1225 = vmatprep.subr.mxu0 0.0
    %1226 = vmatpush1.msra.mxu0 0.0
    %1227 = vmatprep.subr.mxu0 0.0
    %1228 = vmatpush1.msra.mxu0 0.0
    %1229 = vmatprep.subr.mxu0 0.0
    %1230 = vmatpush1.msra.mxu0 0.0
    %1231 = vmatprep.subr.mxu0 0.0
    %1232 = vmatpush1.msra.mxu0 0.0
    %1233 = vmatprep.subr.mxu0 0.0
    %1234 = vmatpush1.msra.mxu0 0.0
    %1235 = vmatprep.subr.mxu0 0.0
    %1236 = vmatpush1.msra.mxu0 0.0
    %1237 = vmatprep.subr.mxu0 0.0
    %1238 = vmatpush1.msra.mxu0 0.0
    %1239 = vmatprep.subr.mxu0 0.0
    %1240 = vmatpush1.msra.mxu0 0.0
    %1241 = vmatprep.subr.mxu0 0.0
    %1242 = vmatpush1.msra.mxu0 0.0
    %1243 = vmatprep.subr.mxu0 0.0
    %1244 = vmatpush1.msra.mxu0 0.0
    %1245 = vmatprep.subr.mxu0 0.0
    %1246 = vmatpush1.msra.mxu0 0.0
    %1247 = vmatprep.subr.mxu0 0.0
    %1248 = vmatpush1.msra.mxu0 0.0
    %1249 = vmatprep.subr.mxu0 0.0
    %1250 = vmatpush1.msra.mxu0 0.0
    %1251 = vmatprep.subr.mxu0 0.0
    %1252 = vmatpush1.msra.mxu0 0.0
    %1253 = vmatprep.subr.mxu0 0.0
    %1254 = vmatpush1.msra.mxu0 0.0
    %1255 = vmatprep.subr.mxu0 0.0
    %1256 = vmatpush1.msra.mxu0 %v1218
    %1257 = vmatprep.subr.mxu0 0.0
    %1258 = vmatpush2.msra.mxu0 0.0
    %1259 = vmatprep.subr.mxu0 0.0
    %1260 = vmatpush2.msra.mxu0 0.0
    %1261 = vmatprep.subr.mxu0 0.0
    %1262 = vmatpush2.msra.mxu0 0.0
    %1263 = vmatprep.subr.mxu0 0.0
    %1264 = vmatpush2.msra.mxu0 0.0
    %1265 = vmatprep.subr.mxu0 0.0
    %1266 = vmatpush2.msra.mxu0 0.0
    %1267 = vmatprep.subr.mxu0 0.0
    %1268 = vmatpush2.msra.mxu0 0.0
    %1269 = vmatprep.subr.mxu0 0.0
    %1270 = vmatpush2.msra.mxu0 0.0
    %1271 = vmatprep.subr.mxu0 0.0
    %1272 = vmatpush2.msra.mxu0 0.0
    %1273 = vmatprep.subr.mxu0 0.0
    %1274 = vmatpush2.msra.mxu0 0.0
    %1275 = vmatprep.subr.mxu0 0.0
    %1276 = vmatpush2.msra.mxu0 0.0
    %1277 = vmatprep.subr.mxu0 0.0
    %1278 = vmatpush2.msra.mxu0 0.0
    %1279 = vmatprep.subr.mxu0 0.0
    %1280 = vmatpush2.msra.mxu0 0.0
    %1281 = vmatprep.subr.mxu0 0.0
    %1282 = vmatpush2.msra.mxu0 0.0
    %1283 = vmatprep.subr.mxu0 0.0
    %1284 = vmatpush2.msra.mxu0 0.0
    %1285 = vmatprep.subr.mxu0 0.0
    %1286 = vmatpush2.msra.mxu0 0.0
    %1287 = vmatprep.subr.mxu0 0.0
    %1288 = vmatpush2.msra.mxu0 0.0
    %1289 = vmatprep.mubr.f32.mxu0 0.0
    %1290 = vmatmul.mubr.f32.gmra.mxu0 %v1220
    %v1291 = vpop.f32.mrf.mxu0
    %v1292 = vadd.f32 0.0, %v1291
    %v1293 = vpop.f32.mrf.mxu0
    %1294 = vmatprep.mubr.f32.mxu0 0.0
    %1295 = vmatmul.mubr.f32.gmra.mxu0 %v1223
    %v1296 = vpop.f32.mrf.mxu0
    %v1297 = vadd.f32 0.0, %v1296
    %v1298 = vpop.f32.mrf.mxu0
    %1299 = vdwg.mxu0
    %v1300 = vadd.f32 %v1011, %v1292
    %v1301 = vadd.f32 %v1012, %v1297
    %v1302 = vld [vmem:[%s5] sm:$0x1]
    %v1304 = vlaneseq
    %v1305 = vshrl.u32 %v1304, 7
    %v1306 = vsub.s32 0, %v1305
    %v1307 = vrot.slane %v1302, %v1306
    %v1309 = vadd.f32 %v1300, %v1307
    %v1310 = vadd.f32 %v1301, %v1307
    %v1311 = vadd.f32 %v54, %v1309
    %v1312 = vadd.f32 %v55, %v1310
    %v1313 = vld [vmem:[%s6] sm:$0x1]
    %v1314 = vld [vmem:[%s7] sm:$0x1]
    %v1315 = vsel %vm69, %v1311, 0.0
    %1316 = vadd.xlane.f32.xlu0 %v1315
    %v1317 = vpop.xlane.xlu0 %1316
    %v1318 = vsel %vm69, %v1312, 0.0
    %1319 = vadd.xlane.f32.xlu0 %v1318
    %v1320 = vpop.xlane.xlu0 %1319
    %v1321 = vrcp.pop 32.0
    %v1322 = vmul.f32 %v1317, %v1321
    %v1323 = vmul.f32 %v1320, %v1321
    %v1324 = vsub.f32 %v1311, %v1322
    %v1325 = vsub.f32 %v1312, %v1323
    %v1326 = vmul.f32 %v1324, %v1324
    %v1327 = vmul.f32 %v1325, %v1325
    %v1328 = vsel %vm69, %v1326, 0.0
    %1329 = vadd.xlane.f32.xlu0 %v1328
    %v1330 = vpop.xlane.xlu0 %1329
    %v1331 = vsel %vm69, %v1327, 0.0
    %1332 = vadd.xlane.f32.xlu0 %v1331
    %v1333 = vpop.xlane.xlu0 %1332
    %v1334 = vmul.f32 %v1330, %v1321
    %v1335 = vmul.f32 %v1333, %v1321
    %v1336 = vadd.f32 %v1334, 1e-05
    %v1337 = vadd.f32 %v1335, 1e-05
    %v1338 = vrsqrt.pop %v1336
    %v1339 = vrsqrt.pop %v1337
    %v1340 = vmul.f32 %v1324, %v1338
    %v1341 = vmul.f32 %v1325, %v1339
    %v1343 = vlaneseq
    %v1344 = vshrl.u32 %v1343, 7
    %v1345 = vsub.s32 0, %v1344
    %v1346 = vrot.slane %v1313, %v1345
    %v1348 = vmul.f32 %v1340, %v1346
    %v1349 = vmul.f32 %v1341, %v1346
    %v1351 = vlaneseq
    %v1352 = vshrl.u32 %v1351, 7
    %v1353 = vsub.s32 0, %v1352
    %v1354 = vrot.slane %v1314, %v1353
    %v1356 = vadd.f32 %v1348, %v1354
    %v1357 = vadd.f32 %v1349, %v1354
    %v1358 = vld [vmem:[%s8] sm:$0xff]
    %v1359 = vld [vmem:[%s8 + $0x8] sm:$0xff]
    %v1360 = vld [vmem:[%s8 + $0x10] sm:$0xff]
    %v1361 = vld [vmem:[%s8 + $0x18] sm:$0xff]
    %v1362 = vld [vmem:[%s9] sm:$0x1]
    %v1364 = vlaneseq
    %v1365 = vshrl.u32 %v1364, 7
    %v1366 = vsub.s32 0, %v1365
    %v1367 = vrot.slane %v1362, %v1366
    %v1370 = vsel %vm69, %v1356, 0
    %v1373 = vsel %vm69, %v1357, 0
    %1375 = vmatprep.subr.mxu0 0.0
    %1376 = vmatpush1.msra.mxu0 0.0
    %1377 = vmatprep.subr.mxu0 0.0
    %1378 = vmatpush1.msra.mxu0 0.0
    %1379 = vmatprep.subr.mxu0 0.0
    %1380 = vmatpush1.msra.mxu0 0.0
    %1381 = vmatprep.subr.mxu0 0.0
    %1382 = vmatpush1.msra.mxu0 0.0
    %1383 = vmatprep.subr.mxu0 0.0
    %1384 = vmatpush1.msra.mxu0 0.0
    %1385 = vmatprep.subr.mxu0 0.0
    %1386 = vmatpush1.msra.mxu0 0.0
    %1387 = vmatprep.subr.mxu0 0.0
    %1388 = vmatpush1.msra.mxu0 0.0
    %1389 = vmatprep.subr.mxu0 0.0
    %1390 = vmatpush1.msra.mxu0 0.0
    %1391 = vmatprep.subr.mxu0 0.0
    %1392 = vmatpush1.msra.mxu0 0.0
    %1393 = vmatprep.subr.mxu0 0.0
    %1394 = vmatpush1.msra.mxu0 0.0
    %1395 = vmatprep.subr.mxu0 0.0
    %1396 = vmatpush1.msra.mxu0 0.0
    %1397 = vmatprep.subr.mxu0 0.0
    %1398 = vmatpush1.msra.mxu0 0.0
    %1399 = vmatprep.subr.mxu0 0.0
    %1400 = vmatpush1.msra.mxu0 %v1361
    %1401 = vmatprep.subr.mxu0 0.0
    %1402 = vmatpush1.msra.mxu0 %v1360
    %1403 = vmatprep.subr.mxu0 0.0
    %1404 = vmatpush1.msra.mxu0 %v1359
    %1405 = vmatprep.subr.mxu0 0.0
    %1406 = vmatpush1.msra.mxu0 %v1358
    %1407 = vmatprep.subr.mxu0 0.0
    %1408 = vmatpush2.msra.mxu0 0.0
    %1409 = vmatprep.subr.mxu0 0.0
    %1410 = vmatpush2.msra.mxu0 0.0
    %1411 = vmatprep.subr.mxu0 0.0
    %1412 = vmatpush2.msra.mxu0 0.0
    %1413 = vmatprep.subr.mxu0 0.0
    %1414 = vmatpush2.msra.mxu0 0.0
    %1415 = vmatprep.subr.mxu0 0.0
    %1416 = vmatpush2.msra.mxu0 0.0
    %1417 = vmatprep.subr.mxu0 0.0
    %1418 = vmatpush2.msra.mxu0 0.0
    %1419 = vmatprep.subr.mxu0 0.0
    %1420 = vmatpush2.msra.mxu0 0.0
    %1421 = vmatprep.subr.mxu0 0.0
    %1422 = vmatpush2.msra.mxu0 0.0
    %1423 = vmatprep.subr.mxu0 0.0
    %1424 = vmatpush2.msra.mxu0 0.0
    %1425 = vmatprep.subr.mxu0 0.0
    %1426 = vmatpush2.msra.mxu0 0.0
    %1427 = vmatprep.subr.mxu0 0.0
    %1428 = vmatpush2.msra.mxu0 0.0
    %1429 = vmatprep.subr.mxu0 0.0
    %1430 = vmatpush2.msra.mxu0 0.0
    %1431 = vmatprep.subr.mxu0 0.0
    %1432 = vmatpush2.msra.mxu0 0.0
    %1433 = vmatprep.subr.mxu0 0.0
    %1434 = vmatpush2.msra.mxu0 0.0
    %1435 = vmatprep.subr.mxu0 0.0
    %1436 = vmatpush2.msra.mxu0 0.0
    %1437 = vmatprep.subr.mxu0 0.0
    %1438 = vmatpush2.msra.mxu0 0.0
    %1439 = vmatprep.mubr.f32.mxu0 0.0
    %1440 = vmatmul.mubr.f32.gmra.mxu0 %v1370
    %v1441 = vpop.f32.mrf.mxu0
    %v1442 = vadd.f32 %v1367, %v1441
    %v1443 = vpop.f32.mrf.mxu0
    %1444 = vmatprep.mubr.f32.mxu0 0.0
    %1445 = vmatmul.mubr.f32.gmra.mxu0 %v1373
    %v1446 = vpop.f32.mrf.mxu0
    %v1447 = vadd.f32 %v1367, %v1446
    %v1448 = vpop.f32.mrf.mxu0
    %1449 = vdwg.mxu0
    %v1450 = vmax.f32 %v1442, 0.0
    %v1451 = vmax.f32 %v1447, 0.0
    %v1452 = vld [vmem:[%s10] sm:$0xff]
    %v1453 = vld [vmem:[%s10 + $0x8] sm:$0xff]
    %v1454 = vld [vmem:[%s10 + $0x10] sm:$0xff]
    %v1455 = vld [vmem:[%s10 + $0x18] sm:$0xff]
    %v1456 = vld [vmem:[%s10 + $0x20] sm:$0xff]
    %v1457 = vld [vmem:[%s10 + $0x28] sm:$0xff]
    %v1458 = vld [vmem:[%s10 + $0x30] sm:$0xff]
    %v1459 = vld [vmem:[%s10 + $0x38] sm:$0xff]
    %v1460 = vld [vmem:[%s11] sm:$0x1]
    %v1462 = vlaneseq
    %v1463 = vshrl.u32 %v1462, 7
    %v1464 = vsub.s32 0, %v1463
    %v1465 = vrot.slane %v1460, %v1464
    %vm1467 = vcmask 523264
    %v1469 = vsel %vm1467, %v1450, 0
    %v1472 = vsel %vm1467, %v1451, 0
    %1474 = vmatprep.subr.mxu0 0.0
    %1475 = vmatpush1.msra.mxu0 0.0
    %1476 = vmatprep.subr.mxu0 0.0
    %1477 = vmatpush1.msra.mxu0 0.0
    %1478 = vmatprep.subr.mxu0 0.0
    %1479 = vmatpush1.msra.mxu0 0.0
    %1480 = vmatprep.subr.mxu0 0.0
    %1481 = vmatpush1.msra.mxu0 0.0
    %1482 = vmatprep.subr.mxu0 0.0
    %1483 = vmatpush1.msra.mxu0 0.0
    %1484 = vmatprep.subr.mxu0 0.0
    %1485 = vmatpush1.msra.mxu0 0.0
    %1486 = vmatprep.subr.mxu0 0.0
    %1487 = vmatpush1.msra.mxu0 0.0
    %1488 = vmatprep.subr.mxu0 0.0
    %1489 = vmatpush1.msra.mxu0 0.0
    %1490 = vmatprep.subr.mxu0 0.0
    %1491 = vmatpush1.msra.mxu0 %v1459
    %1492 = vmatprep.subr.mxu0 0.0
    %1493 = vmatpush1.msra.mxu0 %v1458
    %1494 = vmatprep.subr.mxu0 0.0
    %1495 = vmatpush1.msra.mxu0 %v1457
    %1496 = vmatprep.subr.mxu0 0.0
    %1497 = vmatpush1.msra.mxu0 %v1456
    %1498 = vmatprep.subr.mxu0 0.0
    %1499 = vmatpush1.msra.mxu0 %v1455
    %1500 = vmatprep.subr.mxu0 0.0
    %1501 = vmatpush1.msra.mxu0 %v1454
    %1502 = vmatprep.subr.mxu0 0.0
    %1503 = vmatpush1.msra.mxu0 %v1453
    %1504 = vmatprep.subr.mxu0 0.0
    %1505 = vmatpush1.msra.mxu0 %v1452
    %1506 = vmatprep.subr.mxu0 0.0
    %1507 = vmatpush2.msra.mxu0 0.0
    %1508 = vmatprep.subr.mxu0 0.0
    %1509 = vmatpush2.msra.mxu0 0.0
    %1510 = vmatprep.subr.mxu0 0.0
    %1511 = vmatpush2.msra.mxu0 0.0
    %1512 = vmatprep.subr.mxu0 0.0
    %1513 = vmatpush2.msra.mxu0 0.0
    %1514 = vmatprep.subr.mxu0 0.0
    %1515 = vmatpush2.msra.mxu0 0.0
    %1516 = vmatprep.subr.mxu0 0.0
    %1517 = vmatpush2.msra.mxu0 0.0
    %1518 = vmatprep.subr.mxu0 0.0
    %1519 = vmatpush2.msra.mxu0 0.0
    %1520 = vmatprep.subr.mxu0 0.0
    %1521 = vmatpush2.msra.mxu0 0.0
    %1522 = vmatprep.subr.mxu0 0.0
    %1523 = vmatpush2.msra.mxu0 0.0
    %1524 = vmatprep.subr.mxu0 0.0
    %1525 = vmatpush2.msra.mxu0 0.0
    %1526 = vmatprep.subr.mxu0 0.0
    %1527 = vmatpush2.msra.mxu0 0.0
    %1528 = vmatprep.subr.mxu0 0.0
    %1529 = vmatpush2.msra.mxu0 0.0
    %1530 = vmatprep.subr.mxu0 0.0
    %1531 = vmatpush2.msra.mxu0 0.0
    %1532 = vmatprep.subr.mxu0 0.0
    %1533 = vmatpush2.msra.mxu0 0.0
    %1534 = vmatprep.subr.mxu0 0.0
    %1535 = vmatpush2.msra.mxu0 0.0
    %1536 = vmatprep.subr.mxu0 0.0
    %1537 = vmatpush2.msra.mxu0 0.0
    %1538 = vmatprep.mubr.f32.mxu0 0.0
    %1539 = vmatmul.mubr.f32.gmra.mxu0 %v1469
    %v1540 = vpop.f32.mrf.mxu0
    %v1541 = vadd.f32 %v1465, %v1540
    %v1542 = vpop.f32.mrf.mxu0
    %1543 = vmatprep.mubr.f32.mxu0 0.0
    %1544 = vmatmul.mubr.f32.gmra.mxu0 %v1472
    %v1545 = vpop.f32.mrf.mxu0
    %v1546 = vadd.f32 %v1465, %v1545
    %v1547 = vpop.f32.mrf.mxu0
    %1548 = vdwg.mxu0
    %v1549 = vadd.f32 %v1356, %v1541
    %v1550 = vadd.f32 %v1357, %v1546
    %v1551 = vld [vmem:[%s12] sm:$0x1]
    %v1552 = vld [vmem:[%s13] sm:$0x1]
    %v1553 = vsel %vm69, %v1549, 0.0
    %1554 = vadd.xlane.f32.xlu0 %v1553
    %v1555 = vpop.xlane.xlu0 %1554
    %v1556 = vsel %vm69, %v1550, 0.0
    %1557 = vadd.xlane.f32.xlu0 %v1556
    %v1558 = vpop.xlane.xlu0 %1557
    %v1559 = vmul.f32 %v1555, %v1321
    %v1560 = vmul.f32 %v1558, %v1321
    %v1561 = vsub.f32 %v1549, %v1559
    %v1562 = vsub.f32 %v1550, %v1560
    %v1563 = vmul.f32 %v1561, %v1561
    %v1564 = vmul.f32 %v1562, %v1562
    %v1565 = vsel %vm69, %v1563, 0.0
    %1566 = vadd.xlane.f32.xlu0 %v1565
    %v1567 = vpop.xlane.xlu0 %1566
    %v1568 = vsel %vm69, %v1564, 0.0
    %1569 = vadd.xlane.f32.xlu0 %v1568
    %v1570 = vpop.xlane.xlu0 %1569
    %v1571 = vmul.f32 %v1567, %v1321
    %v1572 = vmul.f32 %v1570, %v1321
    %v1573 = vadd.f32 %v1571, 1e-05
    %v1574 = vadd.f32 %v1572, 1e-05
    %v1575 = vrsqrt.pop %v1573
    %v1576 = vrsqrt.pop %v1574
    %v1577 = vmul.f32 %v1561, %v1575
    %v1578 = vmul.f32 %v1562, %v1576
    %v1580 = vlaneseq
    %v1581 = vshrl.u32 %v1580, 7
    %v1582 = vsub.s32 0, %v1581
    %v1583 = vrot.slane %v1551, %v1582
    %v1585 = vmul.f32 %v1577, %v1583
    %v1586 = vmul.f32 %v1578, %v1583
    %v1588 = vlaneseq
    %v1589 = vshrl.u32 %v1588, 7
    %v1590 = vsub.s32 0, %v1589
    %v1591 = vrot.slane %v1552, %v1590
    %v1593 = vadd.f32 %v1585, %v1591
    %v1594 = vadd.f32 %v1586, %v1591
    %s1595 = scalar_lea.vmem %s2, 32
    %v1596 = vld [vmem:[%s1595] sm:$0xff]
    %v1597 = vld [vmem:[%s1595 + $0x8] sm:$0xff]
    %v1598 = vld [vmem:[%s1595 + $0x10] sm:$0xff]
    %v1599 = vld [vmem:[%s1595 + $0x18] sm:$0xff]
    %s1600 = scalar_lea.vmem %s3, 1
    %v1601 = vld [vmem:[%s1600] sm:$0x1]
    %v1603 = vlaneseq
    %v1604 = vshrl.u32 %v1603, 7
    %v1605 = vsub.s32 0, %v1604
    %v1606 = vrot.slane %v1601, %v1605
    %v1609 = vsel %vm69, %v1593, 0
    %v1612 = vsel %vm69, %v1594, 0
    %1614 = vmatprep.subr.mxu0 0.0
    %1615 = vmatpush1.msra.mxu0 0.0
    %1616 = vmatprep.subr.mxu0 0.0
    %1617 = vmatpush1.msra.mxu0 0.0
    %1618 = vmatprep.subr.mxu0 0.0
    %1619 = vmatpush1.msra.mxu0 0.0
    %1620 = vmatprep.subr.mxu0 0.0
    %1621 = vmatpush1.msra.mxu0 0.0
    %1622 = vmatprep.subr.mxu0 0.0
    %1623 = vmatpush1.msra.mxu0 0.0
    %1624 = vmatprep.subr.mxu0 0.0
    %1625 = vmatpush1.msra.mxu0 0.0
    %1626 = vmatprep.subr.mxu0 0.0
    %1627 = vmatpush1.msra.mxu0 0.0
    %1628 = vmatprep.subr.mxu0 0.0
    %1629 = vmatpush1.msra.mxu0 0.0
    %1630 = vmatprep.subr.mxu0 0.0
    %1631 = vmatpush1.msra.mxu0 0.0
    %1632 = vmatprep.subr.mxu0 0.0
    %1633 = vmatpush1.msra.mxu0 0.0
    %1634 = vmatprep.subr.mxu0 0.0
    %1635 = vmatpush1.msra.mxu0 0.0
    %1636 = vmatprep.subr.mxu0 0.0
    %1637 = vmatpush1.msra.mxu0 0.0
    %1638 = vmatprep.subr.mxu0 0.0
    %1639 = vmatpush1.msra.mxu0 %v1599
    %1640 = vmatprep.subr.mxu0 0.0
    %1641 = vmatpush1.msra.mxu0 %v1598
    %1642 = vmatprep.subr.mxu0 0.0
    %1643 = vmatpush1.msra.mxu0 %v1597
    %1644 = vmatprep.subr.mxu0 0.0
    %1645 = vmatpush1.msra.mxu0 %v1596
    %1646 = vmatprep.subr.mxu0 0.0
    %1647 = vmatpush2.msra.mxu0 0.0
    %1648 = vmatprep.subr.mxu0 0.0
    %1649 = vmatpush2.msra.mxu0 0.0
    %1650 = vmatprep.subr.mxu0 0.0
    %1651 = vmatpush2.msra.mxu0 0.0
    %1652 = vmatprep.subr.mxu0 0.0
    %1653 = vmatpush2.msra.mxu0 0.0
    %1654 = vmatprep.subr.mxu0 0.0
    %1655 = vmatpush2.msra.mxu0 0.0
    %1656 = vmatprep.subr.mxu0 0.0
    %1657 = vmatpush2.msra.mxu0 0.0
    %1658 = vmatprep.subr.mxu0 0.0
    %1659 = vmatpush2.msra.mxu0 0.0
    %1660 = vmatprep.subr.mxu0 0.0
    %1661 = vmatpush2.msra.mxu0 0.0
    %1662 = vmatprep.subr.mxu0 0.0
    %1663 = vmatpush2.msra.mxu0 0.0
    %1664 = vmatprep.subr.mxu0 0.0
    %1665 = vmatpush2.msra.mxu0 0.0
    %1666 = vmatprep.subr.mxu0 0.0
    %1667 = vmatpush2.msra.mxu0 0.0
    %1668 = vmatprep.subr.mxu0 0.0
    %1669 = vmatpush2.msra.mxu0 0.0
    %1670 = vmatprep.subr.mxu0 0.0
    %1671 = vmatpush2.msra.mxu0 0.0
    %1672 = vmatprep.subr.mxu0 0.0
    %1673 = vmatpush2.msra.mxu0 0.0
    %1674 = vmatprep.subr.mxu0 0.0
    %1675 = vmatpush2.msra.mxu0 0.0
    %1676 = vmatprep.subr.mxu0 0.0
    %1677 = vmatpush2.msra.mxu0 0.0
    %1678 = vmatprep.mubr.f32.mxu0 0.0
    %1679 = vmatmul.mubr.f32.gmra.mxu0 %v1609
    %v1680 = vpop.f32.mrf.mxu0
    %v1681 = vadd.f32 %v1606, %v1680
    %v1682 = vpop.f32.mrf.mxu0
    %1683 = vmatprep.mubr.f32.mxu0 0.0
    %1684 = vmatmul.mubr.f32.gmra.mxu0 %v1612
    %v1685 = vpop.f32.mrf.mxu0
    %v1686 = vadd.f32 %v1606, %v1685
    %v1687 = vpop.f32.mrf.mxu0
    %1688 = vdwg.mxu0
    %1691 = vrot.lane.b32.xlu0 %v1681, 96
    %v1692 = vpop.permute.xlu0 %1691
    %1693 = vrot.lane.b32.xlu0 %v1686, 96
    %v1694 = vpop.permute.xlu0 %1693
    %v1695 = vsel %vm157, %v1681, 0
    %v1697 = vsel %vm157, %v1686, 0
    %v1699 = vsel %vm157, %v1692, 0
    %v1701 = vsel %vm157, %v1694, 0
    %1703 = vmatprep.subr.mxu0 0.0
    %1704 = vmatpush1.xpose.msra.mxu0 0.0
    %1705 = vmatprep.subr.mxu0 0.0
    %1706 = vmatpush1.xpose.msra.mxu0 0.0
    %1707 = vmatprep.subr.mxu0 0.0
    %1708 = vmatpush1.xpose.msra.mxu0 0.0
    %1709 = vmatprep.subr.mxu0 0.0
    %1710 = vmatpush1.xpose.msra.mxu0 0.0
    %1711 = vmatprep.subr.mxu0 0.0
    %1712 = vmatpush1.xpose.msra.mxu0 0.0
    %1713 = vmatprep.subr.mxu0 0.0
    %1714 = vmatpush1.xpose.msra.mxu0 0.0
    %1715 = vmatprep.subr.mxu0 0.0
    %1716 = vmatpush1.xpose.msra.mxu0 0.0
    %1717 = vmatprep.subr.mxu0 0.0
    %1718 = vmatpush1.xpose.msra.mxu0 0.0
    %1719 = vmatprep.subr.mxu0 0.0
    %1720 = vmatpush1.xpose.msra.mxu0 0.0
    %1721 = vmatprep.subr.mxu0 0.0
    %1722 = vmatpush1.xpose.msra.mxu0 0.0
    %1723 = vmatprep.subr.mxu0 0.0
    %1724 = vmatpush1.xpose.msra.mxu0 0.0
    %1725 = vmatprep.subr.mxu0 0.0
    %1726 = vmatpush1.xpose.msra.mxu0 0.0
    %1727 = vmatprep.subr.mxu0 0.0
    %1728 = vmatpush1.xpose.msra.mxu0 0.0
    %1729 = vmatprep.subr.mxu0 0.0
    %1730 = vmatpush1.xpose.msra.mxu0 0.0
    %1731 = vmatprep.subr.mxu0 0.0
    %1732 = vmatpush1.xpose.msra.mxu0 %v1701
    %1733 = vmatprep.subr.mxu0 0.0
    %1734 = vmatpush1.xpose.msra.mxu0 %v1699
    %1735 = vmatprep.subr.mxu0 0.0
    %1736 = vmatpush2.xpose.msra.mxu0 0.0
    %1737 = vmatprep.subr.mxu0 0.0
    %1738 = vmatpush2.xpose.msra.mxu0 0.0
    %1739 = vmatprep.subr.mxu0 0.0
    %1740 = vmatpush2.xpose.msra.mxu0 0.0
    %1741 = vmatprep.subr.mxu0 0.0
    %1742 = vmatpush2.xpose.msra.mxu0 0.0
    %1743 = vmatprep.subr.mxu0 0.0
    %1744 = vmatpush2.xpose.msra.mxu0 0.0
    %1745 = vmatprep.subr.mxu0 0.0
    %1746 = vmatpush2.xpose.msra.mxu0 0.0
    %1747 = vmatprep.subr.mxu0 0.0
    %1748 = vmatpush2.xpose.msra.mxu0 0.0
    %1749 = vmatprep.subr.mxu0 0.0
    %1750 = vmatpush2.xpose.msra.mxu0 0.0
    %1751 = vmatprep.subr.mxu0 0.0
    %1752 = vmatpush2.xpose.msra.mxu0 0.0
    %1753 = vmatprep.subr.mxu0 0.0
    %1754 = vmatpush2.xpose.msra.mxu0 0.0
    %1755 = vmatprep.subr.mxu0 0.0
    %1756 = vmatpush2.xpose.msra.mxu0 0.0
    %1757 = vmatprep.subr.mxu0 0.0
    %1758 = vmatpush2.xpose.msra.mxu0 0.0
    %1759 = vmatprep.subr.mxu0 0.0
    %1760 = vmatpush2.xpose.msra.mxu0 0.0
    %1761 = vmatprep.subr.mxu0 0.0
    %1762 = vmatpush2.xpose.msra.mxu0 0.0
    %1763 = vmatprep.subr.mxu0 0.0
    %1764 = vmatpush2.xpose.msra.mxu0 0.0
    %1765 = vmatprep.subr.mxu0 0.0
    %1766 = vmatpush2.xpose.msra.mxu0 0.0
    %1767 = vmatprep.mubr.f32.mxu0 0.0
    %1768 = vmatmul.mubr.f32.gmra.mxu0 %v1695
    %v1769 = vpop.f32.mrf.mxu0
    %v1770 = vadd.f32 0.0, %v1769
    %v1771 = vpop.f32.mrf.mxu0
    %1772 = vmatprep.mubr.f32.mxu0 0.0
    %1773 = vmatmul.mubr.f32.gmra.mxu0 %v1697
    %v1774 = vpop.f32.mrf.mxu0
    %v1775 = vadd.f32 0.0, %v1774
    %v1776 = vpop.f32.mrf.mxu0
    %1777 = vdwg.mxu0
    %v1778 = vmul.f32 %v1770, 0.35355338
    %v1779 = vmul.f32 %v1775, 0.35355338
    %v1780 = vadd.f32 %v1778, %v56
    %v1781 = vadd.f32 %v1779, %v57
    %v1782 = vsel %vm245, %v1780, -inf
    %1783 = vmax.xlane.f32.xlu0 %v1782
    %v1784 = vpop.xlane.xlu0 %1783
    %v1785 = vsel %vm245, %v1781, -inf
    %1786 = vmax.xlane.f32.xlu0 %v1785
    %v1787 = vpop.xlane.xlu0 %1786
    %v1788 = vsub.f32 %v1780, %v1784
    %v1789 = vsub.f32 %v1781, %v1787
    %v1790 = vmul.f32 %v1788, 1.442695
    %v1791 = vpow.pop %v1790
    %v1792 = vmul.f32 %v1789, 1.442695
    %v1793 = vpow.pop %v1792
    %v1794 = vsel %vm245, %v1791, 0.0
    %1795 = vadd.xlane.f32.xlu0 %v1794
    %v1796 = vpop.xlane.xlu0 %1795
    %v1797 = vsel %vm245, %v1793, 0.0
    %1798 = vadd.xlane.f32.xlu0 %v1797
    %v1799 = vpop.xlane.xlu0 %1798
    %v1800 = vrcp.pop %v1796
    %v1801 = vrcp.pop %v1799
    %v1802 = vmul.f32 %v1791, %v1800
    %v1803 = vmul.f32 %v1793, %v1801
    %1804 = vrot.lane.b32.xlu0 %v1681, 64
    %v1805 = vpop.permute.xlu0 %1804
    %1806 = vrot.lane.b32.xlu0 %v1686, 64
    %v1807 = vpop.permute.xlu0 %1806
    %v1811 = vsel %vm245, %v1802, 0
    %v1814 = vsel %vm245, %v1803, 0
    %1816 = vmatprep.subr.mxu0 0.0
    %1817 = vmatpush1.msra.mxu0 0.0
    %1818 = vmatprep.subr.mxu0 0.0
    %1819 = vmatpush1.msra.mxu0 0.0
    %1820 = vmatprep.subr.mxu0 0.0
    %1821 = vmatpush1.msra.mxu0 0.0
    %1822 = vmatprep.subr.mxu0 0.0
    %1823 = vmatpush1.msra.mxu0 0.0
    %1824 = vmatprep.subr.mxu0 0.0
    %1825 = vmatpush1.msra.mxu0 0.0
    %1826 = vmatprep.subr.mxu0 0.0
    %1827 = vmatpush1.msra.mxu0 0.0
    %1828 = vmatprep.subr.mxu0 0.0
    %1829 = vmatpush1.msra.mxu0 0.0
    %1830 = vmatprep.subr.mxu0 0.0
    %1831 = vmatpush1.msra.mxu0 0.0
    %1832 = vmatprep.subr.mxu0 0.0
    %1833 = vmatpush1.msra.mxu0 0.0
    %1834 = vmatprep.subr.mxu0 0.0
    %1835 = vmatpush1.msra.mxu0 0.0
    %1836 = vmatprep.subr.mxu0 0.0
    %1837 = vmatpush1.msra.mxu0 0.0
    %1838 = vmatprep.subr.mxu0 0.0
    %1839 = vmatpush1.msra.mxu0 0.0
    %1840 = vmatprep.subr.mxu0 0.0
    %1841 = vmatpush1.msra.mxu0 0.0
    %1842 = vmatprep.subr.mxu0 0.0
    %1843 = vmatpush1.msra.mxu0 0.0
    %1844 = vmatprep.subr.mxu0 0.0
    %1845 = vmatpush1.msra.mxu0 %v1807
    %1846 = vmatprep.subr.mxu0 0.0
    %1847 = vmatpush1.msra.mxu0 %v1805
    %1848 = vmatprep.subr.mxu0 0.0
    %1849 = vmatpush2.msra.mxu0 0.0
    %1850 = vmatprep.subr.mxu0 0.0
    %1851 = vmatpush2.msra.mxu0 0.0
    %1852 = vmatprep.subr.mxu0 0.0
    %1853 = vmatpush2.msra.mxu0 0.0
    %1854 = vmatprep.subr.mxu0 0.0
    %1855 = vmatpush2.msra.mxu0 0.0
    %1856 = vmatprep.subr.mxu0 0.0
    %1857 = vmatpush2.msra.mxu0 0.0
    %1858 = vmatprep.subr.mxu0 0.0
    %1859 = vmatpush2.msra.mxu0 0.0
    %1860 = vmatprep.subr.mxu0 0.0
    %1861 = vmatpush2.msra.mxu0 0.0
    %1862 = vmatprep.subr.mxu0 0.0
    %1863 = vmatpush2.msra.mxu0 0.0
    %1864 = vmatprep.subr.mxu0 0.0
    %1865 = vmatpush2.msra.mxu0 0.0
    %1866 = vmatprep.subr.mxu0 0.0
    %1867 = vmatpush2.msra.mxu0 0.0
    %1868 = vmatprep.subr.mxu0 0.0
    %1869 = vmatpush2.msra.mxu0 0.0
    %1870 = vmatprep.subr.mxu0 0.0
    %1871 = vmatpush2.msra.mxu0 0.0
    %1872 = vmatprep.subr.mxu0 0.0
    %1873 = vmatpush2.msra.mxu0 0.0
    %1874 = vmatprep.subr.mxu0 0.0
    %1875 = vmatpush2.msra.mxu0 0.0
    %1876 = vmatprep.subr.mxu0 0.0
    %1877 = vmatpush2.msra.mxu0 0.0
    %1878 = vmatprep.subr.mxu0 0.0
    %1879 = vmatpush2.msra.mxu0 0.0
    %1880 = vmatprep.mubr.f32.mxu0 0.0
    %1881 = vmatmul.mubr.f32.gmra.mxu0 %v1811
    %v1882 = vpop.f32.mrf.mxu0
    %v1883 = vadd.f32 0.0, %v1882
    %v1884 = vpop.f32.mrf.mxu0
    %1885 = vmatprep.mubr.f32.mxu0 0.0
    %1886 = vmatmul.mubr.f32.gmra.mxu0 %v1814
    %v1887 = vpop.f32.mrf.mxu0
    %v1888 = vadd.f32 0.0, %v1887
    %v1889 = vpop.f32.mrf.mxu0
    %1890 = vdwg.mxu0
    %s1891 = scalar_lea.vmem %s4, 32
    %v1892 = vld [vmem:[%s1891] sm:$0xff]
    %1893 = vrot.lane.b32.xlu0 %v1681, 120
    %v1894 = vpop.permute.xlu0 %1893
    %1895 = vrot.lane.b32.xlu0 %v1686, 120
    %v1896 = vpop.permute.xlu0 %1895
    %1897 = vrot.lane.b32.xlu0 %v1681, 88
    %v1898 = vpop.permute.xlu0 %1897
    %1899 = vrot.lane.b32.xlu0 %v1686, 88
    %v1900 = vpop.permute.xlu0 %1899
    %v1901 = vsel %vm157, %v1894, 0
    %v1903 = vsel %vm157, %v1896, 0
    %v1905 = vsel %vm157, %v1898, 0
    %v1907 = vsel %vm157, %v1900, 0
    %1909 = vmatprep.subr.mxu0 0.0
    %1910 = vmatpush1.xpose.msra.mxu0 0.0
    %1911 = vmatprep.subr.mxu0 0.0
    %1912 = vmatpush1.xpose.msra.mxu0 0.0
    %1913 = vmatprep.subr.mxu0 0.0
    %1914 = vmatpush1.xpose.msra.mxu0 0.0
    %1915 = vmatprep.subr.mxu0 0.0
    %1916 = vmatpush1.xpose.msra.mxu0 0.0
    %1917 = vmatprep.subr.mxu0 0.0
    %1918 = vmatpush1.xpose.msra.mxu0 0.0
    %1919 = vmatprep.subr.mxu0 0.0
    %1920 = vmatpush1.xpose.msra.mxu0 0.0
    %1921 = vmatprep.subr.mxu0 0.0
    %1922 = vmatpush1.xpose.msra.mxu0 0.0
    %1923 = vmatprep.subr.mxu0 0.0
    %1924 = vmatpush1.xpose.msra.mxu0 0.0
    %1925 = vmatprep.subr.mxu0 0.0
    %1926 = vmatpush1.xpose.msra.mxu0 0.0
    %1927 = vmatprep.subr.mxu0 0.0
    %1928 = vmatpush1.xpose.msra.mxu0 0.0
    %1929 = vmatprep.subr.mxu0 0.0
    %1930 = vmatpush1.xpose.msra.mxu0 0.0
    %1931 = vmatprep.subr.mxu0 0.0
    %1932 = vmatpush1.xpose.msra.mxu0 0.0
    %1933 = vmatprep.subr.mxu0 0.0
    %1934 = vmatpush1.xpose.msra.mxu0 0.0
    %1935 = vmatprep.subr.mxu0 0.0
    %1936 = vmatpush1.xpose.msra.mxu0 0.0
    %1937 = vmatprep.subr.mxu0 0.0
    %1938 = vmatpush1.xpose.msra.mxu0 %v1907
    %1939 = vmatprep.subr.mxu0 0.0
    %1940 = vmatpush1.xpose.msra.mxu0 %v1905
    %1941 = vmatprep.subr.mxu0 0.0
    %1942 = vmatpush2.xpose.msra.mxu0 0.0
    %1943 = vmatprep.subr.mxu0 0.0
    %1944 = vmatpush2.xpose.msra.mxu0 0.0
    %1945 = vmatprep.subr.mxu0 0.0
    %1946 = vmatpush2.xpose.msra.mxu0 0.0
    %1947 = vmatprep.subr.mxu0 0.0
    %1948 = vmatpush2.xpose.msra.mxu0 0.0
    %1949 = vmatprep.subr.mxu0 0.0
    %1950 = vmatpush2.xpose.msra.mxu0 0.0
    %1951 = vmatprep.subr.mxu0 0.0
    %1952 = vmatpush2.xpose.msra.mxu0 0.0
    %1953 = vmatprep.subr.mxu0 0.0
    %1954 = vmatpush2.xpose.msra.mxu0 0.0
    %1955 = vmatprep.subr.mxu0 0.0
    %1956 = vmatpush2.xpose.msra.mxu0 0.0
    %1957 = vmatprep.subr.mxu0 0.0
    %1958 = vmatpush2.xpose.msra.mxu0 0.0
    %1959 = vmatprep.subr.mxu0 0.0
    %1960 = vmatpush2.xpose.msra.mxu0 0.0
    %1961 = vmatprep.subr.mxu0 0.0
    %1962 = vmatpush2.xpose.msra.mxu0 0.0
    %1963 = vmatprep.subr.mxu0 0.0
    %1964 = vmatpush2.xpose.msra.mxu0 0.0
    %1965 = vmatprep.subr.mxu0 0.0
    %1966 = vmatpush2.xpose.msra.mxu0 0.0
    %1967 = vmatprep.subr.mxu0 0.0
    %1968 = vmatpush2.xpose.msra.mxu0 0.0
    %1969 = vmatprep.subr.mxu0 0.0
    %1970 = vmatpush2.xpose.msra.mxu0 0.0
    %1971 = vmatprep.subr.mxu0 0.0
    %1972 = vmatpush2.xpose.msra.mxu0 0.0
    %1973 = vmatprep.mubr.f32.mxu0 0.0
    %1974 = vmatmul.mubr.f32.gmra.mxu0 %v1901
    %v1975 = vpop.f32.mrf.mxu0
    %v1976 = vadd.f32 0.0, %v1975
    %v1977 = vpop.f32.mrf.mxu0
    %1978 = vmatprep.mubr.f32.mxu0 0.0
    %1979 = vmatmul.mubr.f32.gmra.mxu0 %v1903
    %v1980 = vpop.f32.mrf.mxu0
    %v1981 = vadd.f32 0.0, %v1980
    %v1982 = vpop.f32.mrf.mxu0
    %1983 = vdwg.mxu0
    %v1984 = vmul.f32 %v1976, 0.35355338
    %v1985 = vmul.f32 %v1981, 0.35355338
    %v1986 = vadd.f32 %v1984, %v56
    %v1987 = vadd.f32 %v1985, %v57
    %v1988 = vsel %vm245, %v1986, -inf
    %1989 = vmax.xlane.f32.xlu0 %v1988
    %v1990 = vpop.xlane.xlu0 %1989
    %v1991 = vsel %vm245, %v1987, -inf
    %1992 = vmax.xlane.f32.xlu0 %v1991
    %v1993 = vpop.xlane.xlu0 %1992
    %v1994 = vsub.f32 %v1986, %v1990
    %v1995 = vsub.f32 %v1987, %v1993
    %v1996 = vmul.f32 %v1994, 1.442695
    %v1997 = vpow.pop %v1996
    %v1998 = vmul.f32 %v1995, 1.442695
    %v1999 = vpow.pop %v1998
    %v2000 = vsel %vm245, %v1997, 0.0
    %2001 = vadd.xlane.f32.xlu0 %v2000
    %v2002 = vpop.xlane.xlu0 %2001
    %v2003 = vsel %vm245, %v1999, 0.0
    %2004 = vadd.xlane.f32.xlu0 %v2003
    %v2005 = vpop.xlane.xlu0 %2004
    %v2006 = vrcp.pop %v2002
    %v2007 = vrcp.pop %v2005
    %v2008 = vmul.f32 %v1997, %v2006
    %v2009 = vmul.f32 %v1999, %v2007
    %2010 = vrot.lane.b32.xlu0 %v1681, 56
    %v2011 = vpop.permute.xlu0 %2010
    %2012 = vrot.lane.b32.xlu0 %v1686, 56
    %v2013 = vpop.permute.xlu0 %2012
    %v2017 = vsel %vm245, %v2008, 0
    %v2020 = vsel %vm245, %v2009, 0
    %2022 = vmatprep.subr.mxu0 0.0
    %2023 = vmatpush1.msra.mxu0 0.0
    %2024 = vmatprep.subr.mxu0 0.0
    %2025 = vmatpush1.msra.mxu0 0.0
    %2026 = vmatprep.subr.mxu0 0.0
    %2027 = vmatpush1.msra.mxu0 0.0
    %2028 = vmatprep.subr.mxu0 0.0
    %2029 = vmatpush1.msra.mxu0 0.0
    %2030 = vmatprep.subr.mxu0 0.0
    %2031 = vmatpush1.msra.mxu0 0.0
    %2032 = vmatprep.subr.mxu0 0.0
    %2033 = vmatpush1.msra.mxu0 0.0
    %2034 = vmatprep.subr.mxu0 0.0
    %2035 = vmatpush1.msra.mxu0 0.0
    %2036 = vmatprep.subr.mxu0 0.0
    %2037 = vmatpush1.msra.mxu0 0.0
    %2038 = vmatprep.subr.mxu0 0.0
    %2039 = vmatpush1.msra.mxu0 0.0
    %2040 = vmatprep.subr.mxu0 0.0
    %2041 = vmatpush1.msra.mxu0 0.0
    %2042 = vmatprep.subr.mxu0 0.0
    %2043 = vmatpush1.msra.mxu0 0.0
    %2044 = vmatprep.subr.mxu0 0.0
    %2045 = vmatpush1.msra.mxu0 0.0
    %2046 = vmatprep.subr.mxu0 0.0
    %2047 = vmatpush1.msra.mxu0 0.0
    %2048 = vmatprep.subr.mxu0 0.0
    %2049 = vmatpush1.msra.mxu0 0.0
    %2050 = vmatprep.subr.mxu0 0.0
    %2051 = vmatpush1.msra.mxu0 %v2013
    %2052 = vmatprep.subr.mxu0 0.0
    %2053 = vmatpush1.msra.mxu0 %v2011
    %2054 = vmatprep.subr.mxu0 0.0
    %2055 = vmatpush2.msra.mxu0 0.0
    %2056 = vmatprep.subr.mxu0 0.0
    %2057 = vmatpush2.msra.mxu0 0.0
    %2058 = vmatprep.subr.mxu0 0.0
    %2059 = vmatpush2.msra.mxu0 0.0
    %2060 = vmatprep.subr.mxu0 0.0
    %2061 = vmatpush2.msra.mxu0 0.0
    %2062 = vmatprep.subr.mxu0 0.0
    %2063 = vmatpush2.msra.mxu0 0.0
    %2064 = vmatprep.subr.mxu0 0.0
    %2065 = vmatpush2.msra.mxu0 0.0
    %2066 = vmatprep.subr.mxu0 0.0
    %2067 = vmatpush2.msra.mxu0 0.0
    %2068 = vmatprep.subr.mxu0 0.0
    %2069 = vmatpush2.msra.mxu0 0.0
    %2070 = vmatprep.subr.mxu0 0.0
    %2071 = vmatpush2.msra.mxu0 0.0
    %2072 = vmatprep.subr.mxu0 0.0
    %2073 = vmatpush2.msra.mxu0 0.0
    %2074 = vmatprep.subr.mxu0 0.0
    %2075 = vmatpush2.msra.mxu0 0.0
    %2076 = vmatprep.subr.mxu0 0.0
    %2077 = vmatpush2.msra.mxu0 0.0
    %2078 = vmatprep.subr.mxu0 0.0
    %2079 = vmatpush2.msra.mxu0 0.0
    %2080 = vmatprep.subr.mxu0 0.0
    %2081 = vmatpush2.msra.mxu0 0.0
    %2082 = vmatprep.subr.mxu0 0.0
    %2083 = vmatpush2.msra.mxu0 0.0
    %2084 = vmatprep.subr.mxu0 0.0
    %2085 = vmatpush2.msra.mxu0 0.0
    %2086 = vmatprep.mubr.f32.mxu0 0.0
    %2087 = vmatmul.mubr.f32.gmra.mxu0 %v2017
    %v2088 = vpop.f32.mrf.mxu0
    %v2089 = vadd.f32 0.0, %v2088
    %v2090 = vpop.f32.mrf.mxu0
    %2091 = vmatprep.mubr.f32.mxu0 0.0
    %2092 = vmatmul.mubr.f32.gmra.mxu0 %v2020
    %v2093 = vpop.f32.mrf.mxu0
    %v2094 = vadd.f32 0.0, %v2093
    %v2095 = vpop.f32.mrf.mxu0
    %2096 = vdwg.mxu0
    %s2097 = scalar_lea.vmem %s4, 40
    %v2098 = vld [vmem:[%s2097] sm:$0xff]
    %v2100 = vsel %vm157, %v2089, 0
    %v2103 = vsel %vm157, %v2094, 0
    %2105 = vmatprep.subr.mxu0 0.0
    %2106 = vmatpush1.msra.mxu0 0.0
    %2107 = vmatprep.subr.mxu0 0.0
    %2108 = vmatpush1.msra.mxu0 0.0
    %2109 = vmatprep.subr.mxu0 0.0
    %2110 = vmatpush1.msra.mxu0 0.0
    %2111 = vmatprep.subr.mxu0 0.0
    %2112 = vmatpush1.msra.mxu0 0.0
    %2113 = vmatprep.subr.mxu0 0.0
    %2114 = vmatpush1.msra.mxu0 0.0
    %2115 = vmatprep.subr.mxu0 0.0
    %2116 = vmatpush1.msra.mxu0 0.0
    %2117 = vmatprep.subr.mxu0 0.0
    %2118 = vmatpush1.msra.mxu0 0.0
    %2119 = vmatprep.subr.mxu0 0.0
    %2120 = vmatpush1.msra.mxu0 0.0
    %2121 = vmatprep.subr.mxu0 0.0
    %2122 = vmatpush1.msra.mxu0 0.0
    %2123 = vmatprep.subr.mxu0 0.0
    %2124 = vmatpush1.msra.mxu0 0.0
    %2125 = vmatprep.subr.mxu0 0.0
    %2126 = vmatpush1.msra.mxu0 0.0
    %2127 = vmatprep.subr.mxu0 0.0
    %2128 = vmatpush1.msra.mxu0 0.0
    %2129 = vmatprep.subr.mxu0 0.0
    %2130 = vmatpush1.msra.mxu0 0.0
    %2131 = vmatprep.subr.mxu0 0.0
    %2132 = vmatpush1.msra.mxu0 0.0
    %2133 = vmatprep.subr.mxu0 0.0
    %2134 = vmatpush1.msra.mxu0 0.0
    %2135 = vmatprep.subr.mxu0 0.0
    %2136 = vmatpush1.msra.mxu0 %v2098
    %2137 = vmatprep.subr.mxu0 0.0
    %2138 = vmatpush2.msra.mxu0 0.0
    %2139 = vmatprep.subr.mxu0 0.0
    %2140 = vmatpush2.msra.mxu0 0.0
    %2141 = vmatprep.subr.mxu0 0.0
    %2142 = vmatpush2.msra.mxu0 0.0
    %2143 = vmatprep.subr.mxu0 0.0
    %2144 = vmatpush2.msra.mxu0 0.0
    %2145 = vmatprep.subr.mxu0 0.0
    %2146 = vmatpush2.msra.mxu0 0.0
    %2147 = vmatprep.subr.mxu0 0.0
    %2148 = vmatpush2.msra.mxu0 0.0
    %2149 = vmatprep.subr.mxu0 0.0
    %2150 = vmatpush2.msra.mxu0 0.0
    %2151 = vmatprep.subr.mxu0 0.0
    %2152 = vmatpush2.msra.mxu0 0.0
    %2153 = vmatprep.subr.mxu0 0.0
    %2154 = vmatpush2.msra.mxu0 0.0
    %2155 = vmatprep.subr.mxu0 0.0
    %2156 = vmatpush2.msra.mxu0 0.0
    %2157 = vmatprep.subr.mxu0 0.0
    %2158 = vmatpush2.msra.mxu0 0.0
    %2159 = vmatprep.subr.mxu0 0.0
    %2160 = vmatpush2.msra.mxu0 0.0
    %2161 = vmatprep.subr.mxu0 0.0
    %2162 = vmatpush2.msra.mxu0 0.0
    %2163 = vmatprep.subr.mxu0 0.0
    %2164 = vmatpush2.msra.mxu0 0.0
    %2165 = vmatprep.subr.mxu0 0.0
    %2166 = vmatpush2.msra.mxu0 0.0
    %2167 = vmatprep.subr.mxu0 0.0
    %2168 = vmatpush2.msra.mxu0 0.0
    %2169 = vmatprep.mubr.f32.mxu0 0.0
    %2170 = vmatmul.mubr.f32.gmra.mxu0 %v2100
    %v2171 = vpop.f32.mrf.mxu0
    %v2172 = vadd.f32 0.0, %v2171
    %v2173 = vpop.f32.mrf.mxu0
    %2174 = vmatprep.mubr.f32.mxu0 0.0
    %2175 = vmatmul.mubr.f32.gmra.mxu0 %v2103
    %v2176 = vpop.f32.mrf.mxu0
    %v2177 = vadd.f32 0.0, %v2176
    %v2178 = vpop.f32.mrf.mxu0
    %2179 = vdwg.mxu0
    %v2181 = vsel %vm157, %v1883, 0
    %v2184 = vsel %vm157, %v1888, 0
    %2186 = vmatprep.subr.mxu0 0.0
    %2187 = vmatpush1.msra.mxu0 0.0
    %2188 = vmatprep.subr.mxu0 0.0
    %2189 = vmatpush1.msra.mxu0 0.0
    %2190 = vmatprep.subr.mxu0 0.0
    %2191 = vmatpush1.msra.mxu0 0.0
    %2192 = vmatprep.subr.mxu0 0.0
    %2193 = vmatpush1.msra.mxu0 0.0
    %2194 = vmatprep.subr.mxu0 0.0
    %2195 = vmatpush1.msra.mxu0 0.0
    %2196 = vmatprep.subr.mxu0 0.0
    %2197 = vmatpush1.msra.mxu0 0.0
    %2198 = vmatprep.subr.mxu0 0.0
    %2199 = vmatpush1.msra.mxu0 0.0
    %2200 = vmatprep.subr.mxu0 0.0
    %2201 = vmatpush1.msra.mxu0 0.0
    %2202 = vmatprep.subr.mxu0 0.0
    %2203 = vmatpush1.msra.mxu0 0.0
    %2204 = vmatprep.subr.mxu0 0.0
    %2205 = vmatpush1.msra.mxu0 0.0
    %2206 = vmatprep.subr.mxu0 0.0
    %2207 = vmatpush1.msra.mxu0 0.0
    %2208 = vmatprep.subr.mxu0 0.0
    %2209 = vmatpush1.msra.mxu0 0.0
    %2210 = vmatprep.subr.mxu0 0.0
    %2211 = vmatpush1.msra.mxu0 0.0
    %2212 = vmatprep.subr.mxu0 0.0
    %2213 = vmatpush1.msra.mxu0 0.0
    %2214 = vmatprep.subr.mxu0 0.0
    %2215 = vmatpush1.msra.mxu0 0.0
    %2216 = vmatprep.subr.mxu0 0.0
    %2217 = vmatpush1.msra.mxu0 %v1892
    %2218 = vmatprep.subr.mxu0 0.0
    %2219 = vmatpush2.msra.mxu0 0.0
    %2220 = vmatprep.subr.mxu0 0.0
    %2221 = vmatpush2.msra.mxu0 0.0
    %2222 = vmatprep.subr.mxu0 0.0
    %2223 = vmatpush2.msra.mxu0 0.0
    %2224 = vmatprep.subr.mxu0 0.0
    %2225 = vmatpush2.msra.mxu0 0.0
    %2226 = vmatprep.subr.mxu0 0.0
    %2227 = vmatpush2.msra.mxu0 0.0
    %2228 = vmatprep.subr.mxu0 0.0
    %2229 = vmatpush2.msra.mxu0 0.0
    %2230 = vmatprep.subr.mxu0 0.0
    %2231 = vmatpush2.msra.mxu0 0.0
    %2232 = vmatprep.subr.mxu0 0.0
    %2233 = vmatpush2.msra.mxu0 0.0
    %2234 = vmatprep.subr.mxu0 0.0
    %2235 = vmatpush2.msra.mxu0 0.0
    %2236 = vmatprep.subr.mxu0 0.0
    %2237 = vmatpush2.msra.mxu0 0.0
    %2238 = vmatprep.subr.mxu0 0.0
    %2239 = vmatpush2.msra.mxu0 0.0
    %2240 = vmatprep.subr.mxu0 0.0
    %2241 = vmatpush2.msra.mxu0 0.0
    %2242 = vmatprep.subr.mxu0 0.0
    %2243 = vmatpush2.msra.mxu0 0.0
    %2244 = vmatprep.subr.mxu0 0.0
    %2245 = vmatpush2.msra.mxu0 0.0
    %2246 = vmatprep.subr.mxu0 0.0
    %2247 = vmatpush2.msra.mxu0 0.0
    %2248 = vmatprep.subr.mxu0 0.0
    %2249 = vmatpush2.msra.mxu0 0.0
    %2250 = vmatprep.mubr.f32.mxu0 0.0
    %2251 = vmatmul.mubr.f32.gmra.mxu0 %v2181
    %v2252 = vpop.f32.mrf.mxu0
    %v2253 = vadd.f32 %v2172, %v2252
    %v2254 = vpop.f32.mrf.mxu0
    %2255 = vmatprep.mubr.f32.mxu0 0.0
    %2256 = vmatmul.mubr.f32.gmra.mxu0 %v2184
    %v2257 = vpop.f32.mrf.mxu0
    %v2258 = vadd.f32 %v2177, %v2257
    %v2259 = vpop.f32.mrf.mxu0
    %2260 = vdwg.mxu0
    %2261 = vrot.lane.b32.xlu0 %v1681, 112
    %v2262 = vpop.permute.xlu0 %2261
    %2263 = vrot.lane.b32.xlu0 %v1686, 112
    %v2264 = vpop.permute.xlu0 %2263
    %2265 = vrot.lane.b32.xlu0 %v1681, 80
    %v2266 = vpop.permute.xlu0 %2265
    %2267 = vrot.lane.b32.xlu0 %v1686, 80
    %v2268 = vpop.permute.xlu0 %2267
    %v2269 = vsel %vm157, %v2262, 0
    %v2271 = vsel %vm157, %v2264, 0
    %v2273 = vsel %vm157, %v2266, 0
    %v2275 = vsel %vm157, %v2268, 0
    %2277 = vmatprep.subr.mxu0 0.0
    %2278 = vmatpush1.xpose.msra.mxu0 0.0
    %2279 = vmatprep.subr.mxu0 0.0
    %2280 = vmatpush1.xpose.msra.mxu0 0.0
    %2281 = vmatprep.subr.mxu0 0.0
    %2282 = vmatpush1.xpose.msra.mxu0 0.0
    %2283 = vmatprep.subr.mxu0 0.0
    %2284 = vmatpush1.xpose.msra.mxu0 0.0
    %2285 = vmatprep.subr.mxu0 0.0
    %2286 = vmatpush1.xpose.msra.mxu0 0.0
    %2287 = vmatprep.subr.mxu0 0.0
    %2288 = vmatpush1.xpose.msra.mxu0 0.0
    %2289 = vmatprep.subr.mxu0 0.0
    %2290 = vmatpush1.xpose.msra.mxu0 0.0
    %2291 = vmatprep.subr.mxu0 0.0
    %2292 = vmatpush1.xpose.msra.mxu0 0.0
    %2293 = vmatprep.subr.mxu0 0.0
    %2294 = vmatpush1.xpose.msra.mxu0 0.0
    %2295 = vmatprep.subr.mxu0 0.0
    %2296 = vmatpush1.xpose.msra.mxu0 0.0
    %2297 = vmatprep.subr.mxu0 0.0
    %2298 = vmatpush1.xpose.msra.mxu0 0.0
    %2299 = vmatprep.subr.mxu0 0.0
    %2300 = vmatpush1.xpose.msra.mxu0 0.0
    %2301 = vmatprep.subr.mxu0 0.0
    %2302 = vmatpush1.xpose.msra.mxu0 0.0
    %2303 = vmatprep.subr.mxu0 0.0
    %2304 = vmatpush1.xpose.msra.mxu0 0.0
    %2305 = vmatprep.subr.mxu0 0.0
    %2306 = vmatpush1.xpose.msra.mxu0 %v2275
    %2307 = vmatprep.subr.mxu0 0.0
    %2308 = vmatpush1.xpose.msra.mxu0 %v2273
    %2309 = vmatprep.subr.mxu0 0.0
    %2310 = vmatpush2.xpose.msra.mxu0 0.0
    %2311 = vmatprep.subr.mxu0 0.0
    %2312 = vmatpush2.xpose.msra.mxu0 0.0
    %2313 = vmatprep.subr.mxu0 0.0
    %2314 = vmatpush2.xpose.msra.mxu0 0.0
    %2315 = vmatprep.subr.mxu0 0.0
    %2316 = vmatpush2.xpose.msra.mxu0 0.0
    %2317 = vmatprep.subr.mxu0 0.0
    %2318 = vmatpush2.xpose.msra.mxu0 0.0
    %2319 = vmatprep.subr.mxu0 0.0
    %2320 = vmatpush2.xpose.msra.mxu0 0.0
    %2321 = vmatprep.subr.mxu0 0.0
    %2322 = vmatpush2.xpose.msra.mxu0 0.0
    %2323 = vmatprep.subr.mxu0 0.0
    %2324 = vmatpush2.xpose.msra.mxu0 0.0
    %2325 = vmatprep.subr.mxu0 0.0
    %2326 = vmatpush2.xpose.msra.mxu0 0.0
    %2327 = vmatprep.subr.mxu0 0.0
    %2328 = vmatpush2.xpose.msra.mxu0 0.0
    %2329 = vmatprep.subr.mxu0 0.0
    %2330 = vmatpush2.xpose.msra.mxu0 0.0
    %2331 = vmatprep.subr.mxu0 0.0
    %2332 = vmatpush2.xpose.msra.mxu0 0.0
    %2333 = vmatprep.subr.mxu0 0.0
    %2334 = vmatpush2.xpose.msra.mxu0 0.0
    %2335 = vmatprep.subr.mxu0 0.0
    %2336 = vmatpush2.xpose.msra.mxu0 0.0
    %2337 = vmatprep.subr.mxu0 0.0
    %2338 = vmatpush2.xpose.msra.mxu0 0.0
    %2339 = vmatprep.subr.mxu0 0.0
    %2340 = vmatpush2.xpose.msra.mxu0 0.0
    %2341 = vmatprep.mubr.f32.mxu0 0.0
    %2342 = vmatmul.mubr.f32.gmra.mxu0 %v2269
    %v2343 = vpop.f32.mrf.mxu0
    %v2344 = vadd.f32 0.0, %v2343
    %v2345 = vpop.f32.mrf.mxu0
    %2346 = vmatprep.mubr.f32.mxu0 0.0
    %2347 = vmatmul.mubr.f32.gmra.mxu0 %v2271
    %v2348 = vpop.f32.mrf.mxu0
    %v2349 = vadd.f32 0.0, %v2348
    %v2350 = vpop.f32.mrf.mxu0
    %2351 = vdwg.mxu0
    %v2352 = vmul.f32 %v2344, 0.35355338
    %v2353 = vmul.f32 %v2349, 0.35355338
    %v2354 = vadd.f32 %v2352, %v56
    %v2355 = vadd.f32 %v2353, %v57
    %v2356 = vsel %vm245, %v2354, -inf
    %2357 = vmax.xlane.f32.xlu0 %v2356
    %v2358 = vpop.xlane.xlu0 %2357
    %v2359 = vsel %vm245, %v2355, -inf
    %2360 = vmax.xlane.f32.xlu0 %v2359
    %v2361 = vpop.xlane.xlu0 %2360
    %v2362 = vsub.f32 %v2354, %v2358
    %v2363 = vsub.f32 %v2355, %v2361
    %v2364 = vmul.f32 %v2362, 1.442695
    %v2365 = vpow.pop %v2364
    %v2366 = vmul.f32 %v2363, 1.442695
    %v2367 = vpow.pop %v2366
    %v2368 = vsel %vm245, %v2365, 0.0
    %2369 = vadd.xlane.f32.xlu0 %v2368
    %v2370 = vpop.xlane.xlu0 %2369
    %v2371 = vsel %vm245, %v2367, 0.0
    %2372 = vadd.xlane.f32.xlu0 %v2371
    %v2373 = vpop.xlane.xlu0 %2372
    %v2374 = vrcp.pop %v2370
    %v2375 = vrcp.pop %v2373
    %v2376 = vmul.f32 %v2365, %v2374
    %v2377 = vmul.f32 %v2367, %v2375
    %2378 = vrot.lane.b32.xlu0 %v1681, 48
    %v2379 = vpop.permute.xlu0 %2378
    %2380 = vrot.lane.b32.xlu0 %v1686, 48
    %v2381 = vpop.permute.xlu0 %2380
    %v2385 = vsel %vm245, %v2376, 0
    %v2388 = vsel %vm245, %v2377, 0
    %2390 = vmatprep.subr.mxu0 0.0
    %2391 = vmatpush1.msra.mxu0 0.0
    %2392 = vmatprep.subr.mxu0 0.0
    %2393 = vmatpush1.msra.mxu0 0.0
    %2394 = vmatprep.subr.mxu0 0.0
    %2395 = vmatpush1.msra.mxu0 0.0
    %2396 = vmatprep.subr.mxu0 0.0
    %2397 = vmatpush1.msra.mxu0 0.0
    %2398 = vmatprep.subr.mxu0 0.0
    %2399 = vmatpush1.msra.mxu0 0.0
    %2400 = vmatprep.subr.mxu0 0.0
    %2401 = vmatpush1.msra.mxu0 0.0
    %2402 = vmatprep.subr.mxu0 0.0
    %2403 = vmatpush1.msra.mxu0 0.0
    %2404 = vmatprep.subr.mxu0 0.0
    %2405 = vmatpush1.msra.mxu0 0.0
    %2406 = vmatprep.subr.mxu0 0.0
    %2407 = vmatpush1.msra.mxu0 0.0
    %2408 = vmatprep.subr.mxu0 0.0
    %2409 = vmatpush1.msra.mxu0 0.0
    %2410 = vmatprep.subr.mxu0 0.0
    %2411 = vmatpush1.msra.mxu0 0.0
    %2412 = vmatprep.subr.mxu0 0.0
    %2413 = vmatpush1.msra.mxu0 0.0
    %2414 = vmatprep.subr.mxu0 0.0
    %2415 = vmatpush1.msra.mxu0 0.0
    %2416 = vmatprep.subr.mxu0 0.0
    %2417 = vmatpush1.msra.mxu0 0.0
    %2418 = vmatprep.subr.mxu0 0.0
    %2419 = vmatpush1.msra.mxu0 %v2381
    %2420 = vmatprep.subr.mxu0 0.0
    %2421 = vmatpush1.msra.mxu0 %v2379
    %2422 = vmatprep.subr.mxu0 0.0
    %2423 = vmatpush2.msra.mxu0 0.0
    %2424 = vmatprep.subr.mxu0 0.0
    %2425 = vmatpush2.msra.mxu0 0.0
    %2426 = vmatprep.subr.mxu0 0.0
    %2427 = vmatpush2.msra.mxu0 0.0
    %2428 = vmatprep.subr.mxu0 0.0
    %2429 = vmatpush2.msra.mxu0 0.0
    %2430 = vmatprep.subr.mxu0 0.0
    %2431 = vmatpush2.msra.mxu0 0.0
    %2432 = vmatprep.subr.mxu0 0.0
    %2433 = vmatpush2.msra.mxu0 0.0
    %2434 = vmatprep.subr.mxu0 0.0
    %2435 = vmatpush2.msra.mxu0 0.0
    %2436 = vmatprep.subr.mxu0 0.0
    %2437 = vmatpush2.msra.mxu0 0.0
    %2438 = vmatprep.subr.mxu0 0.0
    %2439 = vmatpush2.msra.mxu0 0.0
    %2440 = vmatprep.subr.mxu0 0.0
    %2441 = vmatpush2.msra.mxu0 0.0
    %2442 = vmatprep.subr.mxu0 0.0
    %2443 = vmatpush2.msra.mxu0 0.0
    %2444 = vmatprep.subr.mxu0 0.0
    %2445 = vmatpush2.msra.mxu0 0.0
    %2446 = vmatprep.subr.mxu0 0.0
    %2447 = vmatpush2.msra.mxu0 0.0
    %2448 = vmatprep.subr.mxu0 0.0
    %2449 = vmatpush2.msra.mxu0 0.0
    %2450 = vmatprep.subr.mxu0 0.0
    %2451 = vmatpush2.msra.mxu0 0.0
    %2452 = vmatprep.subr.mxu0 0.0
    %2453 = vmatpush2.msra.mxu0 0.0
    %2454 = vmatprep.mubr.f32.mxu0 0.0
    %2455 = vmatmul.mubr.f32.gmra.mxu0 %v2385
    %v2456 = vpop.f32.mrf.mxu0
    %v2457 = vadd.f32 0.0, %v2456
    %v2458 = vpop.f32.mrf.mxu0
    %2459 = vmatprep.mubr.f32.mxu0 0.0
    %2460 = vmatmul.mubr.f32.gmra.mxu0 %v2388
    %v2461 = vpop.f32.mrf.mxu0
    %v2462 = vadd.f32 0.0, %v2461
    %v2463 = vpop.f32.mrf.mxu0
    %2464 = vdwg.mxu0
    %s2465 = scalar_lea.vmem %s4, 48
    %v2466 = vld [vmem:[%s2465] sm:$0xff]
    %v2468 = vsel %vm157, %v2457, 0
    %v2471 = vsel %vm157, %v2462, 0
    %2473 = vmatprep.subr.mxu0 0.0
    %2474 = vmatpush1.msra.mxu0 0.0
    %2475 = vmatprep.subr.mxu0 0.0
    %2476 = vmatpush1.msra.mxu0 0.0
    %2477 = vmatprep.subr.mxu0 0.0
    %2478 = vmatpush1.msra.mxu0 0.0
    %2479 = vmatprep.subr.mxu0 0.0
    %2480 = vmatpush1.msra.mxu0 0.0
    %2481 = vmatprep.subr.mxu0 0.0
    %2482 = vmatpush1.msra.mxu0 0.0
    %2483 = vmatprep.subr.mxu0 0.0
    %2484 = vmatpush1.msra.mxu0 0.0
    %2485 = vmatprep.subr.mxu0 0.0
    %2486 = vmatpush1.msra.mxu0 0.0
    %2487 = vmatprep.subr.mxu0 0.0
    %2488 = vmatpush1.msra.mxu0 0.0
    %2489 = vmatprep.subr.mxu0 0.0
    %2490 = vmatpush1.msra.mxu0 0.0
    %2491 = vmatprep.subr.mxu0 0.0
    %2492 = vmatpush1.msra.mxu0 0.0
    %2493 = vmatprep.subr.mxu0 0.0
    %2494 = vmatpush1.msra.mxu0 0.0
    %2495 = vmatprep.subr.mxu0 0.0
    %2496 = vmatpush1.msra.mxu0 0.0
    %2497 = vmatprep.subr.mxu0 0.0
    %2498 = vmatpush1.msra.mxu0 0.0
    %2499 = vmatprep.subr.mxu0 0.0
    %2500 = vmatpush1.msra.mxu0 0.0
    %2501 = vmatprep.subr.mxu0 0.0
    %2502 = vmatpush1.msra.mxu0 0.0
    %2503 = vmatprep.subr.mxu0 0.0
    %2504 = vmatpush1.msra.mxu0 %v2466
    %2505 = vmatprep.subr.mxu0 0.0
    %2506 = vmatpush2.msra.mxu0 0.0
    %2507 = vmatprep.subr.mxu0 0.0
    %2508 = vmatpush2.msra.mxu0 0.0
    %2509 = vmatprep.subr.mxu0 0.0
    %2510 = vmatpush2.msra.mxu0 0.0
    %2511 = vmatprep.subr.mxu0 0.0
    %2512 = vmatpush2.msra.mxu0 0.0
    %2513 = vmatprep.subr.mxu0 0.0
    %2514 = vmatpush2.msra.mxu0 0.0
    %2515 = vmatprep.subr.mxu0 0.0
    %2516 = vmatpush2.msra.mxu0 0.0
    %2517 = vmatprep.subr.mxu0 0.0
    %2518 = vmatpush2.msra.mxu0 0.0
    %2519 = vmatprep.subr.mxu0 0.0
    %2520 = vmatpush2.msra.mxu0 0.0
    %2521 = vmatprep.subr.mxu0 0.0
    %2522 = vmatpush2.msra.mxu0 0.0
    %2523 = vmatprep.subr.mxu0 0.0
    %2524 = vmatpush2.msra.mxu0 0.0
    %2525 = vmatprep.subr.mxu0 0.0
    %2526 = vmatpush2.msra.mxu0 0.0
    %2527 = vmatprep.subr.mxu0 0.0
    %2528 = vmatpush2.msra.mxu0 0.0
    %2529 = vmatprep.subr.mxu0 0.0
    %2530 = vmatpush2.msra.mxu0 0.0
    %2531 = vmatprep.subr.mxu0 0.0
    %2532 = vmatpush2.msra.mxu0 0.0
    %2533 = vmatprep.subr.mxu0 0.0
    %2534 = vmatpush2.msra.mxu0 0.0
    %2535 = vmatprep.subr.mxu0 0.0
    %2536 = vmatpush2.msra.mxu0 0.0
    %2537 = vmatprep.mubr.f32.mxu0 0.0
    %2538 = vmatmul.mubr.f32.gmra.mxu0 %v2468
    %v2539 = vpop.f32.mrf.mxu0
    %v2540 = vadd.f32 0.0, %v2539
    %v2541 = vpop.f32.mrf.mxu0
    %2542 = vmatprep.mubr.f32.mxu0 0.0
    %2543 = vmatmul.mubr.f32.gmra.mxu0 %v2471
    %v2544 = vpop.f32.mrf.mxu0
    %v2545 = vadd.f32 0.0, %v2544
    %v2546 = vpop.f32.mrf.mxu0
    %2547 = vdwg.mxu0
    %v2548 = vadd.f32 %v2253, %v2540
    %v2549 = vadd.f32 %v2258, %v2545
    %2550 = vrot.lane.b32.xlu0 %v1681, 104
    %v2551 = vpop.permute.xlu0 %2550
    %2552 = vrot.lane.b32.xlu0 %v1686, 104
    %v2553 = vpop.permute.xlu0 %2552
    %2554 = vrot.lane.b32.xlu0 %v1681, 72
    %v2555 = vpop.permute.xlu0 %2554
    %2556 = vrot.lane.b32.xlu0 %v1686, 72
    %v2557 = vpop.permute.xlu0 %2556
    %v2558 = vsel %vm157, %v2551, 0
    %v2560 = vsel %vm157, %v2553, 0
    %v2562 = vsel %vm157, %v2555, 0
    %v2564 = vsel %vm157, %v2557, 0
    %2566 = vmatprep.subr.mxu0 0.0
    %2567 = vmatpush1.xpose.msra.mxu0 0.0
    %2568 = vmatprep.subr.mxu0 0.0
    %2569 = vmatpush1.xpose.msra.mxu0 0.0
    %2570 = vmatprep.subr.mxu0 0.0
    %2571 = vmatpush1.xpose.msra.mxu0 0.0
    %2572 = vmatprep.subr.mxu0 0.0
    %2573 = vmatpush1.xpose.msra.mxu0 0.0
    %2574 = vmatprep.subr.mxu0 0.0
    %2575 = vmatpush1.xpose.msra.mxu0 0.0
    %2576 = vmatprep.subr.mxu0 0.0
    %2577 = vmatpush1.xpose.msra.mxu0 0.0
    %2578 = vmatprep.subr.mxu0 0.0
    %2579 = vmatpush1.xpose.msra.mxu0 0.0
    %2580 = vmatprep.subr.mxu0 0.0
    %2581 = vmatpush1.xpose.msra.mxu0 0.0
    %2582 = vmatprep.subr.mxu0 0.0
    %2583 = vmatpush1.xpose.msra.mxu0 0.0
    %2584 = vmatprep.subr.mxu0 0.0
    %2585 = vmatpush1.xpose.msra.mxu0 0.0
    %2586 = vmatprep.subr.mxu0 0.0
    %2587 = vmatpush1.xpose.msra.mxu0 0.0
    %2588 = vmatprep.subr.mxu0 0.0
    %2589 = vmatpush1.xpose.msra.mxu0 0.0
    %2590 = vmatprep.subr.mxu0 0.0
    %2591 = vmatpush1.xpose.msra.mxu0 0.0
    %2592 = vmatprep.subr.mxu0 0.0
    %2593 = vmatpush1.xpose.msra.mxu0 0.0
    %2594 = vmatprep.subr.mxu0 0.0
    %2595 = vmatpush1.xpose.msra.mxu0 %v2564
    %2596 = vmatprep.subr.mxu0 0.0
    %2597 = vmatpush1.xpose.msra.mxu0 %v2562
    %2598 = vmatprep.subr.mxu0 0.0
    %2599 = vmatpush2.xpose.msra.mxu0 0.0
    %2600 = vmatprep.subr.mxu0 0.0
    %2601 = vmatpush2.xpose.msra.mxu0 0.0
    %2602 = vmatprep.subr.mxu0 0.0
    %2603 = vmatpush2.xpose.msra.mxu0 0.0
    %2604 = vmatprep.subr.mxu0 0.0
    %2605 = vmatpush2.xpose.msra.mxu0 0.0
    %2606 = vmatprep.subr.mxu0 0.0
    %2607 = vmatpush2.xpose.msra.mxu0 0.0
    %2608 = vmatprep.subr.mxu0 0.0
    %2609 = vmatpush2.xpose.msra.mxu0 0.0
    %2610 = vmatprep.subr.mxu0 0.0
    %2611 = vmatpush2.xpose.msra.mxu0 0.0
    %2612 = vmatprep.subr.mxu0 0.0
    %2613 = vmatpush2.xpose.msra.mxu0 0.0
    %2614 = vmatprep.subr.mxu0 0.0
    %2615 = vmatpush2.xpose.msra.mxu0 0.0
    %2616 = vmatprep.subr.mxu0 0.0
    %2617 = vmatpush2.xpose.msra.mxu0 0.0
    %2618 = vmatprep.subr.mxu0 0.0
    %2619 = vmatpush2.xpose.msra.mxu0 0.0
    %2620 = vmatprep.subr.mxu0 0.0
    %2621 = vmatpush2.xpose.msra.mxu0 0.0
    %2622 = vmatprep.subr.mxu0 0.0
    %2623 = vmatpush2.xpose.msra.mxu0 0.0
    %2624 = vmatprep.subr.mxu0 0.0
    %2625 = vmatpush2.xpose.msra.mxu0 0.0
    %2626 = vmatprep.subr.mxu0 0.0
    %2627 = vmatpush2.xpose.msra.mxu0 0.0
    %2628 = vmatprep.subr.mxu0 0.0
    %2629 = vmatpush2.xpose.msra.mxu0 0.0
    %2630 = vmatprep.mubr.f32.mxu0 0.0
    %2631 = vmatmul.mubr.f32.gmra.mxu0 %v2558
    %v2632 = vpop.f32.mrf.mxu0
    %v2633 = vadd.f32 0.0, %v2632
    %v2634 = vpop.f32.mrf.mxu0
    %2635 = vmatprep.mubr.f32.mxu0 0.0
    %2636 = vmatmul.mubr.f32.gmra.mxu0 %v2560
    %v2637 = vpop.f32.mrf.mxu0
    %v2638 = vadd.f32 0.0, %v2637
    %v2639 = vpop.f32.mrf.mxu0
    %2640 = vdwg.mxu0
    %v2641 = vmul.f32 %v2633, 0.35355338
    %v2642 = vmul.f32 %v2638, 0.35355338
    %v2643 = vadd.f32 %v2641, %v56
    %v2644 = vadd.f32 %v2642, %v57
    %v2645 = vsel %vm245, %v2643, -inf
    %2646 = vmax.xlane.f32.xlu0 %v2645
    %v2647 = vpop.xlane.xlu0 %2646
    %v2648 = vsel %vm245, %v2644, -inf
    %2649 = vmax.xlane.f32.xlu0 %v2648
    %v2650 = vpop.xlane.xlu0 %2649
    %v2651 = vsub.f32 %v2643, %v2647
    %v2652 = vsub.f32 %v2644, %v2650
    %v2653 = vmul.f32 %v2651, 1.442695
    %v2654 = vpow.pop %v2653
    %v2655 = vmul.f32 %v2652, 1.442695
    %v2656 = vpow.pop %v2655
    %v2657 = vsel %vm245, %v2654, 0.0
    %2658 = vadd.xlane.f32.xlu0 %v2657
    %v2659 = vpop.xlane.xlu0 %2658
    %v2660 = vsel %vm245, %v2656, 0.0
    %2661 = vadd.xlane.f32.xlu0 %v2660
    %v2662 = vpop.xlane.xlu0 %2661
    %v2663 = vrcp.pop %v2659
    %v2664 = vrcp.pop %v2662
    %v2665 = vmul.f32 %v2654, %v2663
    %v2666 = vmul.f32 %v2656, %v2664
    %2667 = vrot.lane.b32.xlu0 %v1681, 40
    %v2668 = vpop.permute.xlu0 %2667
    %2669 = vrot.lane.b32.xlu0 %v1686, 40
    %v2670 = vpop.permute.xlu0 %2669
    %v2674 = vsel %vm245, %v2665, 0
    %v2677 = vsel %vm245, %v2666, 0
    %2679 = vmatprep.subr.mxu0 0.0
    %2680 = vmatpush1.msra.mxu0 0.0
    %2681 = vmatprep.subr.mxu0 0.0
    %2682 = vmatpush1.msra.mxu0 0.0
    %2683 = vmatprep.subr.mxu0 0.0
    %2684 = vmatpush1.msra.mxu0 0.0
    %2685 = vmatprep.subr.mxu0 0.0
    %2686 = vmatpush1.msra.mxu0 0.0
    %2687 = vmatprep.subr.mxu0 0.0
    %2688 = vmatpush1.msra.mxu0 0.0
    %2689 = vmatprep.subr.mxu0 0.0
    %2690 = vmatpush1.msra.mxu0 0.0
    %2691 = vmatprep.subr.mxu0 0.0
    %2692 = vmatpush1.msra.mxu0 0.0
    %2693 = vmatprep.subr.mxu0 0.0
    %2694 = vmatpush1.msra.mxu0 0.0
    %2695 = vmatprep.subr.mxu0 0.0
    %2696 = vmatpush1.msra.mxu0 0.0
    %2697 = vmatprep.subr.mxu0 0.0
    %2698 = vmatpush1.msra.mxu0 0.0
    %2699 = vmatprep.subr.mxu0 0.0
    %2700 = vmatpush1.msra.mxu0 0.0
    %2701 = vmatprep.subr.mxu0 0.0
    %2702 = vmatpush1.msra.mxu0 0.0
    %2703 = vmatprep.subr.mxu0 0.0
    %2704 = vmatpush1.msra.mxu0 0.0
    %2705 = vmatprep.subr.mxu0 0.0
    %2706 = vmatpush1.msra.mxu0 0.0
    %2707 = vmatprep.subr.mxu0 0.0
    %2708 = vmatpush1.msra.mxu0 %v2670
    %2709 = vmatprep.subr.mxu0 0.0
    %2710 = vmatpush1.msra.mxu0 %v2668
    %2711 = vmatprep.subr.mxu0 0.0
    %2712 = vmatpush2.msra.mxu0 0.0
    %2713 = vmatprep.subr.mxu0 0.0
    %2714 = vmatpush2.msra.mxu0 0.0
    %2715 = vmatprep.subr.mxu0 0.0
    %2716 = vmatpush2.msra.mxu0 0.0
    %2717 = vmatprep.subr.mxu0 0.0
    %2718 = vmatpush2.msra.mxu0 0.0
    %2719 = vmatprep.subr.mxu0 0.0
    %2720 = vmatpush2.msra.mxu0 0.0
    %2721 = vmatprep.subr.mxu0 0.0
    %2722 = vmatpush2.msra.mxu0 0.0
    %2723 = vmatprep.subr.mxu0 0.0
    %2724 = vmatpush2.msra.mxu0 0.0
    %2725 = vmatprep.subr.mxu0 0.0
    %2726 = vmatpush2.msra.mxu0 0.0
    %2727 = vmatprep.subr.mxu0 0.0
    %2728 = vmatpush2.msra.mxu0 0.0
    %2729 = vmatprep.subr.mxu0 0.0
    %2730 = vmatpush2.msra.mxu0 0.0
    %2731 = vmatprep.subr.mxu0 0.0
    %2732 = vmatpush2.msra.mxu0 0.0
    %2733 = vmatprep.subr.mxu0 0.0
    %2734 = vmatpush2.msra.mxu0 0.0
    %2735 = vmatprep.subr.mxu0 0.0
    %2736 = vmatpush2.msra.mxu0 0.0
    %2737 = vmatprep.subr.mxu0 0.0
    %2738 = vmatpush2.msra.mxu0 0.0
    %2739 = vmatprep.subr.mxu0 0.0
    %2740 = vmatpush2.msra.mxu0 0.0
    %2741 = vmatprep.subr.mxu0 0.0
    %2742 = vmatpush2.msra.mxu0 0.0
    %2743 = vmatprep.mubr.f32.mxu0 0.0
    %2744 = vmatmul.mubr.f32.gmra.mxu0 %v2674
    %v2745 = vpop.f32.mrf.mxu0
    %v2746 = vadd.f32 0.0, %v2745
    %v2747 = vpop.f32.mrf.mxu0
    %2748 = vmatprep.mubr.f32.mxu0 0.0
    %2749 = vmatmul.mubr.f32.gmra.mxu0 %v2677
    %v2750 = vpop.f32.mrf.mxu0
    %v2751 = vadd.f32 0.0, %v2750
    %v2752 = vpop.f32.mrf.mxu0
    %2753 = vdwg.mxu0
    %s2754 = scalar_lea.vmem %s4, 56
    %v2755 = vld [vmem:[%s2754] sm:$0xff]
    %v2757 = vsel %vm157, %v2746, 0
    %v2760 = vsel %vm157, %v2751, 0
    %2762 = vmatprep.subr.mxu0 0.0
    %2763 = vmatpush1.msra.mxu0 0.0
    %2764 = vmatprep.subr.mxu0 0.0
    %2765 = vmatpush1.msra.mxu0 0.0
    %2766 = vmatprep.subr.mxu0 0.0
    %2767 = vmatpush1.msra.mxu0 0.0
    %2768 = vmatprep.subr.mxu0 0.0
    %2769 = vmatpush1.msra.mxu0 0.0
    %2770 = vmatprep.subr.mxu0 0.0
    %2771 = vmatpush1.msra.mxu0 0.0
    %2772 = vmatprep.subr.mxu0 0.0
    %2773 = vmatpush1.msra.mxu0 0.0
    %2774 = vmatprep.subr.mxu0 0.0
    %2775 = vmatpush1.msra.mxu0 0.0
    %2776 = vmatprep.subr.mxu0 0.0
    %2777 = vmatpush1.msra.mxu0 0.0
    %2778 = vmatprep.subr.mxu0 0.0
    %2779 = vmatpush1.msra.mxu0 0.0
    %2780 = vmatprep.subr.mxu0 0.0
    %2781 = vmatpush1.msra.mxu0 0.0
    %2782 = vmatprep.subr.mxu0 0.0
    %2783 = vmatpush1.msra.mxu0 0.0
    %2784 = vmatprep.subr.mxu0 0.0
    %2785 = vmatpush1.msra.mxu0 0.0
    %2786 = vmatprep.subr.mxu0 0.0
    %2787 = vmatpush1.msra.mxu0 0.0
    %2788 = vmatprep.subr.mxu0 0.0
    %2789 = vmatpush1.msra.mxu0 0.0
    %2790 = vmatprep.subr.mxu0 0.0
    %2791 = vmatpush1.msra.mxu0 0.0
    %2792 = vmatprep.subr.mxu0 0.0
    %2793 = vmatpush1.msra.mxu0 %v2755
    %2794 = vmatprep.subr.mxu0 0.0
    %2795 = vmatpush2.msra.mxu0 0.0
    %2796 = vmatprep.subr.mxu0 0.0
    %2797 = vmatpush2.msra.mxu0 0.0
    %2798 = vmatprep.subr.mxu0 0.0
    %2799 = vmatpush2.msra.mxu0 0.0
    %2800 = vmatprep.subr.mxu0 0.0
    %2801 = vmatpush2.msra.mxu0 0.0
    %2802 = vmatprep.subr.mxu0 0.0
    %2803 = vmatpush2.msra.mxu0 0.0
    %2804 = vmatprep.subr.mxu0 0.0
    %2805 = vmatpush2.msra.mxu0 0.0
    %2806 = vmatprep.subr.mxu0 0.0
    %2807 = vmatpush2.msra.mxu0 0.0
    %2808 = vmatprep.subr.mxu0 0.0
    %2809 = vmatpush2.msra.mxu0 0.0
    %2810 = vmatprep.subr.mxu0 0.0
    %2811 = vmatpush2.msra.mxu0 0.0
    %2812 = vmatprep.subr.mxu0 0.0
    %2813 = vmatpush2.msra.mxu0 0.0
    %2814 = vmatprep.subr.mxu0 0.0
    %2815 = vmatpush2.msra.mxu0 0.0
    %2816 = vmatprep.subr.mxu0 0.0
    %2817 = vmatpush2.msra.mxu0 0.0
    %2818 = vmatprep.subr.mxu0 0.0
    %2819 = vmatpush2.msra.mxu0 0.0
    %2820 = vmatprep.subr.mxu0 0.0
    %2821 = vmatpush2.msra.mxu0 0.0
    %2822 = vmatprep.subr.mxu0 0.0
    %2823 = vmatpush2.msra.mxu0 0.0
    %2824 = vmatprep.subr.mxu0 0.0
    %2825 = vmatpush2.msra.mxu0 0.0
    %2826 = vmatprep.mubr.f32.mxu0 0.0
    %2827 = vmatmul.mubr.f32.gmra.mxu0 %v2757
    %v2828 = vpop.f32.mrf.mxu0
    %v2829 = vadd.f32 0.0, %v2828
    %v2830 = vpop.f32.mrf.mxu0
    %2831 = vmatprep.mubr.f32.mxu0 0.0
    %2832 = vmatmul.mubr.f32.gmra.mxu0 %v2760
    %v2833 = vpop.f32.mrf.mxu0
    %v2834 = vadd.f32 0.0, %v2833
    %v2835 = vpop.f32.mrf.mxu0
    %2836 = vdwg.mxu0
    %v2837 = vadd.f32 %v2548, %v2829
    %v2838 = vadd.f32 %v2549, %v2834
    %s2839 = scalar_lea.vmem %s5, 1
    %v2840 = vld [vmem:[%s2839] sm:$0x1]
    %v2842 = vlaneseq
    %v2843 = vshrl.u32 %v2842, 7
    %v2844 = vsub.s32 0, %v2843
    %v2845 = vrot.slane %v2840, %v2844
    %v2847 = vadd.f32 %v2837, %v2845
    %v2848 = vadd.f32 %v2838, %v2845
    %v2849 = vadd.f32 %v1593, %v2847
    %v2850 = vadd.f32 %v1594, %v2848
    %s2851 = scalar_lea.vmem %s6, 1
    %v2852 = vld [vmem:[%s2851] sm:$0x1]
    %s2853 = scalar_lea.vmem %s7, 1
    %v2854 = vld [vmem:[%s2853] sm:$0x1]
    %v2855 = vsel %vm69, %v2849, 0.0
    %2856 = vadd.xlane.f32.xlu0 %v2855
    %v2857 = vpop.xlane.xlu0 %2856
    %v2858 = vsel %vm69, %v2850, 0.0
    %2859 = vadd.xlane.f32.xlu0 %v2858
    %v2860 = vpop.xlane.xlu0 %2859
    %v2861 = vmul.f32 %v2857, %v1321
    %v2862 = vmul.f32 %v2860, %v1321
    %v2863 = vsub.f32 %v2849, %v2861
    %v2864 = vsub.f32 %v2850, %v2862
    %v2865 = vmul.f32 %v2863, %v2863
    %v2866 = vmul.f32 %v2864, %v2864
    %v2867 = vsel %vm69, %v2865, 0.0
    %2868 = vadd.xlane.f32.xlu0 %v2867
    %v2869 = vpop.xlane.xlu0 %2868
    %v2870 = vsel %vm69, %v2866, 0.0
    %2871 = vadd.xlane.f32.xlu0 %v2870
    %v2872 = vpop.xlane.xlu0 %2871
    %v2873 = vmul.f32 %v2869, %v1321
    %v2874 = vmul.f32 %v2872, %v1321
    %v2875 = vadd.f32 %v2873, 1e-05
    %v2876 = vadd.f32 %v2874, 1e-05
    %v2877 = vrsqrt.pop %v2875
    %v2878 = vrsqrt.pop %v2876
    %v2879 = vmul.f32 %v2863, %v2877
    %v2880 = vmul.f32 %v2864, %v2878
    %v2882 = vlaneseq
    %v2883 = vshrl.u32 %v2882, 7
    %v2884 = vsub.s32 0, %v2883
    %v2885 = vrot.slane %v2852, %v2884
    %v2887 = vmul.f32 %v2879, %v2885
    %v2888 = vmul.f32 %v2880, %v2885
    %v2890 = vlaneseq
    %v2891 = vshrl.u32 %v2890, 7
    %v2892 = vsub.s32 0, %v2891
    %v2893 = vrot.slane %v2854, %v2892
    %v2895 = vadd.f32 %v2887, %v2893
    %v2896 = vadd.f32 %v2888, %v2893
    %s2897 = scalar_lea.vmem %s8, 32
    %v2898 = vld [vmem:[%s2897] sm:$0xff]
    %v2899 = vld [vmem:[%s2897 + $0x8] sm:$0xff]
    %v2900 = vld [vmem:[%s2897 + $0x10] sm:$0xff]
    %v2901 = vld [vmem:[%s2897 + $0x18] sm:$0xff]
    %s2902 = scalar_lea.vmem %s9, 1
    %v2903 = vld [vmem:[%s2902] sm:$0x1]
    %v2905 = vlaneseq
    %v2906 = vshrl.u32 %v2905, 7
    %v2907 = vsub.s32 0, %v2906
    %v2908 = vrot.slane %v2903, %v2907
    %v2911 = vsel %vm69, %v2895, 0
    %v2914 = vsel %vm69, %v2896, 0
    %2916 = vmatprep.subr.mxu0 0.0
    %2917 = vmatpush1.msra.mxu0 0.0
    %2918 = vmatprep.subr.mxu0 0.0
    %2919 = vmatpush1.msra.mxu0 0.0
    %2920 = vmatprep.subr.mxu0 0.0
    %2921 = vmatpush1.msra.mxu0 0.0
    %2922 = vmatprep.subr.mxu0 0.0
    %2923 = vmatpush1.msra.mxu0 0.0
    %2924 = vmatprep.subr.mxu0 0.0
    %2925 = vmatpush1.msra.mxu0 0.0
    %2926 = vmatprep.subr.mxu0 0.0
    %2927 = vmatpush1.msra.mxu0 0.0
    %2928 = vmatprep.subr.mxu0 0.0
    %2929 = vmatpush1.msra.mxu0 0.0
    %2930 = vmatprep.subr.mxu0 0.0
    %2931 = vmatpush1.msra.mxu0 0.0
    %2932 = vmatprep.subr.mxu0 0.0
    %2933 = vmatpush1.msra.mxu0 0.0
    %2934 = vmatprep.subr.mxu0 0.0
    %2935 = vmatpush1.msra.mxu0 0.0
    %2936 = vmatprep.subr.mxu0 0.0
    %2937 = vmatpush1.msra.mxu0 0.0
    %2938 = vmatprep.subr.mxu0 0.0
    %2939 = vmatpush1.msra.mxu0 0.0
    %2940 = vmatprep.subr.mxu0 0.0
    %2941 = vmatpush1.msra.mxu0 %v2901
    %2942 = vmatprep.subr.mxu0 0.0
    %2943 = vmatpush1.msra.mxu0 %v2900
    %2944 = vmatprep.subr.mxu0 0.0
    %2945 = vmatpush1.msra.mxu0 %v2899
    %2946 = vmatprep.subr.mxu0 0.0
    %2947 = vmatpush1.msra.mxu0 %v2898
    %2948 = vmatprep.subr.mxu0 0.0
    %2949 = vmatpush2.msra.mxu0 0.0
    %2950 = vmatprep.subr.mxu0 0.0
    %2951 = vmatpush2.msra.mxu0 0.0
    %2952 = vmatprep.subr.mxu0 0.0
    %2953 = vmatpush2.msra.mxu0 0.0
    %2954 = vmatprep.subr.mxu0 0.0
    %2955 = vmatpush2.msra.mxu0 0.0
    %2956 = vmatprep.subr.mxu0 0.0
    %2957 = vmatpush2.msra.mxu0 0.0
    %2958 = vmatprep.subr.mxu0 0.0
    %2959 = vmatpush2.msra.mxu0 0.0
    %2960 = vmatprep.subr.mxu0 0.0
    %2961 = vmatpush2.msra.mxu0 0.0
    %2962 = vmatprep.subr.mxu0 0.0
    %2963 = vmatpush2.msra.mxu0 0.0
    %2964 = vmatprep.subr.mxu0 0.0
    %2965 = vmatpush2.msra.mxu0 0.0
    %2966 = vmatprep.subr.mxu0 0.0
    %2967 = vmatpush2.msra.mxu0 0.0
    %2968 = vmatprep.subr.mxu0 0.0
    %2969 = vmatpush2.msra.mxu0 0.0
    %2970 = vmatprep.subr.mxu0 0.0
    %2971 = vmatpush2.msra.mxu0 0.0
    %2972 = vmatprep.subr.mxu0 0.0
    %2973 = vmatpush2.msra.mxu0 0.0
    %2974 = vmatprep.subr.mxu0 0.0
    %2975 = vmatpush2.msra.mxu0 0.0
    %2976 = vmatprep.subr.mxu0 0.0
    %2977 = vmatpush2.msra.mxu0 0.0
    %2978 = vmatprep.subr.mxu0 0.0
    %2979 = vmatpush2.msra.mxu0 0.0
    %2980 = vmatprep.mubr.f32.mxu0 0.0
    %2981 = vmatmul.mubr.f32.gmra.mxu0 %v2911
    %v2982 = vpop.f32.mrf.mxu0
    %v2983 = vadd.f32 %v2908, %v2982
    %v2984 = vpop.f32.mrf.mxu0
    %2985 = vmatprep.mubr.f32.mxu0 0.0
    %2986 = vmatmul.mubr.f32.gmra.mxu0 %v2914
    %v2987 = vpop.f32.mrf.mxu0
    %v2988 = vadd.f32 %v2908, %v2987
    %v2989 = vpop.f32.mrf.mxu0
    %2990 = vdwg.mxu0
    %v2991 = vmax.f32 %v2983, 0.0
    %v2992 = vmax.f32 %v2988, 0.0
    %s2993 = scalar_lea.vmem %s10, 64
    %v2994 = vld [vmem:[%s2993] sm:$0xff]
    %v2995 = vld [vmem:[%s2993 + $0x8] sm:$0xff]
    %v2996 = vld [vmem:[%s2993 + $0x10] sm:$0xff]
    %v2997 = vld [vmem:[%s2993 + $0x18] sm:$0xff]
    %v2998 = vld [vmem:[%s2993 + $0x20] sm:$0xff]
    %v2999 = vld [vmem:[%s2993 + $0x28] sm:$0xff]
    %v3000 = vld [vmem:[%s2993 + $0x30] sm:$0xff]
    %v3001 = vld [vmem:[%s2993 + $0x38] sm:$0xff]
    %s3002 = scalar_lea.vmem %s11, 1
    %v3003 = vld [vmem:[%s3002] sm:$0x1]
    %v3005 = vlaneseq
    %v3006 = vshrl.u32 %v3005, 7
    %v3007 = vsub.s32 0, %v3006
    %v3008 = vrot.slane %v3003, %v3007
    %v3011 = vsel %vm1467, %v2991, 0
    %v3014 = vsel %vm1467, %v2992, 0
    %3016 = vmatprep.subr.mxu0 0.0
    %3017 = vmatpush1.msra.mxu0 0.0
    %3018 = vmatprep.subr.mxu0 0.0
    %3019 = vmatpush1.msra.mxu0 0.0
    %3020 = vmatprep.subr.mxu0 0.0
    %3021 = vmatpush1.msra.mxu0 0.0
    %3022 = vmatprep.subr.mxu0 0.0
    %3023 = vmatpush1.msra.mxu0 0.0
    %3024 = vmatprep.subr.mxu0 0.0
    %3025 = vmatpush1.msra.mxu0 0.0
    %3026 = vmatprep.subr.mxu0 0.0
    %3027 = vmatpush1.msra.mxu0 0.0
    %3028 = vmatprep.subr.mxu0 0.0
    %3029 = vmatpush1.msra.mxu0 0.0
    %3030 = vmatprep.subr.mxu0 0.0
    %3031 = vmatpush1.msra.mxu0 0.0
    %3032 = vmatprep.subr.mxu0 0.0
    %3033 = vmatpush1.msra.mxu0 %v3001
    %3034 = vmatprep.subr.mxu0 0.0
    %3035 = vmatpush1.msra.mxu0 %v3000
    %3036 = vmatprep.subr.mxu0 0.0
    %3037 = vmatpush1.msra.mxu0 %v2999
    %3038 = vmatprep.subr.mxu0 0.0
    %3039 = vmatpush1.msra.mxu0 %v2998
    %3040 = vmatprep.subr.mxu0 0.0
    %3041 = vmatpush1.msra.mxu0 %v2997
    %3042 = vmatprep.subr.mxu0 0.0
    %3043 = vmatpush1.msra.mxu0 %v2996
    %3044 = vmatprep.subr.mxu0 0.0
    %3045 = vmatpush1.msra.mxu0 %v2995
    %3046 = vmatprep.subr.mxu0 0.0
    %3047 = vmatpush1.msra.mxu0 %v2994
    %3048 = vmatprep.subr.mxu0 0.0
    %3049 = vmatpush2.msra.mxu0 0.0
    %3050 = vmatprep.subr.mxu0 0.0
    %3051 = vmatpush2.msra.mxu0 0.0
    %3052 = vmatprep.subr.mxu0 0.0
    %3053 = vmatpush2.msra.mxu0 0.0
    %3054 = vmatprep.subr.mxu0 0.0
    %3055 = vmatpush2.msra.mxu0 0.0
    %3056 = vmatprep.subr.mxu0 0.0
    %3057 = vmatpush2.msra.mxu0 0.0
    %3058 = vmatprep.subr.mxu0 0.0
    %3059 = vmatpush2.msra.mxu0 0.0
    %3060 = vmatprep.subr.mxu0 0.0
    %3061 = vmatpush2.msra.mxu0 0.0
    %3062 = vmatprep.subr.mxu0 0.0
    %3063 = vmatpush2.msra.mxu0 0.0
    %3064 = vmatprep.subr.mxu0 0.0
    %3065 = vmatpush2.msra.mxu0 0.0
    %3066 = vmatprep.subr.mxu0 0.0
    %3067 = vmatpush2.msra.mxu0 0.0
    %3068 = vmatprep.subr.mxu0 0.0
    %3069 = vmatpush2.msra.mxu0 0.0
    %3070 = vmatprep.subr.mxu0 0.0
    %3071 = vmatpush2.msra.mxu0 0.0
    %3072 = vmatprep.subr.mxu0 0.0
    %3073 = vmatpush2.msra.mxu0 0.0
    %3074 = vmatprep.subr.mxu0 0.0
    %3075 = vmatpush2.msra.mxu0 0.0
    %3076 = vmatprep.subr.mxu0 0.0
    %3077 = vmatpush2.msra.mxu0 0.0
    %3078 = vmatprep.subr.mxu0 0.0
    %3079 = vmatpush2.msra.mxu0 0.0
    %3080 = vmatprep.mubr.f32.mxu0 0.0
    %3081 = vmatmul.mubr.f32.gmra.mxu0 %v3011
    %v3082 = vpop.f32.mrf.mxu0
    %v3083 = vadd.f32 %v3008, %v3082
    %v3084 = vpop.f32.mrf.mxu0
    %3085 = vmatprep.mubr.f32.mxu0 0.0
    %3086 = vmatmul.mubr.f32.gmra.mxu0 %v3014
    %v3087 = vpop.f32.mrf.mxu0
    %v3088 = vadd.f32 %v3008, %v3087
    %v3089 = vpop.f32.mrf.mxu0
    %3090 = vdwg.mxu0
    %v3091 = vadd.f32 %v2895, %v3083
    %v3092 = vadd.f32 %v2896, %v3088
    %s3093 = scalar_lea.vmem %s12, 1
    %v3094 = vld [vmem:[%s3093] sm:$0x1]
    %s3095 = scalar_lea.vmem %s13, 1
    %v3096 = vld [vmem:[%s3095] sm:$0x1]
    %v3097 = vsel %vm69, %v3091, 0.0
    %3098 = vadd.xlane.f32.xlu0 %v3097
    %v3099 = vpop.xlane.xlu0 %3098
    %v3100 = vsel %vm69, %v3092, 0.0
    %3101 = vadd.xlane.f32.xlu0 %v3100
    %v3102 = vpop.xlane.xlu0 %3101
    %v3103 = vmul.f32 %v3099, %v1321
    %v3104 = vmul.f32 %v3102, %v1321
    %v3105 = vsub.f32 %v3091, %v3103
    %v3106 = vsub.f32 %v3092, %v3104
    %v3107 = vmul.f32 %v3105, %v3105
    %v3108 = vmul.f32 %v3106, %v3106
    %v3109 = vsel %vm69, %v3107, 0.0
    %3110 = vadd.xlane.f32.xlu0 %v3109
    %v3111 = vpop.xlane.xlu0 %3110
    %v3112 = vsel %vm69, %v3108, 0.0
    %3113 = vadd.xlane.f32.xlu0 %v3112
    %v3114 = vpop.xlane.xlu0 %3113
    %v3115 = vmul.f32 %v3111, %v1321
    %v3116 = vmul.f32 %v3114, %v1321
    %v3117 = vadd.f32 %v3115, 1e-05
    %v3118 = vadd.f32 %v3116, 1e-05
    %v3119 = vrsqrt.pop %v3117
    %v3120 = vrsqrt.pop %v3118
    %v3121 = vmul.f32 %v3105, %v3119
    %v3122 = vmul.f32 %v3106, %v3120
    %v3124 = vlaneseq
    %v3125 = vshrl.u32 %v3124, 7
    %v3126 = vsub.s32 0, %v3125
    %v3127 = vrot.slane %v3094, %v3126
    %v3129 = vmul.f32 %v3121, %v3127
    %v3130 = vmul.f32 %v3122, %v3127
    %v3132 = vlaneseq
    %v3133 = vshrl.u32 %v3132, 7
    %v3134 = vsub.s32 0, %v3133
    %v3135 = vrot.slane %v3096, %v3134
    %v3137 = vadd.f32 %v3129, %v3135
    %v3138 = vadd.f32 %v3130, %v3135
    %v3139 = vld [vmem:[%s14] sm:$0xff]
    %v3140 = vld [vmem:[%s14 + $0x8] sm:$0xff]
    %v3141 = vld [vmem:[%s14 + $0x10] sm:$0xff]
    %v3142 = vld [vmem:[%s14 + $0x18] sm:$0xff]
    %v3143 = vld [vmem:[%s15] sm:$0x1]
    %v3145 = vlaneseq
    %v3146 = vshrl.u32 %v3145, 7
    %v3147 = vsub.s32 0, %v3146
    %v3148 = vrot.slane %v3143, %v3147
    %v3151 = vsel %vm69, %v3137, 0
    %v3154 = vsel %vm69, %v3138, 0
    %3156 = vmatprep.subr.mxu0 0.0
    %3157 = vmatpush1.msra.mxu0 0.0
    %3158 = vmatprep.subr.mxu0 0.0
    %3159 = vmatpush1.msra.mxu0 0.0
    %3160 = vmatprep.subr.mxu0 0.0
    %3161 = vmatpush1.msra.mxu0 0.0
    %3162 = vmatprep.subr.mxu0 0.0
    %3163 = vmatpush1.msra.mxu0 0.0
    %3164 = vmatprep.subr.mxu0 0.0
    %3165 = vmatpush1.msra.mxu0 0.0
    %3166 = vmatprep.subr.mxu0 0.0
    %3167 = vmatpush1.msra.mxu0 0.0
    %3168 = vmatprep.subr.mxu0 0.0
    %3169 = vmatpush1.msra.mxu0 0.0
    %3170 = vmatprep.subr.mxu0 0.0
    %3171 = vmatpush1.msra.mxu0 0.0
    %3172 = vmatprep.subr.mxu0 0.0
    %3173 = vmatpush1.msra.mxu0 0.0
    %3174 = vmatprep.subr.mxu0 0.0
    %3175 = vmatpush1.msra.mxu0 0.0
    %3176 = vmatprep.subr.mxu0 0.0
    %3177 = vmatpush1.msra.mxu0 0.0
    %3178 = vmatprep.subr.mxu0 0.0
    %3179 = vmatpush1.msra.mxu0 0.0
    %3180 = vmatprep.subr.mxu0 0.0
    %3181 = vmatpush1.msra.mxu0 %v3142
    %3182 = vmatprep.subr.mxu0 0.0
    %3183 = vmatpush1.msra.mxu0 %v3141
    %3184 = vmatprep.subr.mxu0 0.0
    %3185 = vmatpush1.msra.mxu0 %v3140
    %3186 = vmatprep.subr.mxu0 0.0
    %3187 = vmatpush1.msra.mxu0 %v3139
    %3188 = vmatprep.subr.mxu0 0.0
    %3189 = vmatpush2.msra.mxu0 0.0
    %3190 = vmatprep.subr.mxu0 0.0
    %3191 = vmatpush2.msra.mxu0 0.0
    %3192 = vmatprep.subr.mxu0 0.0
    %3193 = vmatpush2.msra.mxu0 0.0
    %3194 = vmatprep.subr.mxu0 0.0
    %3195 = vmatpush2.msra.mxu0 0.0
    %3196 = vmatprep.subr.mxu0 0.0
    %3197 = vmatpush2.msra.mxu0 0.0
    %3198 = vmatprep.subr.mxu0 0.0
    %3199 = vmatpush2.msra.mxu0 0.0
    %3200 = vmatprep.subr.mxu0 0.0
    %3201 = vmatpush2.msra.mxu0 0.0
    %3202 = vmatprep.subr.mxu0 0.0
    %3203 = vmatpush2.msra.mxu0 0.0
    %3204 = vmatprep.subr.mxu0 0.0
    %3205 = vmatpush2.msra.mxu0 0.0
    %3206 = vmatprep.subr.mxu0 0.0
    %3207 = vmatpush2.msra.mxu0 0.0
    %3208 = vmatprep.subr.mxu0 0.0
    %3209 = vmatpush2.msra.mxu0 0.0
    %3210 = vmatprep.subr.mxu0 0.0
    %3211 = vmatpush2.msra.mxu0 0.0
    %3212 = vmatprep.subr.mxu0 0.0
    %3213 = vmatpush2.msra.mxu0 0.0
    %3214 = vmatprep.subr.mxu0 0.0
    %3215 = vmatpush2.msra.mxu0 0.0
    %3216 = vmatprep.subr.mxu0 0.0
    %3217 = vmatpush2.msra.mxu0 0.0
    %3218 = vmatprep.subr.mxu0 0.0
    %3219 = vmatpush2.msra.mxu0 0.0
    %3220 = vmatprep.mubr.f32.mxu0 0.0
    %3221 = vmatmul.mubr.f32.gmra.mxu0 %v3151
    %v3222 = vpop.f32.mrf.mxu0
    %v3223 = vadd.f32 %v3148, %v3222
    %v3224 = vpop.f32.mrf.mxu0
    %3225 = vmatprep.mubr.f32.mxu0 0.0
    %3226 = vmatmul.mubr.f32.gmra.mxu0 %v3154
    %v3227 = vpop.f32.mrf.mxu0
    %v3228 = vadd.f32 %v3148, %v3227
    %v3229 = vpop.f32.mrf.mxu0
    %3230 = vdwg.mxu0
    %3231 = vst.msk [vmem:[#allocation2] sm:$0xff] %vm245, %v3223
    %3232 = vst.msk [vmem:[#allocation2 + $0x8] sm:$0xff] %vm245, %v3228
    // Predicated region
    $region66: #{forward.1} parent=1 // pred_check
      _
    $region67: #{forward.1} parent=1 // pred_check_branch
      %3234 = sbr.rel (0) target = $region69
    $region68: #{forward.1} parent=1 // pred_region
      %s3236 = ssub.s32 256, 256
      %3237 = vsyncadd [#allocation3], %s3236
      %s3238 = sshll.u32 [#allocation2], 4
      %s3239 = int_to_ptr.vmem [resolvable:$true] %s3238
      %3244 = dma.vmem_to_hbm [thread:$0]  %s3239, 256, %s16, [#allocation3], 128, 128, 8
    $region69: #{forward.1} parent=1 // pred_fallthru
      _
    // Predicated region
    $region70: #{forward.1} parent=1 // pred_check
      _
    $region71: #{forward.1} parent=1 // pred_check_branch
      %3246 = sbr.rel (0) target = $region73
    $region72: #{forward.1} parent=1 // pred_region
      %3247 = dma.done [#allocation3], 256
    $region73: #{forward.1} parent=1 // pred_fallthru
      _
    %3248 = vsyncpa [#allocation3], 1

</llo_original>
